<compile_context>
chip_gen: v6e
topology: v6e:2x2x1
jax: 0.10.0
libtpu: 0.0.40
codegen_flags: <defaults>
</compile_context>

<pallas_src>
import jax
import jax.numpy as jnp
from jax import lax
from jax.experimental import pallas as pl
from jax.experimental.pallas import tpu as pltpu

EPS = 1e-5  # nn.BatchNorm2d default

# Conv operands + y2 HBM intermediate in bf16; accumulation / stats / BN math in f32.
MXU_DTYPE = jnp.bfloat16
INTER_DTYPE = jnp.bfloat16


def _round_up(v, m):
    return -(-v // m) * m


def _pick_batch_block(N, C, CP, HW, L):
    """Largest divisor of N whose per-grid-step VMEM footprint stays small.

    Only divisors of N are used: zero-padding the batch would be wrong because BN1's
    shift makes padded (all-zero) images produce non-zero conv2 activations that would
    contaminate the second BatchNorm's statistics.
    """
    mxu_b = jnp.dtype(MXU_DTYPE).itemsize
    int_b = jnp.dtype(INTER_DTYPE).itemsize
    budget = 12 << 20        # conservative vs v7x's 32 MiB scoped-VMEM default
    best = 1
    for b in range(1, N + 1):
        if b > 64:           # cap trace size / keep >1 grid step for pipelining
            break
        if N % b:
            continue
        per_step = (
            2 * b * C * HW * 4          # x block (f32), double-buffered
            + 2 * b * C * HW * int_b    # y2 block, double-buffered
            + b * CP * L * mxu_b        # zero-haloed flat-image scratch
            + 9 * CP * b * HW * mxu_b   # K-stacked conv operand
            + 6 * CP * b * HW * 4       # acc / h / stats temporaries (headroom)
        )
        if per_step <= budget:
            best = b
    return best


def _conv3x3(w_ref, pad_ref, stack_ref, *, B, W, HW, P0):
    """3x3 'SAME' conv of B zero-haloed flat images as ONE K-stacked MXU matmul.

    pad_ref  : (B, CP, L) VMEM; halo zero, interior = image (channels x H*W).
    stack_ref: (9*CP, B*HW) VMEM scratch, overwritten with the 9 shifted/masked tap
               slabs of every image (the K-stacked conv operand).
    w_ref    : (CP, 9*CP) with w[co, k*CP + ci] = w_conv[co, ci, ky, kx].
    Returns the f32 conv output (CP, B*HW).
    """
    CP = w_ref.shape[0]
    # Column-edge masks: the flat H*W layout wraps w=-1 / w=W into neighbouring rows.
    col = lax.broadcasted_iota(jnp.int32, (1, HW), 1) % W
    left_edge = col == 0           # taps with kx == 0 are out of bounds here
    right_edge = col == W - 1      # taps with kx == 2 are out of bounds here
    zeros = jnp.zeros((CP, HW), stack_ref.dtype)
    for b in range(B):
        for k in range(9):                               # fully unrolled 3x3 taps
            ky, kx = divmod(k, 3)
            start = (P0 - W - 1) + ky * W + kx           # static lane offset of tap view
            slab = pad_ref[b, :, start:start + HW]       # (CP, HW)
            if kx == 0:
                slab = jnp.where(left_edge, zeros, slab)
            elif kx == 2:
                slab = jnp.where(right_edge, zeros, slab)
            stack_ref[k * CP:(k + 1) * CP, b * HW:(b + 1) * HW] = slab
    return jnp.dot(w_ref[...], stack_ref[...], preferred_element_type=jnp.float32)


def _accum_stats(acc, stats_ref):
    """Accumulate per-channel [sum; sum-of-squares] of acc with a single MXU matvec."""
    ones = jnp.ones((acc.shape[1], 1), jnp.float32)
    both = jnp.concatenate([acc, acc * acc], axis=0)      # (2*CP, B*HW)
    stats_ref[...] += jnp.dot(both, ones, preferred_element_type=jnp.float32)


def _make_conv1_stats_kernel(B, C, W, HW, P0):
    """Pass 1: conv1 -> global per-channel [sum; sumsq] (no y1 written to HBM)."""
    def kernel(x_ref, w1_ref, stats_ref, pad_ref, stack_ref):
        @pl.when(pl.program_id(0) == 0)
        def _init():
            stats_ref[...] = jnp.zeros_like(stats_ref)
            pad_ref[...] = jnp.zeros_like(pad_ref)   # zero halo + zero channel pad
        for b in range(B):
            pad_ref[b, :C, P0:P0 + HW] = x_ref[b].astype(pad_ref.dtype)
        acc1 = _conv3x3(w1_ref, pad_ref, stack_ref, B=B, W=W, HW=HW, P0=P0)
        _accum_stats(acc1, stats_ref)
    return kernel


def _make_conv1_bn_relu_conv2_kernel(B, C, W, HW, P0):
    """Pass 2: conv1 (recomputed) -> BN1 -> ReLU -> conv2 -> y2 + [sum; sumsq]."""
    def kernel(x_ref, scale1_ref, shift1_ref, w1_ref, w2_ref,
               y2_ref, stats_ref, pad_ref, stack_ref):
        @pl.when(pl.program_id(0) == 0)
        def _init():
            stats_ref[...] = jnp.zeros_like(stats_ref)
            pad_ref[...] = jnp.zeros_like(pad_ref)
        # conv1 (recomputed; cheaper than a y1 HBM round-trip in this memory-bound regime)
        for b in range(B):
            pad_ref[b, :C, P0:P0 + HW] = x_ref[b].astype(pad_ref.dtype)
        acc1 = _conv3x3(w1_ref, pad_ref, stack_ref, B=B, W=W, HW=HW, P0=P0)
        # BN1 + ReLU in f32, fused straight into the conv2 operand build (never hits HBM)
        h = jnp.maximum(acc1[:C] * scale1_ref[...] + shift1_ref[...], 0.0)
        for b in range(B):
            pad_ref[b, :C, P0:P0 + HW] = h[:, b * HW:(b + 1) * HW].astype(pad_ref.dtype)
        acc2 = _conv3x3(w2_ref, pad_ref, stack_ref, B=B, W=W, HW=HW, P0=P0)
        for b in range(B):
            y2_ref[b] = acc2[:C, b * HW:(b + 1) * HW].astype(y2_ref.dtype)
        _accum_stats(acc2, stats_ref)
    return kernel


def _bn_add_relu_kernel(y2_ref, x_ref, scale2_ref, shift2_ref, out_ref):
    """Pass 3: BN2 + residual add + ReLU."""
    y = y2_ref[...].astype(jnp.float32) * scale2_ref[...] + shift2_ref[...]
    out_ref[...] = jnp.maximum(y + x_ref[...].astype(jnp.float32), 0.0).astype(out_ref.dtype)


def _bn_affine(stats, gamma, beta, count, C, CP):
    """Fold batch statistics into per-channel (scale, shift) (tiny host-side glue)."""
    s = stats[:C, 0]
    q = stats[CP:CP + C, 0]
    mean = s / count
    var = jnp.maximum(q / count - mean * mean, 0.0)
    scale = gamma.astype(jnp.float32) * lax.rsqrt(var + EPS)
    shift = beta.astype(jnp.float32) - mean * scale
    return scale.reshape(C, 1), shift.reshape(C, 1)


def _stack_weights(w, C, CP):
    """(Cout, Cin, 3, 3) -> (CP, 9*CP) with out[co, k*CP + ci] = w[co, ci, ky, kx]."""
    wk = jnp.transpose(w.astype(jnp.float32), (0, 2, 3, 1)).reshape(C, 9, C)
    wk = jnp.pad(wk, ((0, CP - C), (0, 0), (0, CP - C)))
    return wk.reshape(CP, 9 * CP).astype(MXU_DTYPE)


@jax.jit
def residual_block_forward(x_nchw, params):
    """Pallas implementation of ResidualBlock.forward (NCHW in/out, training-mode BN)."""
    N, C, H, W = x_nchw.shape
    HW = H * W                           # lane axis (256 here; ideally a 128-multiple)
    CP = _round_up(C, 8)                 # sublane-padded channels (VMEM only, never HBM)
    P0 = _round_up(W + 1, 128)           # lane-aligned left halo of the flat image
    L = 2 * P0 + HW                      # haloed flat-image length
    B = _pick_batch_block(N, C, CP, HW, L)
    NB = N // B
    f32 = jnp.float32

    x_flat = x_nchw.reshape(N, C, HW).astype(f32)        # pure reshape, no pad copy
    w1s = _stack_weights(params["w1"], C, CP)
    w2s = _stack_weights(params["w2"], C, CP)

    img_spec = pl.BlockSpec((B, C, HW), lambda n: (n, 0, 0))      # B images / grid step
    w_spec = pl.BlockSpec((CP, 9 * CP), lambda n: (0, 0))         # full stacked weights
    vec_spec = pl.BlockSpec((C, 1), lambda n: (0, 0))             # per-channel affine
    stats_spec = pl.BlockSpec((2 * CP, 1), lambda n: (0, 0))      # resident accumulator
    stats_sds = jax.ShapeDtypeStruct((2 * CP, 1), f32)
    scratch = [pltpu.VMEM((B, CP, L), MXU_DTYPE),                 # zero-haloed images
               pltpu.VMEM((9 * CP, B * HW), MXU_DTYPE)]           # K-stacked conv operand
    serial = pltpu.CompilerParams(dimension_semantics=("arbitrary",))

    # ---- Pass 1: conv1 -> global per-channel [sum; sumsq] ------------------------------
    stats1 = pl.pallas_call(
        _make_conv1_stats_kernel(B, C, W, HW, P0),
        grid=(NB,),
        in_specs=[img_spec, w_spec],
        out_specs=stats_spec,
        out_shape=stats_sds,
        scratch_shapes=scratch,
        compiler_params=serial,
    )(x_flat, w1s)
    scale1, shift1 = _bn_affine(stats1, params["g1"], params["b1"], N * HW, C, CP)

    # ---- Pass 2: conv1 (recomputed) + BN1 + ReLU + conv2 -> y2 + stats ------------------
    y2, stats2 = pl.pallas_call(
        _make_conv1_bn_relu_conv2_kernel(B, C, W, HW, P0),
        grid=(NB,),
        in_specs=[img_spec, vec_spec, vec_spec, w_spec, w_spec],
        out_specs=(img_spec, stats_spec),
        out_shape=(jax.ShapeDtypeStruct((N, C, HW), INTER_DTYPE), stats_sds),
        scratch_shapes=scratch,
        compiler_params=serial,
    )(x_flat, scale1, shift1, w1s, w2s)
    scale2, shift2 = _bn_affine(stats2, params["g2"], params["b2"], N * HW, C, CP)

    # ---- Pass 3: BN2 + residual add + ReLU (independent blocks -> "parallel") ----------
    out = pl.pallas_call(
        _bn_add_relu_kernel,
        grid=(NB,),
        in_specs=[img_spec, img_spec, vec_spec, vec_spec],
        out_specs=img_spec,
        out_shape=jax.ShapeDtypeStruct((N, C, HW), f32),
        compiler_params=pltpu.CompilerParams(dimension_semantics=("parallel",)),
    )(y2, x_flat, scale2, shift2)

    return out.reshape(N, C, H, W)


def reference_forward(x_nchw, params):
    """Pure-JAX f32 reference replicating the PyTorch training-mode forward."""
    def conv(x, w):
        return lax.conv_general_dilated(
            x, w, (1, 1), "SAME", dimension_numbers=("NCHW", "OIHW", "NCHW"))

    def bn(x, g, b):
        mean = jnp.mean(x, axis=(0, 2, 3), keepdims=True)
        var = jnp.mean((x - mean) ** 2, axis=(0, 2, 3), keepdims=True)
        return (x - mean) * lax.rsqrt(var + EPS) * g.reshape(1, -1, 1, 1) + b.reshape(1, -1, 1, 1)

    h = jax.nn.relu(bn(conv(x_nchw, params["w1"]), params["g1"], params["b1"]))
    h = bn(conv(h, params["w2"]), params["g2"], params["b2"])
    return jax.nn.relu(x_nchw + h)


if __name__ == "__main__":
    N, C, H, W = 2, 4, 16, 16
    key = jax.random.PRNGKey(0)
    k_x, k_w1, k_w2, k_g1, k_b1, k_g2, k_b2 = jax.random.split(key, 7)

    x = jax.random.normal(k_x, (N, C, H, W), jnp.float32)
    params = {
        # nn.Conv2d(C, C, 3, padding=1, bias=False) weights: (C, C, 3, 3)
        "w1": 0.1 * jax.random.normal(k_w1, (C, C, 3, 3), jnp.float32),
        "w2": 0.1 * jax.random.normal(k_w2, (C, C, 3, 3), jnp.float32),
        # BatchNorm2d affine params: (C,)
        "g1": 1.0 + 0.1 * jax.random.normal(k_g1, (C,), jnp.float32),
        "b1": 0.1 * jax.random.normal(k_b1, (C,), jnp.float32),
        "g2": 1.0 + 0.1 * jax.random.normal(k_g2, (C,), jnp.float32),
        "b2": 0.1 * jax.random.normal(k_b2, (C,), jnp.float32),
    }

    out = jax.block_until_ready(residual_block_forward(x, params))
    ref = jax.block_until_ready(reference_forward(x, params))

    assert out.shape == (N, C, H, W), out.shape
    # bf16 conv operands / bf16 y2 intermediate (f32 accumulation + f32 BN statistics):
    # expected max deviation from the all-f32 reference is ~1e-2; structural bugs
    # (halo/tap/stats errors) would show up as O(1) deviations and still be caught.
    err = float(jnp.max(jnp.abs(out - ref)))
    assert err < 5e-2, err
    print("KERNEL_OK")
</pallas_src>

<mosaic_0001>
module attributes {stable_mosaic.version = 11 : i64} {
  func.func @kernel(%arg0: i32, %arg1: memref<2x4x256xf32, #tpu.memory_space<vmem>>, %arg2: memref<8x72xbf16, #tpu.memory_space<vmem>>, %arg3: memref<16x1xf32, #tpu.memory_space<vmem>>, %arg4: memref<2x8x512xbf16, #tpu.memory_space<vmem>>, %arg5: memref<72x512xbf16, #tpu.memory_space<vmem>>) attributes {dimension_semantics = [#tpu.dimension_semantics<arbitrary>], iteration_bounds = array<i64: 1>, scalar_prefetch = 0 : i64, scratch_operands = 2 : i64, tpu.core_type = #tpu.core_type<tc>, window_params = [{transform_indices = @transform_0, window_bounds = array<i64: 2, 4, 256>}, {pipeline_mode = #tpu.pipeline_mode<synchronous>, transform_indices = @transform_1, window_bounds = array<i64: 8, 72>}, {pipeline_mode = #tpu.pipeline_mode<synchronous>, transform_indices = @transform_2, window_bounds = array<i64: 16, 1>}]} {
    %c0_i32 = arith.constant 0 : i32
    %0 = arith.cmpi eq, %arg0, %c0_i32 : i32
    %1 = arith.extui %0 : i1 to i32
    %c0_i32_0 = arith.constant 0 : i32
    %2 = arith.cmpi ne, %1, %c0_i32_0 : i32
    scf.if %2 {
      %cst_99 = arith.constant 0.000000e+00 : f32
      %137 = vector.broadcast %cst_99 : f32 to vector<16x1xf32>
      %c0_100 = arith.constant 0 : index
      %c0_101 = arith.constant 0 : index
      %138 = vector.load %arg3[%c0_100, %c0_101] : memref<16x1xf32, #tpu.memory_space<vmem>>, vector<16x1xf32>
      tpu.vector_store %arg3[%c0_100, %c0_101], %137 {strides = array<i32>} : memref<16x1xf32, #tpu.memory_space<vmem>>, vector<16x1xf32>,
      %cst_102 = arith.constant 0.000000e+00 : bf16
      %139 = vector.broadcast %cst_102 : bf16 to vector<2x8x512xbf16>
      %c0_103 = arith.constant 0 : index
      %c0_104 = arith.constant 0 : index
      %c0_105 = arith.constant 0 : index
      %140 = vector.load %arg4[%c0_103, %c0_104, %c0_105] : memref<2x8x512xbf16, #tpu.memory_space<vmem>>, vector<2x8x512xbf16>
      tpu.vector_store %arg4[%c0_103, %c0_104, %c0_105], %139 {strides = array<i32>} : memref<2x8x512xbf16, #tpu.memory_space<vmem>>, vector<2x8x512xbf16>,
    } else {
    }
    %c0 = arith.constant 0 : index
    %c0_1 = arith.constant 0 : index
    %c0_2 = arith.constant 0 : index
    %3 = vector.load %arg1[%c0, %c0_1, %c0_2] : memref<2x4x256xf32, #tpu.memory_space<vmem>>, vector<1x4x256xf32>
    %4 = vector.shape_cast %3 : vector<1x4x256xf32> to vector<4x256xf32>
    %5 = arith.truncf %4 : vector<4x256xf32> to vector<4x256xbf16>
    %c0_3 = arith.constant 0 : index
    %c0_4 = arith.constant 0 : index
    %c128 = arith.constant 128 : index
    %6 = vector.load %arg4[%c0_3, %c0_4, %c128] : memref<2x8x512xbf16, #tpu.memory_space<vmem>>, vector<1x4x256xbf16>
    %7 = vector.shape_cast %6 : vector<1x4x256xbf16> to vector<4x256xbf16>
    %8 = vector.shape_cast %5 : vector<4x256xbf16> to vector<1x4x256xbf16>
    tpu.vector_store %arg4[%c0_3, %c0_4, %c128], %8 {strides = array<i32>} : memref<2x8x512xbf16, #tpu.memory_space<vmem>>, vector<1x4x256xbf16>,
    %c1 = arith.constant 1 : index
    %c0_5 = arith.constant 0 : index
    %c0_6 = arith.constant 0 : index
    %9 = vector.load %arg1[%c1, %c0_5, %c0_6] : memref<2x4x256xf32, #tpu.memory_space<vmem>>, vector<1x4x256xf32>
    %10 = vector.shape_cast %9 : vector<1x4x256xf32> to vector<4x256xf32>
    %11 = arith.truncf %10 : vector<4x256xf32> to vector<4x256xbf16>
    %c1_7 = arith.constant 1 : index
    %c0_8 = arith.constant 0 : index
    %c128_9 = arith.constant 128 : index
    %12 = vector.load %arg4[%c1_7, %c0_8, %c128_9] : memref<2x8x512xbf16, #tpu.memory_space<vmem>>, vector<1x4x256xbf16>
    %13 = vector.shape_cast %12 : vector<1x4x256xbf16> to vector<4x256xbf16>
    %14 = vector.shape_cast %11 : vector<4x256xbf16> to vector<1x4x256xbf16>
    tpu.vector_store %arg4[%c1_7, %c0_8, %c128_9], %14 {strides = array<i32>} : memref<2x8x512xbf16, #tpu.memory_space<vmem>>, vector<1x4x256xbf16>,
    %15 = tpu.iota {dimensions = array<i32: 1>} : vector<1x256xi32>
    %c16_i32 = arith.constant 16 : i32
    %c0_i32_10 = arith.constant 0 : i32
    %16 = arith.cmpi eq, %c16_i32, %c0_i32_10 : i32
    %c1_i32 = arith.constant 1 : i32
    %17 = arith.select %16, %c1_i32, %c16_i32 : i32
    %18 = vector.broadcast %17 : i32 to vector<1x256xi32>
    %19 = arith.remsi %15, %18 : vector<1x256xi32>
    %c0_i32_11 = arith.constant 0 : i32
    %20 = vector.broadcast %c0_i32_11 : i32 to vector<1x256xi32>
    %21 = arith.cmpi ne, %19, %20 : vector<1x256xi32>
    %c0_i32_12 = arith.constant 0 : i32
    %22 = vector.broadcast %c0_i32_12 : i32 to vector<1x256xi32>
    %23 = arith.cmpi slt, %19, %22 : vector<1x256xi32>
    %c0_i32_13 = arith.constant 0 : i32
    %24 = arith.cmpi slt, %17, %c0_i32_13 : i32
    %25 = vector.broadcast %24 : i1 to vector<1x256xi1>
    %26 = vector.broadcast %25 : vector<1x256xi1> to vector<1x256xi1>
    %27 = arith.xori %23, %26 : vector<1x256xi1>
    %28 = arith.andi %27, %21 : vector<1x256xi1>
    %29 = vector.broadcast %17 : i32 to vector<1x256xi32>
    %30 = arith.addi %19, %29 : vector<1x256xi32>
    %31 = arith.select %28, %30, %19 : vector<1x256xi1>, vector<1x256xi32>
    %c0_i32_14 = arith.constant 0 : i32
    %32 = vector.broadcast %c0_i32_14 : i32 to vector<1x256xi32>
    %33 = arith.cmpi eq, %31, %32 : vector<1x256xi32>
    %c15_i32 = arith.constant 15 : i32
    %34 = vector.broadcast %c15_i32 : i32 to vector<1x256xi32>
    %35 = arith.cmpi eq, %31, %34 : vector<1x256xi32>
    %cst = arith.constant 0.000000e+00 : bf16
    %36 = vector.broadcast %cst : bf16 to vector<8x256xbf16>
    %c0_15 = arith.constant 0 : index
    %c0_16 = arith.constant 0 : index
    %c111 = arith.constant 111 : index
    %37 = vector.load %arg4[%c0_15, %c0_16, %c111] : memref<2x8x512xbf16, #tpu.memory_space<vmem>>, vector<1x8x256xbf16>
    %38 = vector.shape_cast %37 : vector<1x8x256xbf16> to vector<8x256xbf16>
    %39 = vector.shape_cast %33 : vector<1x256xi1> to vector<1x256xi1>
    %40 = vector.broadcast %39 : vector<1x256xi1> to vector<8x256xi1>
    %41 = arith.select %40, %36, %38 : vector<8x256xi1>, vector<8x256xbf16>
    %c0_17 = arith.constant 0 : index
    %c0_18 = arith.constant 0 : index
    %42 = vector.load %arg5[%c0_17, %c0_18] : memref<72x512xbf16, #tpu.memory_space<vmem>>, vector<8x256xbf16>
    tpu.vector_store %arg5[%c0_17, %c0_18], %41 {strides = array<i32>} : memref<72x512xbf16, #tpu.memory_space<vmem>>, vector<8x256xbf16>,
    %c0_19 = arith.constant 0 : index
    %c0_20 = arith.constant 0 : index
    %c112 = arith.constant 112 : index
    %43 = vector.load %arg4[%c0_19, %c0_20, %c112] : memref<2x8x512xbf16, #tpu.memory_space<vmem>>, vector<1x8x256xbf16>
    %44 = vector.shape_cast %43 : vector<1x8x256xbf16> to vector<8x256xbf16>
    %c8 = arith.constant 8 : index
    %c0_21 = arith.constant 0 : index
    %45 = vector.load %arg5[%c8, %c0_21] : memref<72x512xbf16, #tpu.memory_space<vmem>>, vector<8x256xbf16>
    tpu.vector_store %arg5[%c8, %c0_21], %44 {strides = array<i32>} : memref<72x512xbf16, #tpu.memory_space<vmem>>, vector<8x256xbf16>,
    %c0_22 = arith.constant 0 : index
    %c0_23 = arith.constant 0 : index
    %c113 = arith.constant 113 : index
    %46 = vector.load %arg4[%c0_22, %c0_23, %c113] : memref<2x8x512xbf16, #tpu.memory_space<vmem>>, vector<1x8x256xbf16>
    %47 = vector.shape_cast %46 : vector<1x8x256xbf16> to vector<8x256xbf16>
    %48 = vector.shape_cast %35 : vector<1x256xi1> to vector<1x256xi1>
    %49 = vector.broadcast %48 : vector<1x256xi1> to vector<8x256xi1>
    %50 = arith.select %49, %36, %47 : vector<8x256xi1>, vector<8x256xbf16>
    %c16 = arith.constant 16 : index
    %c0_24 = arith.constant 0 : index
    %51 = vector.load %arg5[%c16, %c0_24] : memref<72x512xbf16, #tpu.memory_space<vmem>>, vector<8x256xbf16>
    tpu.vector_store %arg5[%c16, %c0_24], %50 {strides = array<i32>} : memref<72x512xbf16, #tpu.memory_space<vmem>>, vector<8x256xbf16>,
    %c0_25 = arith.constant 0 : index
    %c0_26 = arith.constant 0 : index
    %c127 = arith.constant 127 : index
    %52 = vector.load %arg4[%c0_25, %c0_26, %c127] : memref<2x8x512xbf16, #tpu.memory_space<vmem>>, vector<1x8x256xbf16>
    %53 = vector.shape_cast %52 : vector<1x8x256xbf16> to vector<8x256xbf16>
    %54 = vector.shape_cast %33 : vector<1x256xi1> to vector<1x256xi1>
    %55 = vector.broadcast %54 : vector<1x256xi1> to vector<8x256xi1>
    %56 = arith.select %55, %36, %53 : vector<8x256xi1>, vector<8x256xbf16>
    %c24 = arith.constant 24 : index
    %c0_27 = arith.constant 0 : index
    %57 = vector.load %arg5[%c24, %c0_27] : memref<72x512xbf16, #tpu.memory_space<vmem>>, vector<8x256xbf16>
    tpu.vector_store %arg5[%c24, %c0_27], %56 {strides = array<i32>} : memref<72x512xbf16, #tpu.memory_space<vmem>>, vector<8x256xbf16>,
    %c0_28 = arith.constant 0 : index
    %c0_29 = arith.constant 0 : index
    %c128_30 = arith.constant 128 : index
    %58 = vector.load %arg4[%c0_28, %c0_29, %c128_30] : memref<2x8x512xbf16, #tpu.memory_space<vmem>>, vector<1x8x256xbf16>
    %59 = vector.shape_cast %58 : vector<1x8x256xbf16> to vector<8x256xbf16>
    %c32 = arith.constant 32 : index
    %c0_31 = arith.constant 0 : index
    %60 = vector.load %arg5[%c32, %c0_31] : memref<72x512xbf16, #tpu.memory_space<vmem>>, vector<8x256xbf16>
    tpu.vector_store %arg5[%c32, %c0_31], %59 {strides = array<i32>} : memref<72x512xbf16, #tpu.memory_space<vmem>>, vector<8x256xbf16>,
    %c0_32 = arith.constant 0 : index
    %c0_33 = arith.constant 0 : index
    %c129 = arith.constant 129 : index
    %61 = vector.load %arg4[%c0_32, %c0_33, %c129] : memref<2x8x512xbf16, #tpu.memory_space<vmem>>, vector<1x8x256xbf16>
    %62 = vector.shape_cast %61 : vector<1x8x256xbf16> to vector<8x256xbf16>
    %63 = vector.shape_cast %35 : vector<1x256xi1> to vector<1x256xi1>
    %64 = vector.broadcast %63 : vector<1x256xi1> to vector<8x256xi1>
    %65 = arith.select %64, %36, %62 : vector<8x256xi1>, vector<8x256xbf16>
    %c40 = arith.constant 40 : index
    %c0_34 = arith.constant 0 : index
    %66 = vector.load %arg5[%c40, %c0_34] : memref<72x512xbf16, #tpu.memory_space<vmem>>, vector<8x256xbf16>
    tpu.vector_store %arg5[%c40, %c0_34], %65 {strides = array<i32>} : memref<72x512xbf16, #tpu.memory_space<vmem>>, vector<8x256xbf16>,
    %c0_35 = arith.constant 0 : index
    %c0_36 = arith.constant 0 : index
    %c143 = arith.constant 143 : index
    %67 = vector.load %arg4[%c0_35, %c0_36, %c143] : memref<2x8x512xbf16, #tpu.memory_space<vmem>>, vector<1x8x256xbf16>
    %68 = vector.shape_cast %67 : vector<1x8x256xbf16> to vector<8x256xbf16>
    %69 = vector.shape_cast %33 : vector<1x256xi1> to vector<1x256xi1>
    %70 = vector.broadcast %69 : vector<1x256xi1> to vector<8x256xi1>
    %71 = arith.select %70, %36, %68 : vector<8x256xi1>, vector<8x256xbf16>
    %c48 = arith.constant 48 : index
    %c0_37 = arith.constant 0 : index
    %72 = vector.load %arg5[%c48, %c0_37] : memref<72x512xbf16, #tpu.memory_space<vmem>>, vector<8x256xbf16>
    tpu.vector_store %arg5[%c48, %c0_37], %71 {strides = array<i32>} : memref<72x512xbf16, #tpu.memory_space<vmem>>, vector<8x256xbf16>,
    %c0_38 = arith.constant 0 : index
    %c0_39 = arith.constant 0 : index
    %c144 = arith.constant 144 : index
    %73 = vector.load %arg4[%c0_38, %c0_39, %c144] : memref<2x8x512xbf16, #tpu.memory_space<vmem>>, vector<1x8x256xbf16>
    %74 = vector.shape_cast %73 : vector<1x8x256xbf16> to vector<8x256xbf16>
    %c56 = arith.constant 56 : index
    %c0_40 = arith.constant 0 : index
    %75 = vector.load %arg5[%c56, %c0_40] : memref<72x512xbf16, #tpu.memory_space<vmem>>, vector<8x256xbf16>
    tpu.vector_store %arg5[%c56, %c0_40], %74 {strides = array<i32>} : memref<72x512xbf16, #tpu.memory_space<vmem>>, vector<8x256xbf16>,
    %c0_41 = arith.constant 0 : index
    %c0_42 = arith.constant 0 : index
    %c145 = arith.constant 145 : index
    %76 = vector.load %arg4[%c0_41, %c0_42, %c145] : memref<2x8x512xbf16, #tpu.memory_space<vmem>>, vector<1x8x256xbf16>
    %77 = vector.shape_cast %76 : vector<1x8x256xbf16> to vector<8x256xbf16>
    %78 = vector.shape_cast %35 : vector<1x256xi1> to vector<1x256xi1>
    %79 = vector.broadcast %78 : vector<1x256xi1> to vector<8x256xi1>
    %80 = arith.select %79, %36, %77 : vector<8x256xi1>, vector<8x256xbf16>
    %c64 = arith.constant 64 : index
    %c0_43 = arith.constant 0 : index
    %81 = vector.load %arg5[%c64, %c0_43] : memref<72x512xbf16, #tpu.memory_space<vmem>>, vector<8x256xbf16>
    tpu.vector_store %arg5[%c64, %c0_43], %80 {strides = array<i32>} : memref<72x512xbf16, #tpu.memory_space<vmem>>, vector<8x256xbf16>,
    %c1_44 = arith.constant 1 : index
    %c0_45 = arith.constant 0 : index
    %c111_46 = arith.constant 111 : index
    %82 = vector.load %arg4[%c1_44, %c0_45, %c111_46] : memref<2x8x512xbf16, #tpu.memory_space<vmem>>, vector<1x8x256xbf16>
    %83 = vector.shape_cast %82 : vector<1x8x256xbf16> to vector<8x256xbf16>
    %84 = vector.shape_cast %33 : vector<1x256xi1> to vector<1x256xi1>
    %85 = vector.broadcast %84 : vector<1x256xi1> to vector<8x256xi1>
    %86 = arith.select %85, %36, %83 : vector<8x256xi1>, vector<8x256xbf16>
    %c0_47 = arith.constant 0 : index
    %c256 = arith.constant 256 : index
    %87 = vector.load %arg5[%c0_47, %c256] : memref<72x512xbf16, #tpu.memory_space<vmem>>, vector<8x256xbf16>
    tpu.vector_store %arg5[%c0_47, %c256], %86 {strides = array<i32>} : memref<72x512xbf16, #tpu.memory_space<vmem>>, vector<8x256xbf16>,
    %c1_48 = arith.constant 1 : index
    %c0_49 = arith.constant 0 : index
    %c112_50 = arith.constant 112 : index
    %88 = vector.load %arg4[%c1_48, %c0_49, %c112_50] : memref<2x8x512xbf16, #tpu.memory_space<vmem>>, vector<1x8x256xbf16>
    %89 = vector.shape_cast %88 : vector<1x8x256xbf16> to vector<8x256xbf16>
    %c8_51 = arith.constant 8 : index
    %c256_52 = arith.constant 256 : index
    %90 = vector.load %arg5[%c8_51, %c256_52] : memref<72x512xbf16, #tpu.memory_space<vmem>>, vector<8x256xbf16>
    tpu.vector_store %arg5[%c8_51, %c256_52], %89 {strides = array<i32>} : memref<72x512xbf16, #tpu.memory_space<vmem>>, vector<8x256xbf16>,
    %c1_53 = arith.constant 1 : index
    %c0_54 = arith.constant 0 : index
    %c113_55 = arith.constant 113 : index
    %91 = vector.load %arg4[%c1_53, %c0_54, %c113_55] : memref<2x8x512xbf16, #tpu.memory_space<vmem>>, vector<1x8x256xbf16>
    %92 = vector.shape_cast %91 : vector<1x8x256xbf16> to vector<8x256xbf16>
    %93 = vector.shape_cast %35 : vector<1x256xi1> to vector<1x256xi1>
    %94 = vector.broadcast %93 : vector<1x256xi1> to vector<8x256xi1>
    %95 = arith.select %94, %36, %92 : vector<8x256xi1>, vector<8x256xbf16>
    %c16_56 = arith.constant 16 : index
    %c256_57 = arith.constant 256 : index
    %96 = vector.load %arg5[%c16_56, %c256_57] : memref<72x512xbf16, #tpu.memory_space<vmem>>, vector<8x256xbf16>
    tpu.vector_store %arg5[%c16_56, %c256_57], %95 {strides = array<i32>} : memref<72x512xbf16, #tpu.memory_space<vmem>>, vector<8x256xbf16>,
    %c1_58 = arith.constant 1 : index
    %c0_59 = arith.constant 0 : index
    %c127_60 = arith.constant 127 : index
    %97 = vector.load %arg4[%c1_58, %c0_59, %c127_60] : memref<2x8x512xbf16, #tpu.memory_space<vmem>>, vector<1x8x256xbf16>
    %98 = vector.shape_cast %97 : vector<1x8x256xbf16> to vector<8x256xbf16>
    %99 = vector.shape_cast %33 : vector<1x256xi1> to vector<1x256xi1>
    %100 = vector.broadcast %99 : vector<1x256xi1> to vector<8x256xi1>
    %101 = arith.select %100, %36, %98 : vector<8x256xi1>, vector<8x256xbf16>
    %c24_61 = arith.constant 24 : index
    %c256_62 = arith.constant 256 : index
    %102 = vector.load %arg5[%c24_61, %c256_62] : memref<72x512xbf16, #tpu.memory_space<vmem>>, vector<8x256xbf16>
    tpu.vector_store %arg5[%c24_61, %c256_62], %101 {strides = array<i32>} : memref<72x512xbf16, #tpu.memory_space<vmem>>, vector<8x256xbf16>,
    %c1_63 = arith.constant 1 : index
    %c0_64 = arith.constant 0 : index
    %c128_65 = arith.constant 128 : index
    %103 = vector.load %arg4[%c1_63, %c0_64, %c128_65] : memref<2x8x512xbf16, #tpu.memory_space<vmem>>, vector<1x8x256xbf16>
    %104 = vector.shape_cast %103 : vector<1x8x256xbf16> to vector<8x256xbf16>
    %c32_66 = arith.constant 32 : index
    %c256_67 = arith.constant 256 : index
    %105 = vector.load %arg5[%c32_66, %c256_67] : memref<72x512xbf16, #tpu.memory_space<vmem>>, vector<8x256xbf16>
    tpu.vector_store %arg5[%c32_66, %c256_67], %104 {strides = array<i32>} : memref<72x512xbf16, #tpu.memory_space<vmem>>, vector<8x256xbf16>,
    %c1_68 = arith.constant 1 : index
    %c0_69 = arith.constant 0 : index
    %c129_70 = arith.constant 129 : index
    %106 = vector.load %arg4[%c1_68, %c0_69, %c129_70] : memref<2x8x512xbf16, #tpu.memory_space<vmem>>, vector<1x8x256xbf16>
    %107 = vector.shape_cast %106 : vector<1x8x256xbf16> to vector<8x256xbf16>
    %108 = vector.shape_cast %35 : vector<1x256xi1> to vector<1x256xi1>
    %109 = vector.broadcast %108 : vector<1x256xi1> to vector<8x256xi1>
    %110 = arith.select %109, %36, %107 : vector<8x256xi1>, vector<8x256xbf16>
    %c40_71 = arith.constant 40 : index
    %c256_72 = arith.constant 256 : index
    %111 = vector.load %arg5[%c40_71, %c256_72] : memref<72x512xbf16, #tpu.memory_space<vmem>>, vector<8x256xbf16>
    tpu.vector_store %arg5[%c40_71, %c256_72], %110 {strides = array<i32>} : memref<72x512xbf16, #tpu.memory_space<vmem>>, vector<8x256xbf16>,
    %c1_73 = arith.constant 1 : index
    %c0_74 = arith.constant 0 : index
    %c143_75 = arith.constant 143 : index
    %112 = vector.load %arg4[%c1_73, %c0_74, %c143_75] : memref<2x8x512xbf16, #tpu.memory_space<vmem>>, vector<1x8x256xbf16>
    %113 = vector.shape_cast %112 : vector<1x8x256xbf16> to vector<8x256xbf16>
    %114 = vector.shape_cast %33 : vector<1x256xi1> to vector<1x256xi1>
    %115 = vector.broadcast %114 : vector<1x256xi1> to vector<8x256xi1>
    %116 = arith.select %115, %36, %113 : vector<8x256xi1>, vector<8x256xbf16>
    %c48_76 = arith.constant 48 : index
    %c256_77 = arith.constant 256 : index
    %117 = vector.load %arg5[%c48_76, %c256_77] : memref<72x512xbf16, #tpu.memory_space<vmem>>, vector<8x256xbf16>
    tpu.vector_store %arg5[%c48_76, %c256_77], %116 {strides = array<i32>} : memref<72x512xbf16, #tpu.memory_space<vmem>>, vector<8x256xbf16>,
    %c1_78 = arith.constant 1 : index
    %c0_79 = arith.constant 0 : index
    %c144_80 = arith.constant 144 : index
    %118 = vector.load %arg4[%c1_78, %c0_79, %c144_80] : memref<2x8x512xbf16, #tpu.memory_space<vmem>>, vector<1x8x256xbf16>
    %119 = vector.shape_cast %118 : vector<1x8x256xbf16> to vector<8x256xbf16>
    %c56_81 = arith.constant 56 : index
    %c256_82 = arith.constant 256 : index
    %120 = vector.load %arg5[%c56_81, %c256_82] : memref<72x512xbf16, #tpu.memory_space<vmem>>, vector<8x256xbf16>
    tpu.vector_store %arg5[%c56_81, %c256_82], %119 {strides = array<i32>} : memref<72x512xbf16, #tpu.memory_space<vmem>>, vector<8x256xbf16>,
    %c1_83 = arith.constant 1 : index
    %c0_84 = arith.constant 0 : index
    %c145_85 = arith.constant 145 : index
    %121 = vector.load %arg4[%c1_83, %c0_84, %c145_85] : memref<2x8x512xbf16, #tpu.memory_space<vmem>>, vector<1x8x256xbf16>
    %122 = vector.shape_cast %121 : vector<1x8x256xbf16> to vector<8x256xbf16>
    %123 = vector.shape_cast %35 : vector<1x256xi1> to vector<1x256xi1>
    %124 = vector.broadcast %123 : vector<1x256xi1> to vector<8x256xi1>
    %125 = arith.select %124, %36, %122 : vector<8x256xi1>, vector<8x256xbf16>
    %c64_86 = arith.constant 64 : index
    %c256_87 = arith.constant 256 : index
    %126 = vector.load %arg5[%c64_86, %c256_87] : memref<72x512xbf16, #tpu.memory_space<vmem>>, vector<8x256xbf16>
    tpu.vector_store %arg5[%c64_86, %c256_87], %125 {strides = array<i32>} : memref<72x512xbf16, #tpu.memory_space<vmem>>, vector<8x256xbf16>,
    %c0_88 = arith.constant 0 : index
    %c0_89 = arith.constant 0 : index
    %127 = vector.load %arg2[%c0_88, %c0_89] : memref<8x72xbf16, #tpu.memory_space<vmem>>, vector<8x72xbf16>
    %c0_90 = arith.constant 0 : index
    %c0_91 = arith.constant 0 : index
    %128 = vector.load %arg5[%c0_90, %c0_91] : memref<72x512xbf16, #tpu.memory_space<vmem>>, vector<72x512xbf16>
    %cst_92 = arith.constant dense<0.000000e+00> : vector<8x512xf32>
    %129 = tpu.matmul %127, %128, %cst_92 {dimension_numbers = #tpu.dot_dimension_numbers<[1], [0], [0], [1], [0, 0, 1, 1], [], []>} : vector<8x72xbf16>, vector<72x512xbf16>, vector<8x512xf32> -> vector<8x512xf32>
    %cst_93 = arith.constant 1.000000e+00 : f32
    %130 = vector.broadcast %cst_93 : f32 to vector<512x1xf32>
    %131 = arith.mulf %129, %129 : vector<8x512xf32>
    %132 = tpu.concatenate %129, %131 in 0 : vector<8x512xf32>, vector<8x512xf32> -> vector<16x512xf32>
    %c0_94 = arith.constant 0 : index
    %c0_95 = arith.constant 0 : index
    %133 = vector.load %arg3[%c0_94, %c0_95] : memref<16x1xf32, #tpu.memory_space<vmem>>, vector<16x1xf32>
    %cst_96 = arith.constant dense<0.000000e+00> : vector<16x1xf32>
    %134 = tpu.matmul %132, %130, %cst_96 {dimension_numbers = #tpu.dot_dimension_numbers<[1], [0], [0], [1], [0, 0, 1, 1], [], []>} : vector<16x512xf32>, vector<512x1xf32>, vector<16x1xf32> -> vector<16x1xf32>
    %135 = arith.addf %133, %134 : vector<16x1xf32>
    %c0_97 = arith.constant 0 : index
    %c0_98 = arith.constant 0 : index
    %136 = vector.load %arg3[%c0_97, %c0_98] : memref<16x1xf32, #tpu.memory_space<vmem>>, vector<16x1xf32>
    tpu.vector_store %arg3[%c0_97, %c0_98], %135 {strides = array<i32>} : memref<16x1xf32, #tpu.memory_space<vmem>>, vector<16x1xf32>,
    return
  }
  func.func @transform_0(%arg0: i32) -> (i32, i32, i32) {
    %c0_i32 = arith.constant 0 : i32
    %c0_i32_0 = arith.constant 0 : i32
    %c0_i32_1 = arith.constant 0 : i32
    return %arg0, %c0_i32, %c0_i32_0 : i32, i32, i32
  }
  func.func @transform_1(%arg0: i32) -> (i32, i32) {
    %c0_i32 = arith.constant 0 : i32
    %c0_i32_0 = arith.constant 0 : i32
    %c0_i32_1 = arith.constant 0 : i32
    return %c0_i32, %c0_i32_0 : i32, i32
  }
  func.func @transform_2(%arg0: i32) -> (i32, i32) {
    %c0_i32 = arith.constant 0 : i32
    %c0_i32_0 = arith.constant 0 : i32
    %c0_i32_1 = arith.constant 0 : i32
    return %c0_i32, %c0_i32_0 : i32, i32
  }
}

module attributes {stable_mosaic.version = 11 : i64} {
  func.func @_bn_add_relu_kernel(%arg0: i32, %arg1: memref<2x4x256xbf16, #tpu.memory_space<vmem>>, %arg2: memref<2x4x256xf32, #tpu.memory_space<vmem>>, %arg3: memref<4x1xf32, #tpu.memory_space<vmem>>, %arg4: memref<4x1xf32, #tpu.memory_space<vmem>>, %arg5: memref<2x4x256xf32, #tpu.memory_space<vmem>>) attributes {dimension_semantics = [#tpu.dimension_semantics<parallel>], iteration_bounds = array<i64: 1>, scalar_prefetch = 0 : i64, scratch_operands = 0 : i64, tpu.core_type = #tpu.core_type<tc>, window_params = [{transform_indices = @transform_0, window_bounds = array<i64: 2, 4, 256>}, {transform_indices = @transform_1, window_bounds = array<i64: 2, 4, 256>}, {pipeline_mode = #tpu.pipeline_mode<synchronous>, transform_indices = @transform_2, window_bounds = array<i64: 4, 1>}, {pipeline_mode = #tpu.pipeline_mode<synchronous>, transform_indices = @transform_3, window_bounds = array<i64: 4, 1>}, {transform_indices = @transform_4, window_bounds = array<i64: 2, 4, 256>}]} {
    %c0 = arith.constant 0 : index
    %c0_0 = arith.constant 0 : index
    %c0_1 = arith.constant 0 : index
    %0 = vector.load %arg1[%c0, %c0_0, %c0_1] : memref<2x4x256xbf16, #tpu.memory_space<vmem>>, vector<2x4x256xbf16>
    %1 = arith.extf %0 : vector<2x4x256xbf16> to vector<2x4x256xf32>
    %c0_2 = arith.constant 0 : index
    %c0_3 = arith.constant 0 : index
    %2 = vector.load %arg3[%c0_2, %c0_3] : memref<4x1xf32, #tpu.memory_space<vmem>>, vector<4x1xf32>
    %3 = vector.shape_cast %2 : vector<4x1xf32> to vector<1x4x1xf32>
    %4 = vector.broadcast %3 : vector<1x4x1xf32> to vector<2x4x256xf32>
    %5 = arith.mulf %1, %4 : vector<2x4x256xf32>
    %c0_4 = arith.constant 0 : index
    %c0_5 = arith.constant 0 : index
    %6 = vector.load %arg4[%c0_4, %c0_5] : memref<4x1xf32, #tpu.memory_space<vmem>>, vector<4x1xf32>
    %7 = vector.shape_cast %6 : vector<4x1xf32> to vector<1x4x1xf32>
    %8 = vector.broadcast %7 : vector<1x4x1xf32> to vector<2x4x256xf32>
    %9 = arith.addf %5, %8 : vector<2x4x256xf32>
    %c0_6 = arith.constant 0 : index
    %c0_7 = arith.constant 0 : index
    %c0_8 = arith.constant 0 : index
    %10 = vector.load %arg2[%c0_6, %c0_7, %c0_8] : memref<2x4x256xf32, #tpu.memory_space<vmem>>, vector<2x4x256xf32>
    %11 = arith.addf %9, %10 : vector<2x4x256xf32>
    %cst = arith.constant 0.000000e+00 : f32
    %12 = vector.broadcast %cst : f32 to vector<2x4x256xf32>
    %13 = arith.maximumf %11, %12 : vector<2x4x256xf32>
    %c0_9 = arith.constant 0 : index
    %c0_10 = arith.constant 0 : index
    %c0_11 = arith.constant 0 : index
    %14 = vector.load %arg5[%c0_9, %c0_10, %c0_11] : memref<2x4x256xf32, #tpu.memory_space<vmem>>, vector<2x4x256xf32>
    tpu.vector_store %arg5[%c0_9, %c0_10, %c0_11], %13 {strides = array<i32>} : memref<2x4x256xf32, #tpu.memory_space<vmem>>, vector<2x4x256xf32>,
    return
  }
  func.func @transform_0(%arg0: i32) -> (i32, i32, i32) {
    %c0_i32 = arith.constant 0 : i32
    %c0_i32_0 = arith.constant 0 : i32
    %c0_i32_1 = arith.constant 0 : i32
    return %arg0, %c0_i32, %c0_i32_0 : i32, i32, i32
  }
  func.func @transform_1(%arg0: i32) -> (i32, i32, i32) {
    %c0_i32 = arith.constant 0 : i32
    %c0_i32_0 = arith.constant 0 : i32
    %c0_i32_1 = arith.constant 0 : i32
    return %arg0, %c0_i32, %c0_i32_0 : i32, i32, i32
  }
  func.func @transform_2(%arg0: i32) -> (i32, i32) {
    %c0_i32 = arith.constant 0 : i32
    %c0_i32_0 = arith.constant 0 : i32
    %c0_i32_1 = arith.constant 0 : i32
    return %c0_i32, %c0_i32_0 : i32, i32
  }
  func.func @transform_3(%arg0: i32) -> (i32, i32) {
    %c0_i32 = arith.constant 0 : i32
    %c0_i32_0 = arith.constant 0 : i32
    %c0_i32_1 = arith.constant 0 : i32
    return %c0_i32, %c0_i32_0 : i32, i32
  }
  func.func @transform_4(%arg0: i32) -> (i32, i32, i32) {
    %c0_i32 = arith.constant 0 : i32
    %c0_i32_0 = arith.constant 0 : i32
    %c0_i32_1 = arith.constant 0 : i32
    return %arg0, %c0_i32, %c0_i32_0 : i32, i32, i32
  }
}

module attributes {stable_mosaic.version = 11 : i64} {
  func.func @kernel(%arg0: i32, %arg1: memref<2x4x256xf32, #tpu.memory_space<vmem>>, %arg2: memref<4x1xf32, #tpu.memory_space<vmem>>, %arg3: memref<4x1xf32, #tpu.memory_space<vmem>>, %arg4: memref<8x72xbf16, #tpu.memory_space<vmem>>, %arg5: memref<8x72xbf16, #tpu.memory_space<vmem>>, %arg6: memref<2x4x256xbf16, #tpu.memory_space<vmem>>, %arg7: memref<16x1xf32, #tpu.memory_space<vmem>>, %arg8: memref<2x8x512xbf16, #tpu.memory_space<vmem>>, %arg9: memref<72x512xbf16, #tpu.memory_space<vmem>>) attributes {dimension_semantics = [#tpu.dimension_semantics<arbitrary>], iteration_bounds = array<i64: 1>, scalar_prefetch = 0 : i64, scratch_operands = 2 : i64, tpu.core_type = #tpu.core_type<tc>, window_params = [{transform_indices = @transform_0, window_bounds = array<i64: 2, 4, 256>}, {pipeline_mode = #tpu.pipeline_mode<synchronous>, transform_indices = @transform_1, window_bounds = array<i64: 4, 1>}, {pipeline_mode = #tpu.pipeline_mode<synchronous>, transform_indices = @transform_2, window_bounds = array<i64: 4, 1>}, {pipeline_mode = #tpu.pipeline_mode<synchronous>, transform_indices = @transform_3, window_bounds = array<i64: 8, 72>}, {pipeline_mode = #tpu.pipeline_mode<synchronous>, transform_indices = @transform_4, window_bounds = array<i64: 8, 72>}, {transform_indices = @transform_5, window_bounds = array<i64: 2, 4, 256>}, {pipeline_mode = #tpu.pipeline_mode<synchronous>, transform_indices = @transform_6, window_bounds = array<i64: 16, 1>}]} {
    %c0_i32 = arith.constant 0 : i32
    %0 = arith.cmpi eq, %arg0, %c0_i32 : i32
    %1 = arith.extui %0 : i1 to i32
    %c0_i32_0 = arith.constant 0 : i32
    %2 = arith.cmpi ne, %1, %c0_i32_0 : i32
    scf.if %2 {
      %cst_220 = arith.constant 0.000000e+00 : f32
      %281 = vector.broadcast %cst_220 : f32 to vector<16x1xf32>
      %c0_221 = arith.constant 0 : index
      %c0_222 = arith.constant 0 : index
      %282 = vector.load %arg7[%c0_221, %c0_222] : memref<16x1xf32, #tpu.memory_space<vmem>>, vector<16x1xf32>
      tpu.vector_store %arg7[%c0_221, %c0_222], %281 {strides = array<i32>} : memref<16x1xf32, #tpu.memory_space<vmem>>, vector<16x1xf32>,
      %cst_223 = arith.constant 0.000000e+00 : bf16
      %283 = vector.broadcast %cst_223 : bf16 to vector<2x8x512xbf16>
      %c0_224 = arith.constant 0 : index
      %c0_225 = arith.constant 0 : index
      %c0_226 = arith.constant 0 : index
      %284 = vector.load %arg8[%c0_224, %c0_225, %c0_226] : memref<2x8x512xbf16, #tpu.memory_space<vmem>>, vector<2x8x512xbf16>
      tpu.vector_store %arg8[%c0_224, %c0_225, %c0_226], %283 {strides = array<i32>} : memref<2x8x512xbf16, #tpu.memory_space<vmem>>, vector<2x8x512xbf16>,
    } else {
    }
    %c0 = arith.constant 0 : index
    %c0_1 = arith.constant 0 : index
    %c0_2 = arith.constant 0 : index
    %3 = vector.load %arg1[%c0, %c0_1, %c0_2] : memref<2x4x256xf32, #tpu.memory_space<vmem>>, vector<1x4x256xf32>
    %4 = vector.shape_cast %3 : vector<1x4x256xf32> to vector<4x256xf32>
    %5 = arith.truncf %4 : vector<4x256xf32> to vector<4x256xbf16>
    %c0_3 = arith.constant 0 : index
    %c0_4 = arith.constant 0 : index
    %c128 = arith.constant 128 : index
    %6 = vector.load %arg8[%c0_3, %c0_4, %c128] : memref<2x8x512xbf16, #tpu.memory_space<vmem>>, vector<1x4x256xbf16>
    %7 = vector.shape_cast %6 : vector<1x4x256xbf16> to vector<4x256xbf16>
    %8 = vector.shape_cast %5 : vector<4x256xbf16> to vector<1x4x256xbf16>
    tpu.vector_store %arg8[%c0_3, %c0_4, %c128], %8 {strides = array<i32>} : memref<2x8x512xbf16, #tpu.memory_space<vmem>>, vector<1x4x256xbf16>,
    %c1 = arith.constant 1 : index
    %c0_5 = arith.constant 0 : index
    %c0_6 = arith.constant 0 : index
    %9 = vector.load %arg1[%c1, %c0_5, %c0_6] : memref<2x4x256xf32, #tpu.memory_space<vmem>>, vector<1x4x256xf32>
    %10 = vector.shape_cast %9 : vector<1x4x256xf32> to vector<4x256xf32>
    %11 = arith.truncf %10 : vector<4x256xf32> to vector<4x256xbf16>
    %c1_7 = arith.constant 1 : index
    %c0_8 = arith.constant 0 : index
    %c128_9 = arith.constant 128 : index
    %12 = vector.load %arg8[%c1_7, %c0_8, %c128_9] : memref<2x8x512xbf16, #tpu.memory_space<vmem>>, vector<1x4x256xbf16>
    %13 = vector.shape_cast %12 : vector<1x4x256xbf16> to vector<4x256xbf16>
    %14 = vector.shape_cast %11 : vector<4x256xbf16> to vector<1x4x256xbf16>
    tpu.vector_store %arg8[%c1_7, %c0_8, %c128_9], %14 {strides = array<i32>} : memref<2x8x512xbf16, #tpu.memory_space<vmem>>, vector<1x4x256xbf16>,
    %15 = tpu.iota {dimensions = array<i32: 1>} : vector<1x256xi32>
    %c16_i32 = arith.constant 16 : i32
    %c0_i32_10 = arith.constant 0 : i32
    %16 = arith.cmpi eq, %c16_i32, %c0_i32_10 : i32
    %c1_i32 = arith.constant 1 : i32
    %17 = arith.select %16, %c1_i32, %c16_i32 : i32
    %18 = vector.broadcast %17 : i32 to vector<1x256xi32>
    %19 = arith.remsi %15, %18 : vector<1x256xi32>
    %c0_i32_11 = arith.constant 0 : i32
    %20 = vector.broadcast %c0_i32_11 : i32 to vector<1x256xi32>
    %21 = arith.cmpi ne, %19, %20 : vector<1x256xi32>
    %c0_i32_12 = arith.constant 0 : i32
    %22 = vector.broadcast %c0_i32_12 : i32 to vector<1x256xi32>
    %23 = arith.cmpi slt, %19, %22 : vector<1x256xi32>
    %c0_i32_13 = arith.constant 0 : i32
    %24 = arith.cmpi slt, %17, %c0_i32_13 : i32
    %25 = vector.broadcast %24 : i1 to vector<1x256xi1>
    %26 = vector.broadcast %25 : vector<1x256xi1> to vector<1x256xi1>
    %27 = arith.xori %23, %26 : vector<1x256xi1>
    %28 = arith.andi %27, %21 : vector<1x256xi1>
    %29 = vector.broadcast %17 : i32 to vector<1x256xi32>
    %30 = arith.addi %19, %29 : vector<1x256xi32>
    %31 = arith.select %28, %30, %19 : vector<1x256xi1>, vector<1x256xi32>
    %c0_i32_14 = arith.constant 0 : i32
    %32 = vector.broadcast %c0_i32_14 : i32 to vector<1x256xi32>
    %33 = arith.cmpi eq, %31, %32 : vector<1x256xi32>
    %c15_i32 = arith.constant 15 : i32
    %34 = vector.broadcast %c15_i32 : i32 to vector<1x256xi32>
    %35 = arith.cmpi eq, %31, %34 : vector<1x256xi32>
    %cst = arith.constant 0.000000e+00 : bf16
    %36 = vector.broadcast %cst : bf16 to vector<8x256xbf16>
    %c0_15 = arith.constant 0 : index
    %c0_16 = arith.constant 0 : index
    %c111 = arith.constant 111 : index
    %37 = vector.load %arg8[%c0_15, %c0_16, %c111] : memref<2x8x512xbf16, #tpu.memory_space<vmem>>, vector<1x8x256xbf16>
    %38 = vector.shape_cast %37 : vector<1x8x256xbf16> to vector<8x256xbf16>
    %39 = vector.shape_cast %33 : vector<1x256xi1> to vector<1x256xi1>
    %40 = vector.broadcast %39 : vector<1x256xi1> to vector<8x256xi1>
    %41 = arith.select %40, %36, %38 : vector<8x256xi1>, vector<8x256xbf16>
    %c0_17 = arith.constant 0 : index
    %c0_18 = arith.constant 0 : index
    %42 = vector.load %arg9[%c0_17, %c0_18] : memref<72x512xbf16, #tpu.memory_space<vmem>>, vector<8x256xbf16>
    tpu.vector_store %arg9[%c0_17, %c0_18], %41 {strides = array<i32>} : memref<72x512xbf16, #tpu.memory_space<vmem>>, vector<8x256xbf16>,
    %c0_19 = arith.constant 0 : index
    %c0_20 = arith.constant 0 : index
    %c112 = arith.constant 112 : index
    %43 = vector.load %arg8[%c0_19, %c0_20, %c112] : memref<2x8x512xbf16, #tpu.memory_space<vmem>>, vector<1x8x256xbf16>
    %44 = vector.shape_cast %43 : vector<1x8x256xbf16> to vector<8x256xbf16>
    %c8 = arith.constant 8 : index
    %c0_21 = arith.constant 0 : index
    %45 = vector.load %arg9[%c8, %c0_21] : memref<72x512xbf16, #tpu.memory_space<vmem>>, vector<8x256xbf16>
    tpu.vector_store %arg9[%c8, %c0_21], %44 {strides = array<i32>} : memref<72x512xbf16, #tpu.memory_space<vmem>>, vector<8x256xbf16>,
    %c0_22 = arith.constant 0 : index
    %c0_23 = arith.constant 0 : index
    %c113 = arith.constant 113 : index
    %46 = vector.load %arg8[%c0_22, %c0_23, %c113] : memref<2x8x512xbf16, #tpu.memory_space<vmem>>, vector<1x8x256xbf16>
    %47 = vector.shape_cast %46 : vector<1x8x256xbf16> to vector<8x256xbf16>
    %48 = vector.shape_cast %35 : vector<1x256xi1> to vector<1x256xi1>
    %49 = vector.broadcast %48 : vector<1x256xi1> to vector<8x256xi1>
    %50 = arith.select %49, %36, %47 : vector<8x256xi1>, vector<8x256xbf16>
    %c16 = arith.constant 16 : index
    %c0_24 = arith.constant 0 : index
    %51 = vector.load %arg9[%c16, %c0_24] : memref<72x512xbf16, #tpu.memory_space<vmem>>, vector<8x256xbf16>
    tpu.vector_store %arg9[%c16, %c0_24], %50 {strides = array<i32>} : memref<72x512xbf16, #tpu.memory_space<vmem>>, vector<8x256xbf16>,
    %c0_25 = arith.constant 0 : index
    %c0_26 = arith.constant 0 : index
    %c127 = arith.constant 127 : index
    %52 = vector.load %arg8[%c0_25, %c0_26, %c127] : memref<2x8x512xbf16, #tpu.memory_space<vmem>>, vector<1x8x256xbf16>
    %53 = vector.shape_cast %52 : vector<1x8x256xbf16> to vector<8x256xbf16>
    %54 = vector.shape_cast %33 : vector<1x256xi1> to vector<1x256xi1>
    %55 = vector.broadcast %54 : vector<1x256xi1> to vector<8x256xi1>
    %56 = arith.select %55, %36, %53 : vector<8x256xi1>, vector<8x256xbf16>
    %c24 = arith.constant 24 : index
    %c0_27 = arith.constant 0 : index
    %57 = vector.load %arg9[%c24, %c0_27] : memref<72x512xbf16, #tpu.memory_space<vmem>>, vector<8x256xbf16>
    tpu.vector_store %arg9[%c24, %c0_27], %56 {strides = array<i32>} : memref<72x512xbf16, #tpu.memory_space<vmem>>, vector<8x256xbf16>,
    %c0_28 = arith.constant 0 : index
    %c0_29 = arith.constant 0 : index
    %c128_30 = arith.constant 128 : index
    %58 = vector.load %arg8[%c0_28, %c0_29, %c128_30] : memref<2x8x512xbf16, #tpu.memory_space<vmem>>, vector<1x8x256xbf16>
    %59 = vector.shape_cast %58 : vector<1x8x256xbf16> to vector<8x256xbf16>
    %c32 = arith.constant 32 : index
    %c0_31 = arith.constant 0 : index
    %60 = vector.load %arg9[%c32, %c0_31] : memref<72x512xbf16, #tpu.memory_space<vmem>>, vector<8x256xbf16>
    tpu.vector_store %arg9[%c32, %c0_31], %59 {strides = array<i32>} : memref<72x512xbf16, #tpu.memory_space<vmem>>, vector<8x256xbf16>,
    %c0_32 = arith.constant 0 : index
    %c0_33 = arith.constant 0 : index
    %c129 = arith.constant 129 : index
    %61 = vector.load %arg8[%c0_32, %c0_33, %c129] : memref<2x8x512xbf16, #tpu.memory_space<vmem>>, vector<1x8x256xbf16>
    %62 = vector.shape_cast %61 : vector<1x8x256xbf16> to vector<8x256xbf16>
    %63 = vector.shape_cast %35 : vector<1x256xi1> to vector<1x256xi1>
    %64 = vector.broadcast %63 : vector<1x256xi1> to vector<8x256xi1>
    %65 = arith.select %64, %36, %62 : vector<8x256xi1>, vector<8x256xbf16>
    %c40 = arith.constant 40 : index
    %c0_34 = arith.constant 0 : index
    %66 = vector.load %arg9[%c40, %c0_34] : memref<72x512xbf16, #tpu.memory_space<vmem>>, vector<8x256xbf16>
    tpu.vector_store %arg9[%c40, %c0_34], %65 {strides = array<i32>} : memref<72x512xbf16, #tpu.memory_space<vmem>>, vector<8x256xbf16>,
    %c0_35 = arith.constant 0 : index
    %c0_36 = arith.constant 0 : index
    %c143 = arith.constant 143 : index
    %67 = vector.load %arg8[%c0_35, %c0_36, %c143] : memref<2x8x512xbf16, #tpu.memory_space<vmem>>, vector<1x8x256xbf16>
    %68 = vector.shape_cast %67 : vector<1x8x256xbf16> to vector<8x256xbf16>
    %69 = vector.shape_cast %33 : vector<1x256xi1> to vector<1x256xi1>
    %70 = vector.broadcast %69 : vector<1x256xi1> to vector<8x256xi1>
    %71 = arith.select %70, %36, %68 : vector<8x256xi1>, vector<8x256xbf16>
    %c48 = arith.constant 48 : index
    %c0_37 = arith.constant 0 : index
    %72 = vector.load %arg9[%c48, %c0_37] : memref<72x512xbf16, #tpu.memory_space<vmem>>, vector<8x256xbf16>
    tpu.vector_store %arg9[%c48, %c0_37], %71 {strides = array<i32>} : memref<72x512xbf16, #tpu.memory_space<vmem>>, vector<8x256xbf16>,
    %c0_38 = arith.constant 0 : index
    %c0_39 = arith.constant 0 : index
    %c144 = arith.constant 144 : index
    %73 = vector.load %arg8[%c0_38, %c0_39, %c144] : memref<2x8x512xbf16, #tpu.memory_space<vmem>>, vector<1x8x256xbf16>
    %74 = vector.shape_cast %73 : vector<1x8x256xbf16> to vector<8x256xbf16>
    %c56 = arith.constant 56 : index
    %c0_40 = arith.constant 0 : index
    %75 = vector.load %arg9[%c56, %c0_40] : memref<72x512xbf16, #tpu.memory_space<vmem>>, vector<8x256xbf16>
    tpu.vector_store %arg9[%c56, %c0_40], %74 {strides = array<i32>} : memref<72x512xbf16, #tpu.memory_space<vmem>>, vector<8x256xbf16>,
    %c0_41 = arith.constant 0 : index
    %c0_42 = arith.constant 0 : index
    %c145 = arith.constant 145 : index
    %76 = vector.load %arg8[%c0_41, %c0_42, %c145] : memref<2x8x512xbf16, #tpu.memory_space<vmem>>, vector<1x8x256xbf16>
    %77 = vector.shape_cast %76 : vector<1x8x256xbf16> to vector<8x256xbf16>
    %78 = vector.shape_cast %35 : vector<1x256xi1> to vector<1x256xi1>
    %79 = vector.broadcast %78 : vector<1x256xi1> to vector<8x256xi1>
    %80 = arith.select %79, %36, %77 : vector<8x256xi1>, vector<8x256xbf16>
    %c64 = arith.constant 64 : index
    %c0_43 = arith.constant 0 : index
    %81 = vector.load %arg9[%c64, %c0_43] : memref<72x512xbf16, #tpu.memory_space<vmem>>, vector<8x256xbf16>
    tpu.vector_store %arg9[%c64, %c0_43], %80 {strides = array<i32>} : memref<72x512xbf16, #tpu.memory_space<vmem>>, vector<8x256xbf16>,
    %c1_44 = arith.constant 1 : index
    %c0_45 = arith.constant 0 : index
    %c111_46 = arith.constant 111 : index
    %82 = vector.load %arg8[%c1_44, %c0_45, %c111_46] : memref<2x8x512xbf16, #tpu.memory_space<vmem>>, vector<1x8x256xbf16>
    %83 = vector.shape_cast %82 : vector<1x8x256xbf16> to vector<8x256xbf16>
    %84 = vector.shape_cast %33 : vector<1x256xi1> to vector<1x256xi1>
    %85 = vector.broadcast %84 : vector<1x256xi1> to vector<8x256xi1>
    %86 = arith.select %85, %36, %83 : vector<8x256xi1>, vector<8x256xbf16>
    %c0_47 = arith.constant 0 : index
    %c256 = arith.constant 256 : index
    %87 = vector.load %arg9[%c0_47, %c256] : memref<72x512xbf16, #tpu.memory_space<vmem>>, vector<8x256xbf16>
    tpu.vector_store %arg9[%c0_47, %c256], %86 {strides = array<i32>} : memref<72x512xbf16, #tpu.memory_space<vmem>>, vector<8x256xbf16>,
    %c1_48 = arith.constant 1 : index
    %c0_49 = arith.constant 0 : index
    %c112_50 = arith.constant 112 : index
    %88 = vector.load %arg8[%c1_48, %c0_49, %c112_50] : memref<2x8x512xbf16, #tpu.memory_space<vmem>>, vector<1x8x256xbf16>
    %89 = vector.shape_cast %88 : vector<1x8x256xbf16> to vector<8x256xbf16>
    %c8_51 = arith.constant 8 : index
    %c256_52 = arith.constant 256 : index
    %90 = vector.load %arg9[%c8_51, %c256_52] : memref<72x512xbf16, #tpu.memory_space<vmem>>, vector<8x256xbf16>
    tpu.vector_store %arg9[%c8_51, %c256_52], %89 {strides = array<i32>} : memref<72x512xbf16, #tpu.memory_space<vmem>>, vector<8x256xbf16>,
    %c1_53 = arith.constant 1 : index
    %c0_54 = arith.constant 0 : index
    %c113_55 = arith.constant 113 : index
    %91 = vector.load %arg8[%c1_53, %c0_54, %c113_55] : memref<2x8x512xbf16, #tpu.memory_space<vmem>>, vector<1x8x256xbf16>
    %92 = vector.shape_cast %91 : vector<1x8x256xbf16> to vector<8x256xbf16>
    %93 = vector.shape_cast %35 : vector<1x256xi1> to vector<1x256xi1>
    %94 = vector.broadcast %93 : vector<1x256xi1> to vector<8x256xi1>
    %95 = arith.select %94, %36, %92 : vector<8x256xi1>, vector<8x256xbf16>
    %c16_56 = arith.constant 16 : index
    %c256_57 = arith.constant 256 : index
    %96 = vector.load %arg9[%c16_56, %c256_57] : memref<72x512xbf16, #tpu.memory_space<vmem>>, vector<8x256xbf16>
    tpu.vector_store %arg9[%c16_56, %c256_57], %95 {strides = array<i32>} : memref<72x512xbf16, #tpu.memory_space<vmem>>, vector<8x256xbf16>,
    %c1_58 = arith.constant 1 : index
    %c0_59 = arith.constant 0 : index
    %c127_60 = arith.constant 127 : index
    %97 = vector.load %arg8[%c1_58, %c0_59, %c127_60] : memref<2x8x512xbf16, #tpu.memory_space<vmem>>, vector<1x8x256xbf16>
    %98 = vector.shape_cast %97 : vector<1x8x256xbf16> to vector<8x256xbf16>
    %99 = vector.shape_cast %33 : vector<1x256xi1> to vector<1x256xi1>
    %100 = vector.broadcast %99 : vector<1x256xi1> to vector<8x256xi1>
    %101 = arith.select %100, %36, %98 : vector<8x256xi1>, vector<8x256xbf16>
    %c24_61 = arith.constant 24 : index
    %c256_62 = arith.constant 256 : index
    %102 = vector.load %arg9[%c24_61, %c256_62] : memref<72x512xbf16, #tpu.memory_space<vmem>>, vector<8x256xbf16>
    tpu.vector_store %arg9[%c24_61, %c256_62], %101 {strides = array<i32>} : memref<72x512xbf16, #tpu.memory_space<vmem>>, vector<8x256xbf16>,
    %c1_63 = arith.constant 1 : index
    %c0_64 = arith.constant 0 : index
    %c128_65 = arith.constant 128 : index
    %103 = vector.load %arg8[%c1_63, %c0_64, %c128_65] : memref<2x8x512xbf16, #tpu.memory_space<vmem>>, vector<1x8x256xbf16>
    %104 = vector.shape_cast %103 : vector<1x8x256xbf16> to vector<8x256xbf16>
    %c32_66 = arith.constant 32 : index
    %c256_67 = arith.constant 256 : index
    %105 = vector.load %arg9[%c32_66, %c256_67] : memref<72x512xbf16, #tpu.memory_space<vmem>>, vector<8x256xbf16>
    tpu.vector_store %arg9[%c32_66, %c256_67], %104 {strides = array<i32>} : memref<72x512xbf16, #tpu.memory_space<vmem>>, vector<8x256xbf16>,
    %c1_68 = arith.constant 1 : index
    %c0_69 = arith.constant 0 : index
    %c129_70 = arith.constant 129 : index
    %106 = vector.load %arg8[%c1_68, %c0_69, %c129_70] : memref<2x8x512xbf16, #tpu.memory_space<vmem>>, vector<1x8x256xbf16>
    %107 = vector.shape_cast %106 : vector<1x8x256xbf16> to vector<8x256xbf16>
    %108 = vector.shape_cast %35 : vector<1x256xi1> to vector<1x256xi1>
    %109 = vector.broadcast %108 : vector<1x256xi1> to vector<8x256xi1>
    %110 = arith.select %109, %36, %107 : vector<8x256xi1>, vector<8x256xbf16>
    %c40_71 = arith.constant 40 : index
    %c256_72 = arith.constant 256 : index
    %111 = vector.load %arg9[%c40_71, %c256_72] : memref<72x512xbf16, #tpu.memory_space<vmem>>, vector<8x256xbf16>
    tpu.vector_store %arg9[%c40_71, %c256_72], %110 {strides = array<i32>} : memref<72x512xbf16, #tpu.memory_space<vmem>>, vector<8x256xbf16>,
    %c1_73 = arith.constant 1 : index
    %c0_74 = arith.constant 0 : index
    %c143_75 = arith.constant 143 : index
    %112 = vector.load %arg8[%c1_73, %c0_74, %c143_75] : memref<2x8x512xbf16, #tpu.memory_space<vmem>>, vector<1x8x256xbf16>
    %113 = vector.shape_cast %112 : vector<1x8x256xbf16> to vector<8x256xbf16>
    %114 = vector.shape_cast %33 : vector<1x256xi1> to vector<1x256xi1>
    %115 = vector.broadcast %114 : vector<1x256xi1> to vector<8x256xi1>
    %116 = arith.select %115, %36, %113 : vector<8x256xi1>, vector<8x256xbf16>
    %c48_76 = arith.constant 48 : index
    %c256_77 = arith.constant 256 : index
    %117 = vector.load %arg9[%c48_76, %c256_77] : memref<72x512xbf16, #tpu.memory_space<vmem>>, vector<8x256xbf16>
    tpu.vector_store %arg9[%c48_76, %c256_77], %116 {strides = array<i32>} : memref<72x512xbf16, #tpu.memory_space<vmem>>, vector<8x256xbf16>,
    %c1_78 = arith.constant 1 : index
    %c0_79 = arith.constant 0 : index
    %c144_80 = arith.constant 144 : index
    %118 = vector.load %arg8[%c1_78, %c0_79, %c144_80] : memref<2x8x512xbf16, #tpu.memory_space<vmem>>, vector<1x8x256xbf16>
    %119 = vector.shape_cast %118 : vector<1x8x256xbf16> to vector<8x256xbf16>
    %c56_81 = arith.constant 56 : index
    %c256_82 = arith.constant 256 : index
    %120 = vector.load %arg9[%c56_81, %c256_82] : memref<72x512xbf16, #tpu.memory_space<vmem>>, vector<8x256xbf16>
    tpu.vector_store %arg9[%c56_81, %c256_82], %119 {strides = array<i32>} : memref<72x512xbf16, #tpu.memory_space<vmem>>, vector<8x256xbf16>,
    %c1_83 = arith.constant 1 : index
    %c0_84 = arith.constant 0 : index
    %c145_85 = arith.constant 145 : index
    %121 = vector.load %arg8[%c1_83, %c0_84, %c145_85] : memref<2x8x512xbf16, #tpu.memory_space<vmem>>, vector<1x8x256xbf16>
    %122 = vector.shape_cast %121 : vector<1x8x256xbf16> to vector<8x256xbf16>
    %123 = vector.shape_cast %35 : vector<1x256xi1> to vector<1x256xi1>
    %124 = vector.broadcast %123 : vector<1x256xi1> to vector<8x256xi1>
    %125 = arith.select %124, %36, %122 : vector<8x256xi1>, vector<8x256xbf16>
    %c64_86 = arith.constant 64 : index
    %c256_87 = arith.constant 256 : index
    %126 = vector.load %arg9[%c64_86, %c256_87] : memref<72x512xbf16, #tpu.memory_space<vmem>>, vector<8x256xbf16>
    tpu.vector_store %arg9[%c64_86, %c256_87], %125 {strides = array<i32>} : memref<72x512xbf16, #tpu.memory_space<vmem>>, vector<8x256xbf16>,
    %c0_88 = arith.constant 0 : index
    %c0_89 = arith.constant 0 : index
    %127 = vector.load %arg4[%c0_88, %c0_89] : memref<8x72xbf16, #tpu.memory_space<vmem>>, vector<8x72xbf16>
    %c0_90 = arith.constant 0 : index
    %c0_91 = arith.constant 0 : index
    %128 = vector.load %arg9[%c0_90, %c0_91] : memref<72x512xbf16, #tpu.memory_space<vmem>>, vector<72x512xbf16>
    %cst_92 = arith.constant dense<0.000000e+00> : vector<8x512xf32>
    %129 = tpu.matmul %127, %128, %cst_92 {dimension_numbers = #tpu.dot_dimension_numbers<[1], [0], [0], [1], [0, 0, 1, 1], [], []>} : vector<8x72xbf16>, vector<72x512xbf16>, vector<8x512xf32> -> vector<8x512xf32>
    %130 = vector.extract_strided_slice %129 {offsets = [0, 0], sizes = [4, 512], strides = [1, 1]} : vector<8x512xf32> to vector<4x512xf32>
    %c0_93 = arith.constant 0 : index
    %c0_94 = arith.constant 0 : index
    %131 = vector.load %arg2[%c0_93, %c0_94] : memref<4x1xf32, #tpu.memory_space<vmem>>, vector<4x1xf32>
    %132 = vector.broadcast %131 : vector<4x1xf32> to vector<4x512xf32>
    %133 = arith.mulf %130, %132 : vector<4x512xf32>
    %c0_95 = arith.constant 0 : index
    %c0_96 = arith.constant 0 : index
    %134 = vector.load %arg3[%c0_95, %c0_96] : memref<4x1xf32, #tpu.memory_space<vmem>>, vector<4x1xf32>
    %135 = vector.broadcast %134 : vector<4x1xf32> to vector<4x512xf32>
    %136 = arith.addf %133, %135 : vector<4x512xf32>
    %cst_97 = arith.constant 0.000000e+00 : f32
    %137 = vector.broadcast %cst_97 : f32 to vector<4x512xf32>
    %138 = arith.maximumf %136, %137 : vector<4x512xf32>
    %139 = vector.extract_strided_slice %138 {offsets = [0, 0], sizes = [4, 256], strides = [1, 1]} : vector<4x512xf32> to vector<4x256xf32>
    %140 = arith.truncf %139 : vector<4x256xf32> to vector<4x256xbf16>
    %c0_98 = arith.constant 0 : index
    %c0_99 = arith.constant 0 : index
    %c128_100 = arith.constant 128 : index
    %141 = vector.load %arg8[%c0_98, %c0_99, %c128_100] : memref<2x8x512xbf16, #tpu.memory_space<vmem>>, vector<1x4x256xbf16>
    %142 = vector.shape_cast %141 : vector<1x4x256xbf16> to vector<4x256xbf16>
    %143 = vector.shape_cast %140 : vector<4x256xbf16> to vector<1x4x256xbf16>
    tpu.vector_store %arg8[%c0_98, %c0_99, %c128_100], %143 {strides = array<i32>} : memref<2x8x512xbf16, #tpu.memory_space<vmem>>, vector<1x4x256xbf16>,
    %144 = vector.extract_strided_slice %138 {offsets = [0, 256], sizes = [4, 256], strides = [1, 1]} : vector<4x512xf32> to vector<4x256xf32>
    %145 = arith.truncf %144 : vector<4x256xf32> to vector<4x256xbf16>
    %c1_101 = arith.constant 1 : index
    %c0_102 = arith.constant 0 : index
    %c128_103 = arith.constant 128 : index
    %146 = vector.load %arg8[%c1_101, %c0_102, %c128_103] : memref<2x8x512xbf16, #tpu.memory_space<vmem>>, vector<1x4x256xbf16>
    %147 = vector.shape_cast %146 : vector<1x4x256xbf16> to vector<4x256xbf16>
    %148 = vector.shape_cast %145 : vector<4x256xbf16> to vector<1x4x256xbf16>
    tpu.vector_store %arg8[%c1_101, %c0_102, %c128_103], %148 {strides = array<i32>} : memref<2x8x512xbf16, #tpu.memory_space<vmem>>, vector<1x4x256xbf16>,
    %149 = tpu.iota {dimensions = array<i32: 1>} : vector<1x256xi32>
    %c16_i32_104 = arith.constant 16 : i32
    %c0_i32_105 = arith.constant 0 : i32
    %150 = arith.cmpi eq, %c16_i32_104, %c0_i32_105 : i32
    %c1_i32_106 = arith.constant 1 : i32
    %151 = arith.select %150, %c1_i32_106, %c16_i32_104 : i32
    %152 = vector.broadcast %151 : i32 to vector<1x256xi32>
    %153 = arith.remsi %149, %152 : vector<1x256xi32>
    %c0_i32_107 = arith.constant 0 : i32
    %154 = vector.broadcast %c0_i32_107 : i32 to vector<1x256xi32>
    %155 = arith.cmpi ne, %153, %154 : vector<1x256xi32>
    %c0_i32_108 = arith.constant 0 : i32
    %156 = vector.broadcast %c0_i32_108 : i32 to vector<1x256xi32>
    %157 = arith.cmpi slt, %153, %156 : vector<1x256xi32>
    %c0_i32_109 = arith.constant 0 : i32
    %158 = arith.cmpi slt, %151, %c0_i32_109 : i32
    %159 = vector.broadcast %158 : i1 to vector<1x256xi1>
    %160 = vector.broadcast %159 : vector<1x256xi1> to vector<1x256xi1>
    %161 = arith.xori %157, %160 : vector<1x256xi1>
    %162 = arith.andi %161, %155 : vector<1x256xi1>
    %163 = vector.broadcast %151 : i32 to vector<1x256xi32>
    %164 = arith.addi %153, %163 : vector<1x256xi32>
    %165 = arith.select %162, %164, %153 : vector<1x256xi1>, vector<1x256xi32>
    %c0_i32_110 = arith.constant 0 : i32
    %166 = vector.broadcast %c0_i32_110 : i32 to vector<1x256xi32>
    %167 = arith.cmpi eq, %165, %166 : vector<1x256xi32>
    %c15_i32_111 = arith.constant 15 : i32
    %168 = vector.broadcast %c15_i32_111 : i32 to vector<1x256xi32>
    %169 = arith.cmpi eq, %165, %168 : vector<1x256xi32>
    %cst_112 = arith.constant 0.000000e+00 : bf16
    %170 = vector.broadcast %cst_112 : bf16 to vector<8x256xbf16>
    %c0_113 = arith.constant 0 : index
    %c0_114 = arith.constant 0 : index
    %c111_115 = arith.constant 111 : index
    %171 = vector.load %arg8[%c0_113, %c0_114, %c111_115] : memref<2x8x512xbf16, #tpu.memory_space<vmem>>, vector<1x8x256xbf16>
    %172 = vector.shape_cast %171 : vector<1x8x256xbf16> to vector<8x256xbf16>
    %173 = vector.shape_cast %167 : vector<1x256xi1> to vector<1x256xi1>
    %174 = vector.broadcast %173 : vector<1x256xi1> to vector<8x256xi1>
    %175 = arith.select %174, %170, %172 : vector<8x256xi1>, vector<8x256xbf16>
    %c0_116 = arith.constant 0 : index
    %c0_117 = arith.constant 0 : index
    %176 = vector.load %arg9[%c0_116, %c0_117] : memref<72x512xbf16, #tpu.memory_space<vmem>>, vector<8x256xbf16>
    tpu.vector_store %arg9[%c0_116, %c0_117], %175 {strides = array<i32>} : memref<72x512xbf16, #tpu.memory_space<vmem>>, vector<8x256xbf16>,
    %c0_118 = arith.constant 0 : index
    %c0_119 = arith.constant 0 : index
    %c112_120 = arith.constant 112 : index
    %177 = vector.load %arg8[%c0_118, %c0_119, %c112_120] : memref<2x8x512xbf16, #tpu.memory_space<vmem>>, vector<1x8x256xbf16>
    %178 = vector.shape_cast %177 : vector<1x8x256xbf16> to vector<8x256xbf16>
    %c8_121 = arith.constant 8 : index
    %c0_122 = arith.constant 0 : index
    %179 = vector.load %arg9[%c8_121, %c0_122] : memref<72x512xbf16, #tpu.memory_space<vmem>>, vector<8x256xbf16>
    tpu.vector_store %arg9[%c8_121, %c0_122], %178 {strides = array<i32>} : memref<72x512xbf16, #tpu.memory_space<vmem>>, vector<8x256xbf16>,
    %c0_123 = arith.constant 0 : index
    %c0_124 = arith.constant 0 : index
    %c113_125 = arith.constant 113 : index
    %180 = vector.load %arg8[%c0_123, %c0_124, %c113_125] : memref<2x8x512xbf16, #tpu.memory_space<vmem>>, vector<1x8x256xbf16>
    %181 = vector.shape_cast %180 : vector<1x8x256xbf16> to vector<8x256xbf16>
    %182 = vector.shape_cast %169 : vector<1x256xi1> to vector<1x256xi1>
    %183 = vector.broadcast %182 : vector<1x256xi1> to vector<8x256xi1>
    %184 = arith.select %183, %170, %181 : vector<8x256xi1>, vector<8x256xbf16>
    %c16_126 = arith.constant 16 : index
    %c0_127 = arith.constant 0 : index
    %185 = vector.load %arg9[%c16_126, %c0_127] : memref<72x512xbf16, #tpu.memory_space<vmem>>, vector<8x256xbf16>
    tpu.vector_store %arg9[%c16_126, %c0_127], %184 {strides = array<i32>} : memref<72x512xbf16, #tpu.memory_space<vmem>>, vector<8x256xbf16>,
    %c0_128 = arith.constant 0 : index
    %c0_129 = arith.constant 0 : index
    %c127_130 = arith.constant 127 : index
    %186 = vector.load %arg8[%c0_128, %c0_129, %c127_130] : memref<2x8x512xbf16, #tpu.memory_space<vmem>>, vector<1x8x256xbf16>
    %187 = vector.shape_cast %186 : vector<1x8x256xbf16> to vector<8x256xbf16>
    %188 = vector.shape_cast %167 : vector<1x256xi1> to vector<1x256xi1>
    %189 = vector.broadcast %188 : vector<1x256xi1> to vector<8x256xi1>
    %190 = arith.select %189, %170, %187 : vector<8x256xi1>, vector<8x256xbf16>
    %c24_131 = arith.constant 24 : index
    %c0_132 = arith.constant 0 : index
    %191 = vector.load %arg9[%c24_131, %c0_132] : memref<72x512xbf16, #tpu.memory_space<vmem>>, vector<8x256xbf16>
    tpu.vector_store %arg9[%c24_131, %c0_132], %190 {strides = array<i32>} : memref<72x512xbf16, #tpu.memory_space<vmem>>, vector<8x256xbf16>,
    %c0_133 = arith.constant 0 : index
    %c0_134 = arith.constant 0 : index
    %c128_135 = arith.constant 128 : index
    %192 = vector.load %arg8[%c0_133, %c0_134, %c128_135] : memref<2x8x512xbf16, #tpu.memory_space<vmem>>, vector<1x8x256xbf16>
    %193 = vector.shape_cast %192 : vector<1x8x256xbf16> to vector<8x256xbf16>
    %c32_136 = arith.constant 32 : index
    %c0_137 = arith.constant 0 : index
    %194 = vector.load %arg9[%c32_136, %c0_137] : memref<72x512xbf16, #tpu.memory_space<vmem>>, vector<8x256xbf16>
    tpu.vector_store %arg9[%c32_136, %c0_137], %193 {strides = array<i32>} : memref<72x512xbf16, #tpu.memory_space<vmem>>, vector<8x256xbf16>,
    %c0_138 = arith.constant 0 : index
    %c0_139 = arith.constant 0 : index
    %c129_140 = arith.constant 129 : index
    %195 = vector.load %arg8[%c0_138, %c0_139, %c129_140] : memref<2x8x512xbf16, #tpu.memory_space<vmem>>, vector<1x8x256xbf16>
    %196 = vector.shape_cast %195 : vector<1x8x256xbf16> to vector<8x256xbf16>
    %197 = vector.shape_cast %169 : vector<1x256xi1> to vector<1x256xi1>
    %198 = vector.broadcast %197 : vector<1x256xi1> to vector<8x256xi1>
    %199 = arith.select %198, %170, %196 : vector<8x256xi1>, vector<8x256xbf16>
    %c40_141 = arith.constant 40 : index
    %c0_142 = arith.constant 0 : index
    %200 = vector.load %arg9[%c40_141, %c0_142] : memref<72x512xbf16, #tpu.memory_space<vmem>>, vector<8x256xbf16>
    tpu.vector_store %arg9[%c40_141, %c0_142], %199 {strides = array<i32>} : memref<72x512xbf16, #tpu.memory_space<vmem>>, vector<8x256xbf16>,
    %c0_143 = arith.constant 0 : index
    %c0_144 = arith.constant 0 : index
    %c143_145 = arith.constant 143 : index
    %201 = vector.load %arg8[%c0_143, %c0_144, %c143_145] : memref<2x8x512xbf16, #tpu.memory_space<vmem>>, vector<1x8x256xbf16>
    %202 = vector.shape_cast %201 : vector<1x8x256xbf16> to vector<8x256xbf16>
    %203 = vector.shape_cast %167 : vector<1x256xi1> to vector<1x256xi1>
    %204 = vector.broadcast %203 : vector<1x256xi1> to vector<8x256xi1>
    %205 = arith.select %204, %170, %202 : vector<8x256xi1>, vector<8x256xbf16>
    %c48_146 = arith.constant 48 : index
    %c0_147 = arith.constant 0 : index
    %206 = vector.load %arg9[%c48_146, %c0_147] : memref<72x512xbf16, #tpu.memory_space<vmem>>, vector<8x256xbf16>
    tpu.vector_store %arg9[%c48_146, %c0_147], %205 {strides = array<i32>} : memref<72x512xbf16, #tpu.memory_space<vmem>>, vector<8x256xbf16>,
    %c0_148 = arith.constant 0 : index
    %c0_149 = arith.constant 0 : index
    %c144_150 = arith.constant 144 : index
    %207 = vector.load %arg8[%c0_148, %c0_149, %c144_150] : memref<2x8x512xbf16, #tpu.memory_space<vmem>>, vector<1x8x256xbf16>
    %208 = vector.shape_cast %207 : vector<1x8x256xbf16> to vector<8x256xbf16>
    %c56_151 = arith.constant 56 : index
    %c0_152 = arith.constant 0 : index
    %209 = vector.load %arg9[%c56_151, %c0_152] : memref<72x512xbf16, #tpu.memory_space<vmem>>, vector<8x256xbf16>
    tpu.vector_store %arg9[%c56_151, %c0_152], %208 {strides = array<i32>} : memref<72x512xbf16, #tpu.memory_space<vmem>>, vector<8x256xbf16>,
    %c0_153 = arith.constant 0 : index
    %c0_154 = arith.constant 0 : index
    %c145_155 = arith.constant 145 : index
    %210 = vector.load %arg8[%c0_153, %c0_154, %c145_155] : memref<2x8x512xbf16, #tpu.memory_space<vmem>>, vector<1x8x256xbf16>
    %211 = vector.shape_cast %210 : vector<1x8x256xbf16> to vector<8x256xbf16>
    %212 = vector.shape_cast %169 : vector<1x256xi1> to vector<1x256xi1>
    %213 = vector.broadcast %212 : vector<1x256xi1> to vector<8x256xi1>
    %214 = arith.select %213, %170, %211 : vector<8x256xi1>, vector<8x256xbf16>
    %c64_156 = arith.constant 64 : index
    %c0_157 = arith.constant 0 : index
    %215 = vector.load %arg9[%c64_156, %c0_157] : memref<72x512xbf16, #tpu.memory_space<vmem>>, vector<8x256xbf16>
    tpu.vector_store %arg9[%c64_156, %c0_157], %214 {strides = array<i32>} : memref<72x512xbf16, #tpu.memory_space<vmem>>, vector<8x256xbf16>,
    %c1_158 = arith.constant 1 : index
    %c0_159 = arith.constant 0 : index
    %c111_160 = arith.constant 111 : index
    %216 = vector.load %arg8[%c1_158, %c0_159, %c111_160] : memref<2x8x512xbf16, #tpu.memory_space<vmem>>, vector<1x8x256xbf16>
    %217 = vector.shape_cast %216 : vector<1x8x256xbf16> to vector<8x256xbf16>
    %218 = vector.shape_cast %167 : vector<1x256xi1> to vector<1x256xi1>
    %219 = vector.broadcast %218 : vector<1x256xi1> to vector<8x256xi1>
    %220 = arith.select %219, %170, %217 : vector<8x256xi1>, vector<8x256xbf16>
    %c0_161 = arith.constant 0 : index
    %c256_162 = arith.constant 256 : index
    %221 = vector.load %arg9[%c0_161, %c256_162] : memref<72x512xbf16, #tpu.memory_space<vmem>>, vector<8x256xbf16>
    tpu.vector_store %arg9[%c0_161, %c256_162], %220 {strides = array<i32>} : memref<72x512xbf16, #tpu.memory_space<vmem>>, vector<8x256xbf16>,
    %c1_163 = arith.constant 1 : index
    %c0_164 = arith.constant 0 : index
    %c112_165 = arith.constant 112 : index
    %222 = vector.load %arg8[%c1_163, %c0_164, %c112_165] : memref<2x8x512xbf16, #tpu.memory_space<vmem>>, vector<1x8x256xbf16>
    %223 = vector.shape_cast %222 : vector<1x8x256xbf16> to vector<8x256xbf16>
    %c8_166 = arith.constant 8 : index
    %c256_167 = arith.constant 256 : index
    %224 = vector.load %arg9[%c8_166, %c256_167] : memref<72x512xbf16, #tpu.memory_space<vmem>>, vector<8x256xbf16>
    tpu.vector_store %arg9[%c8_166, %c256_167], %223 {strides = array<i32>} : memref<72x512xbf16, #tpu.memory_space<vmem>>, vector<8x256xbf16>,
    %c1_168 = arith.constant 1 : index
    %c0_169 = arith.constant 0 : index
    %c113_170 = arith.constant 113 : index
    %225 = vector.load %arg8[%c1_168, %c0_169, %c113_170] : memref<2x8x512xbf16, #tpu.memory_space<vmem>>, vector<1x8x256xbf16>
    %226 = vector.shape_cast %225 : vector<1x8x256xbf16> to vector<8x256xbf16>
    %227 = vector.shape_cast %169 : vector<1x256xi1> to vector<1x256xi1>
    %228 = vector.broadcast %227 : vector<1x256xi1> to vector<8x256xi1>
    %229 = arith.select %228, %170, %226 : vector<8x256xi1>, vector<8x256xbf16>
    %c16_171 = arith.constant 16 : index
    %c256_172 = arith.constant 256 : index
    %230 = vector.load %arg9[%c16_171, %c256_172] : memref<72x512xbf16, #tpu.memory_space<vmem>>, vector<8x256xbf16>
    tpu.vector_store %arg9[%c16_171, %c256_172], %229 {strides = array<i32>} : memref<72x512xbf16, #tpu.memory_space<vmem>>, vector<8x256xbf16>,
    %c1_173 = arith.constant 1 : index
    %c0_174 = arith.constant 0 : index
    %c127_175 = arith.constant 127 : index
    %231 = vector.load %arg8[%c1_173, %c0_174, %c127_175] : memref<2x8x512xbf16, #tpu.memory_space<vmem>>, vector<1x8x256xbf16>
    %232 = vector.shape_cast %231 : vector<1x8x256xbf16> to vector<8x256xbf16>
    %233 = vector.shape_cast %167 : vector<1x256xi1> to vector<1x256xi1>
    %234 = vector.broadcast %233 : vector<1x256xi1> to vector<8x256xi1>
    %235 = arith.select %234, %170, %232 : vector<8x256xi1>, vector<8x256xbf16>
    %c24_176 = arith.constant 24 : index
    %c256_177 = arith.constant 256 : index
    %236 = vector.load %arg9[%c24_176, %c256_177] : memref<72x512xbf16, #tpu.memory_space<vmem>>, vector<8x256xbf16>
    tpu.vector_store %arg9[%c24_176, %c256_177], %235 {strides = array<i32>} : memref<72x512xbf16, #tpu.memory_space<vmem>>, vector<8x256xbf16>,
    %c1_178 = arith.constant 1 : index
    %c0_179 = arith.constant 0 : index
    %c128_180 = arith.constant 128 : index
    %237 = vector.load %arg8[%c1_178, %c0_179, %c128_180] : memref<2x8x512xbf16, #tpu.memory_space<vmem>>, vector<1x8x256xbf16>
    %238 = vector.shape_cast %237 : vector<1x8x256xbf16> to vector<8x256xbf16>
    %c32_181 = arith.constant 32 : index
    %c256_182 = arith.constant 256 : index
    %239 = vector.load %arg9[%c32_181, %c256_182] : memref<72x512xbf16, #tpu.memory_space<vmem>>, vector<8x256xbf16>
    tpu.vector_store %arg9[%c32_181, %c256_182], %238 {strides = array<i32>} : memref<72x512xbf16, #tpu.memory_space<vmem>>, vector<8x256xbf16>,
    %c1_183 = arith.constant 1 : index
    %c0_184 = arith.constant 0 : index
    %c129_185 = arith.constant 129 : index
    %240 = vector.load %arg8[%c1_183, %c0_184, %c129_185] : memref<2x8x512xbf16, #tpu.memory_space<vmem>>, vector<1x8x256xbf16>
    %241 = vector.shape_cast %240 : vector<1x8x256xbf16> to vector<8x256xbf16>
    %242 = vector.shape_cast %169 : vector<1x256xi1> to vector<1x256xi1>
    %243 = vector.broadcast %242 : vector<1x256xi1> to vector<8x256xi1>
    %244 = arith.select %243, %170, %241 : vector<8x256xi1>, vector<8x256xbf16>
    %c40_186 = arith.constant 40 : index
    %c256_187 = arith.constant 256 : index
    %245 = vector.load %arg9[%c40_186, %c256_187] : memref<72x512xbf16, #tpu.memory_space<vmem>>, vector<8x256xbf16>
    tpu.vector_store %arg9[%c40_186, %c256_187], %244 {strides = array<i32>} : memref<72x512xbf16, #tpu.memory_space<vmem>>, vector<8x256xbf16>,
    %c1_188 = arith.constant 1 : index
    %c0_189 = arith.constant 0 : index
    %c143_190 = arith.constant 143 : index
    %246 = vector.load %arg8[%c1_188, %c0_189, %c143_190] : memref<2x8x512xbf16, #tpu.memory_space<vmem>>, vector<1x8x256xbf16>
    %247 = vector.shape_cast %246 : vector<1x8x256xbf16> to vector<8x256xbf16>
    %248 = vector.shape_cast %167 : vector<1x256xi1> to vector<1x256xi1>
    %249 = vector.broadcast %248 : vector<1x256xi1> to vector<8x256xi1>
    %250 = arith.select %249, %170, %247 : vector<8x256xi1>, vector<8x256xbf16>
    %c48_191 = arith.constant 48 : index
    %c256_192 = arith.constant 256 : index
    %251 = vector.load %arg9[%c48_191, %c256_192] : memref<72x512xbf16, #tpu.memory_space<vmem>>, vector<8x256xbf16>
    tpu.vector_store %arg9[%c48_191, %c256_192], %250 {strides = array<i32>} : memref<72x512xbf16, #tpu.memory_space<vmem>>, vector<8x256xbf16>,
    %c1_193 = arith.constant 1 : index
    %c0_194 = arith.constant 0 : index
    %c144_195 = arith.constant 144 : index
    %252 = vector.load %arg8[%c1_193, %c0_194, %c144_195] : memref<2x8x512xbf16, #tpu.memory_space<vmem>>, vector<1x8x256xbf16>
    %253 = vector.shape_cast %252 : vector<1x8x256xbf16> to vector<8x256xbf16>
    %c56_196 = arith.constant 56 : index
    %c256_197 = arith.constant 256 : index
    %254 = vector.load %arg9[%c56_196, %c256_197] : memref<72x512xbf16, #tpu.memory_space<vmem>>, vector<8x256xbf16>
    tpu.vector_store %arg9[%c56_196, %c256_197], %253 {strides = array<i32>} : memref<72x512xbf16, #tpu.memory_space<vmem>>, vector<8x256xbf16>,
    %c1_198 = arith.constant 1 : index
    %c0_199 = arith.constant 0 : index
    %c145_200 = arith.constant 145 : index
    %255 = vector.load %arg8[%c1_198, %c0_199, %c145_200] : memref<2x8x512xbf16, #tpu.memory_space<vmem>>, vector<1x8x256xbf16>
    %256 = vector.shape_cast %255 : vector<1x8x256xbf16> to vector<8x256xbf16>
    %257 = vector.shape_cast %169 : vector<1x256xi1> to vector<1x256xi1>
    %258 = vector.broadcast %257 : vector<1x256xi1> to vector<8x256xi1>
    %259 = arith.select %258, %170, %256 : vector<8x256xi1>, vector<8x256xbf16>
    %c64_201 = arith.constant 64 : index
    %c256_202 = arith.constant 256 : index
    %260 = vector.load %arg9[%c64_201, %c256_202] : memref<72x512xbf16, #tpu.memory_space<vmem>>, vector<8x256xbf16>
    tpu.vector_store %arg9[%c64_201, %c256_202], %259 {strides = array<i32>} : memref<72x512xbf16, #tpu.memory_space<vmem>>, vector<8x256xbf16>,
    %c0_203 = arith.constant 0 : index
    %c0_204 = arith.constant 0 : index
    %261 = vector.load %arg5[%c0_203, %c0_204] : memref<8x72xbf16, #tpu.memory_space<vmem>>, vector<8x72xbf16>
    %c0_205 = arith.constant 0 : index
    %c0_206 = arith.constant 0 : index
    %262 = vector.load %arg9[%c0_205, %c0_206] : memref<72x512xbf16, #tpu.memory_space<vmem>>, vector<72x512xbf16>
    %cst_207 = arith.constant dense<0.000000e+00> : vector<8x512xf32>
    %263 = tpu.matmul %261, %262, %cst_207 {dimension_numbers = #tpu.dot_dimension_numbers<[1], [0], [0], [1], [0, 0, 1, 1], [], []>} : vector<8x72xbf16>, vector<72x512xbf16>, vector<8x512xf32> -> vector<8x512xf32>
    %264 = vector.extract_strided_slice %263 {offsets = [0, 0], sizes = [4, 256], strides = [1, 1]} : vector<8x512xf32> to vector<4x256xf32>
    %265 = arith.truncf %264 : vector<4x256xf32> to vector<4x256xbf16>
    %c0_208 = arith.constant 0 : index
    %c0_209 = arith.constant 0 : index
    %c0_210 = arith.constant 0 : index
    %266 = vector.load %arg6[%c0_208, %c0_209, %c0_210] : memref<2x4x256xbf16, #tpu.memory_space<vmem>>, vector<1x4x256xbf16>
    %267 = vector.shape_cast %266 : vector<1x4x256xbf16> to vector<4x256xbf16>
    %268 = vector.shape_cast %265 : vector<4x256xbf16> to vector<1x4x256xbf16>
    tpu.vector_store %arg6[%c0_208, %c0_209, %c0_210], %268 {strides = array<i32>} : memref<2x4x256xbf16, #tpu.memory_space<vmem>>, vector<1x4x256xbf16>,
    %269 = vector.extract_strided_slice %263 {offsets = [0, 256], sizes = [4, 256], strides = [1, 1]} : vector<8x512xf32> to vector<4x256xf32>
    %270 = arith.truncf %269 : vector<4x256xf32> to vector<4x256xbf16>
    %c1_211 = arith.constant 1 : index
    %c0_212 = arith.constant 0 : index
    %c0_213 = arith.constant 0 : index
    %271 = vector.load %arg6[%c1_211, %c0_212, %c0_213] : memref<2x4x256xbf16, #tpu.memory_space<vmem>>, vector<1x4x256xbf16>
    %272 = vector.shape_cast %271 : vector<1x4x256xbf16> to vector<4x256xbf16>
    %273 = vector.shape_cast %270 : vector<4x256xbf16> to vector<1x4x256xbf16>
    tpu.vector_store %arg6[%c1_211, %c0_212, %c0_213], %273 {strides = array<i32>} : memref<2x4x256xbf16, #tpu.memory_space<vmem>>, vector<1x4x256xbf16>,
    %cst_214 = arith.constant 1.000000e+00 : f32
    %274 = vector.broadcast %cst_214 : f32 to vector<512x1xf32>
    %275 = arith.mulf %263, %263 : vector<8x512xf32>
    %276 = tpu.concatenate %263, %275 in 0 : vector<8x512xf32>, vector<8x512xf32> -> vector<16x512xf32>
    %c0_215 = arith.constant 0 : index
    %c0_216 = arith.constant 0 : index
    %277 = vector.load %arg7[%c0_215, %c0_216] : memref<16x1xf32, #tpu.memory_space<vmem>>, vector<16x1xf32>
    %cst_217 = arith.constant dense<0.000000e+00> : vector<16x1xf32>
    %278 = tpu.matmul %276, %274, %cst_217 {dimension_numbers = #tpu.dot_dimension_numbers<[1], [0], [0], [1], [0, 0, 1, 1], [], []>} : vector<16x512xf32>, vector<512x1xf32>, vector<16x1xf32> -> vector<16x1xf32>
    %279 = arith.addf %277, %278 : vector<16x1xf32>
    %c0_218 = arith.constant 0 : index
    %c0_219 = arith.constant 0 : index
    %280 = vector.load %arg7[%c0_218, %c0_219] : memref<16x1xf32, #tpu.memory_space<vmem>>, vector<16x1xf32>
    tpu.vector_store %arg7[%c0_218, %c0_219], %279 {strides = array<i32>} : memref<16x1xf32, #tpu.memory_space<vmem>>, vector<16x1xf32>,
    return
  }
  func.func @transform_0(%arg0: i32) -> (i32, i32, i32) {
    %c0_i32 = arith.constant 0 : i32
    %c0_i32_0 = arith.constant 0 : i32
    %c0_i32_1 = arith.constant 0 : i32
    return %arg0, %c0_i32, %c0_i32_0 : i32, i32, i32
  }
  func.func @transform_1(%arg0: i32) -> (i32, i32) {
    %c0_i32 = arith.constant 0 : i32
    %c0_i32_0 = arith.constant 0 : i32
    %c0_i32_1 = arith.constant 0 : i32
    return %c0_i32, %c0_i32_0 : i32, i32
  }
  func.func @transform_2(%arg0: i32) -> (i32, i32) {
    %c0_i32 = arith.constant 0 : i32
    %c0_i32_0 = arith.constant 0 : i32
    %c0_i32_1 = arith.constant 0 : i32
    return %c0_i32, %c0_i32_0 : i32, i32
  }
  func.func @transform_3(%arg0: i32) -> (i32, i32) {
    %c0_i32 = arith.constant 0 : i32
    %c0_i32_0 = arith.constant 0 : i32
    %c0_i32_1 = arith.constant 0 : i32
    return %c0_i32, %c0_i32_0 : i32, i32
  }
  func.func @transform_4(%arg0: i32) -> (i32, i32) {
    %c0_i32 = arith.constant 0 : i32
    %c0_i32_0 = arith.constant 0 : i32
    %c0_i32_1 = arith.constant 0 : i32
    return %c0_i32, %c0_i32_0 : i32, i32
  }
  func.func @transform_5(%arg0: i32) -> (i32, i32, i32) {
    %c0_i32 = arith.constant 0 : i32
    %c0_i32_0 = arith.constant 0 : i32
    %c0_i32_1 = arith.constant 0 : i32
    return %arg0, %c0_i32, %c0_i32_0 : i32, i32, i32
  }
  func.func @transform_6(%arg0: i32) -> (i32, i32) {
    %c0_i32 = arith.constant 0 : i32
    %c0_i32_0 = arith.constant 0 : i32
    %c0_i32_1 = arith.constant 0 : i32
    return %c0_i32, %c0_i32_0 : i32, i32
  }
}

</mosaic_0001>

<llo_original>
// kernel: residual_block_forward.5
$region0: #{residual_block_forward.5}
  #allocation0 [shape = 'u32[]', space=smem, size = 0x4, offset = 0x4, fixed_abs, tag = 'smem constant byte address 0x4 - core index']
  #allocation1 [shape = 'u32[144,128]{1,0:T(1,128)}', space=vmem, size = 0x12000, scoped, tag = 'internal scratch']
  %s0 = inlined_call_operand.vmem [shape: bf16[2,4,256], index: 0, kind: input, shape index: {}]
  %s1 = inlined_call_operand.vmem [shape: f32[2,4,256], index: 1, kind: input, shape index: {}]
  %s2 = inlined_call_operand.vmem [shape: f32[4,1], index: 2, kind: input, shape index: {}]
  %s3 = inlined_call_operand.vmem [shape: f32[4,1], index: 3, kind: input, shape index: {}]
  %s4 = inlined_call_operand.vmem [shape: f32[2,4,256], index: 4, kind: output, shape index: {}]
  %s5 = sld [smem:[#allocation0]]
  $region26: #{residual_block_forward.5} parent=0
    _
  %s7 = ssub.s32 1, %s5
  %s8 = scalar_select 0, %s7, %s5
  // Predicated region
  $region2: #{residual_block_forward.5} parent=0 // pred_check
    _
  $region3: #{residual_block_forward.5} parent=0 // pred_check_branch
    %10 = sbr.rel (0) target = $region5
  $region4: #{residual_block_forward.5} parent=0 // pred_region
    _
  $region5: #{residual_block_forward.5} parent=0 // pred_fallthru
    _
  // Predicated region
  $region6: #{residual_block_forward.5} parent=0 // pred_check
    _
  $region7: #{residual_block_forward.5} parent=0 // pred_check_branch
    %12 = sbr.rel (0) target = $region9
  $region8: #{residual_block_forward.5} parent=0 // pred_region
    _
  $region9: #{residual_block_forward.5} parent=0 // pred_fallthru
    _
  // Predicated region
  $region10: #{residual_block_forward.5} parent=0 // pred_check
    _
  $region11: #{residual_block_forward.5} parent=0 // pred_check_branch
    %14 = sbr.rel (0) target = $region13
  $region12: #{residual_block_forward.5} parent=0 // pred_region
    _
  $region13: #{residual_block_forward.5} parent=0 // pred_fallthru
    _
  // Predicated region
  $region14: #{residual_block_forward.5} parent=0 // pred_check
    _
  $region15: #{residual_block_forward.5} parent=0 // pred_check_branch
    %16 = sbr.rel (0) target = $region17
  $region16: #{residual_block_forward.5} parent=0 // pred_region
    _
  $region17: #{residual_block_forward.5} parent=0 // pred_fallthru
    _
  %v17 = vld [vmem:[%s0] sm:$0xf]
  %v18 = vld [vmem:[%s0 + $0x4] sm:$0xf]
  %v19 = vunpack.c.l.bf16 %v17
  %v20 = vunpack.c.l.bf16 %v18
  %v21 = vld [vmem:[%s2] sm:$0xf]
  %23 = vset.pattern.permute.xlu0 0
  %24 = vperm.xlu0 %23, %v21
  %v25 = vpop.permute.xlu0 %24
  %v27 = vunpack.c.l.s4 839922192
  %v28 = vunpack.c.0.s8 %v27
  %v29 = vlaneseq
  %v30 = vshrl.u32 %v29, 7
  %v31 = vsub.s32 %v28, %v30
  %v32 = vrot.slane %v25, %v31
  %v34 = vmul.f32 %v19, %v32
  %v35 = vmul.f32 %v20, %v32
  %v36 = vld [vmem:[%s3] sm:$0xf]
  %38 = vset.pattern.permute.xlu0 0
  %39 = vperm.xlu0 %38, %v36
  %v40 = vpop.permute.xlu0 %39
  %v42 = vunpack.c.l.s4 839922192
  %v43 = vunpack.c.0.s8 %v42
  %v44 = vlaneseq
  %v45 = vshrl.u32 %v44, 7
  %v46 = vsub.s32 %v43, %v45
  %v47 = vrot.slane %v40, %v46
  %v49 = vadd.f32 %v34, %v47
  %v50 = vadd.f32 %v35, %v47
  %v51 = vld [vmem:[%s1] sm:$0xff]
  %v52 = vld [vmem:[%s1 + $0x8] sm:$0xff]
  %v53 = vadd.f32 %v49, %v51
  %v54 = vadd.f32 %v50, %v52
  %v55 = vmax.f32 %v53, 0.0
  %v56 = vmax.f32 %v54, 0.0
  %57 = vst [vmem:[%s4] sm:$0xff] %v55
  %58 = vst [vmem:[%s4 + $0x8] sm:$0xff] %v56
  // Predicated region
  $region18: #{residual_block_forward.5} parent=0 // pred_check
    _
  $region19: #{residual_block_forward.5} parent=0 // pred_check_branch
    %60 = sbr.rel (0) target = $region21
  $region20: #{residual_block_forward.5} parent=0 // pred_region
    _
  $region21: #{residual_block_forward.5} parent=0 // pred_fallthru
    _
  // Predicated region
  $region22: #{residual_block_forward.5} parent=0 // pred_check
    _
  $region23: #{residual_block_forward.5} parent=0 // pred_check_branch
    %62 = sbr.rel (0) target = $region25
  $region24: #{residual_block_forward.5} parent=0 // pred_region
    _
  $region25: #{residual_block_forward.5} parent=0 // pred_fallthru
    _

// kernel: residual_block_forward.3
$region0: #{residual_block_forward.3}
  #allocation0 [shape = 'u32[]', space=smem, size = 0x4, offset = 0x4, fixed_abs, tag = 'smem constant byte address 0x4 - core index']
  #allocation1 [shape = 'u32[144,128]{1,0:T(1,128)}', space=vmem, size = 0x12000, scoped, tag = 'internal scratch']
  #allocation2 [shape = 'bf16[2,8,512]{2,1,0:T(8,128)(2,1)}', space=vmem, size = 0x4000, scoped, tag = 'scratch operand']
  #allocation3 [shape = 'bf16[72,512]{1,0:T(8,128)(2,1)}', space=vmem, size = 0x12000, scoped, tag = 'scratch operand']
  %s0 = inlined_call_operand.vmem [shape: f32[2,4,256], index: 0, kind: input, shape index: {}]
  %s1 = inlined_call_operand.vmem [shape: bf16[8,72], index: 1, kind: input, shape index: {}]
  %s2 = inlined_call_operand.vmem [shape: f32[16,1], index: 2, kind: output, shape index: {}]
  %s3 = sld [smem:[#allocation0]]
  $region22: #{residual_block_forward.3} parent=0
    _
  %s5 = ssub.s32 1, %s3
  %s6 = scalar_select 0, %s5, %s3
  // Predicated region
  $region2: #{residual_block_forward.3} parent=0 // pred_check
    _
  $region3: #{residual_block_forward.3} parent=0 // pred_check_branch
    %8 = sbr.rel (0) target = $region5
  $region4: #{residual_block_forward.3} parent=0 // pred_region
    _
  $region5: #{residual_block_forward.3} parent=0 // pred_fallthru
    _
  // Predicated region
  $region6: #{residual_block_forward.3} parent=0 // pred_check
    _
  $region7: #{residual_block_forward.3} parent=0 // pred_check_branch
    %10 = sbr.rel (0) target = $region9
  $region8: #{residual_block_forward.3} parent=0 // pred_region
    _
  $region9: #{residual_block_forward.3} parent=0 // pred_fallthru
    _
  %p14 = scmp.eq.s32.totalorder 0, 0
  // Predicated region
  $region10: #{residual_block_forward.3} parent=0 // pred_check
    %p15 = pneg %p14
  $region11: #{residual_block_forward.3} parent=0 // pred_check_branch
    %17 = sbr.rel (%p15) target = $region13
  $region12: #{residual_block_forward.3} parent=0 // pred_region
    %vm18 = vcmask 7168
    %19 = vst.msk [vmem:[%s2] sm:$0xff] %vm18, 0.0
    %20 = vst.msk [vmem:[%s2 + $0x8] sm:$0xff] %vm18, 0.0
    %21 = vst [vmem:[#allocation2] sm:$0xff] 0
    %22 = vst [vmem:[#allocation2 + $0x8] sm:$0xff] 0
    %23 = vst [vmem:[#allocation2 + $0x10] sm:$0xff] 0
    %24 = vst [vmem:[#allocation2 + $0x18] sm:$0xff] 0
  $region13: #{residual_block_forward.3} parent=0 // pred_fallthru
    _
  %v25 = vld [vmem:[%s0] sm:$0xff]
  %v27 = vcombine.high %v25, %v25
  %v29 = vpack.c.bf16 %v25, %v25
  %v30 = vpack.c.bf16 %v27, %v27
  %v33 = vunpack.c.l.b16 %v29
  %v34 = vunpack.c.l.b16 %v30
  %v35 = vpack.c.b16 %v34, %v33
  %37 = vst [vmem:[#allocation2 + $0x4] sm:$0x33] %v35
  %s38 = scalar_lea.vmem %s0, 8
  %v39 = vld [vmem:[%s38] sm:$0xff]
  %v41 = vcombine.high %v39, %v39
  %v43 = vpack.c.bf16 %v39, %v39
  %v44 = vpack.c.bf16 %v41, %v41
  %v47 = vunpack.c.l.b16 %v43
  %v48 = vunpack.c.l.b16 %v44
  %v49 = vpack.c.b16 %v48, %v47
  %s51 = scalar_lea.vmem [#allocation2], 16
  %52 = vst [vmem:[%s51 + $0x4] sm:$0x33] %v49
  %v53 = vlaneseq
  %v54 = vand.u32 %v53, 127
  %v55 = vadd.s32 %v54, 128
  %vm56 = vcmp.lt.s32.totalorder %v54, 0
  %v57 = vsub.s32 0, %v54
  %v58 = vsel %vm56, %v57, %v54
  %v59 = vshrl.u32 %v58, 4
  %v60 = vand.u32 %v58, 15
  %v61 = vsub.s32 0, %v60
  %v62 = vsel %vm56, %v61, %v60
  %vm63 = vcmp.lt.s32.totalorder %v55, 0
  %v64 = vsub.s32 0, %v55
  %v65 = vsel %vm63, %v64, %v55
  %v66 = vshrl.u32 %v65, 4
  %v67 = vand.u32 %v65, 15
  %v68 = vsub.s32 0, %v67
  %v69 = vsel %vm63, %v68, %v67
  %vm70 = vcmp.ne.s32.totalorder %v62, 0
  %vm71 = vcmp.ne.s32.totalorder %v69, 0
  %vm72 = vcmp.lt.s32.totalorder %v62, 0
  %vm73 = vcmp.lt.s32.totalorder %v69, 0
  %vm74 = vmand %vm72, %vm70
  %vm75 = vmand %vm73, %vm71
  %v76 = vadd.s32 %v62, 16
  %v77 = vadd.s32 %v69, 16
  %v78 = vsel %vm74, %v76, %v62
  %v79 = vsel %vm75, %v77, %v69
  %vm80 = vcmp.eq.s32.totalorder %v78, 0
  %vm81 = vcmp.eq.s32.totalorder %v79, 0
  %vm82 = vcmp.eq.s32.totalorder %v78, 15
  %vm83 = vcmp.eq.s32.totalorder %v79, 15
  %v84 = vld [vmem:[#allocation2] sm:$0xff]
  %v85 = vld [vmem:[#allocation2 + $0x8] sm:$0xf]
  %v86 = vsel %vm80, 1, 0
  %v87 = vsel %vm81, 1, 0
  %vm88 = vcmp.eq.s32.totalorder %v86, 1
  %vm89 = vcmp.eq.s32.totalorder %v87, 1
  %vm90 = vmpackc.low %vm89, %vm88
  %v91 = vsel %vm90, 65537, 0
  %92 = vrot.lane.b32.xlu0 %v91, 111
  %v93 = vpop.permute.xlu0 %92
  %v94 = vrot.slane %v93, 4
  %vm95 = vcmask 908288
  %v96 = vsel %vm95, %v94, %v93
  %vm97 = vcmp.ne.s16.totalorder %v96, 0
  %vm98 = vcmp.ne.s16.totalorder %v94, 0
  %v99 = vsel %vm97, 0, %v84
  %v100 = vsel %vm98, 0, %v85
  %103 = vrot.lane.b32.xlu0 %v99, 17
  %v104 = vpop.permute.xlu0 %103
  %105 = vrot.lane.b32.xlu0 %v100, 17
  %v106 = vpop.permute.xlu0 %105
  %v107 = vrot.slane %v104, 4
  %v108 = vrot.slane %v106, 4
  %vm109 = vcmask 1043456
  %v110 = vsel %vm109, %v107, %v108
  %vm111 = vcmask 138240
  %v112 = vsel %vm111, %v104, %v110
  %114 = vst [vmem:[#allocation3] sm:$0xff] %v112
  %v115 = vld [vmem:[#allocation2] sm:$0xff]
  %v116 = vld [vmem:[#allocation2 + $0x8] sm:$0xf]
  %119 = vrot.lane.b32.xlu0 %v115, 16
  %v120 = vpop.permute.xlu0 %119
  %121 = vrot.lane.b32.xlu0 %v116, 16
  %v122 = vpop.permute.xlu0 %121
  %v123 = vrot.slane %v120, 4
  %v124 = vrot.slane %v122, 4
  %v125 = vsel %vm109, %v123, %v124
  %vm126 = vcmask 130048
  %v127 = vsel %vm126, %v120, %v125
  %129 = vst [vmem:[#allocation3 + $0x10] sm:$0xff] %v127
  %v130 = vld [vmem:[#allocation2] sm:$0xff]
  %v131 = vld [vmem:[#allocation2 + $0x8] sm:$0xf]
  %v132 = vsel %vm82, 1, 0
  %v133 = vsel %vm83, 1, 0
  %vm134 = vcmp.eq.s32.totalorder %v132, 1
  %vm135 = vcmp.eq.s32.totalorder %v133, 1
  %vm136 = vmpackc.low %vm135, %vm134
  %v137 = vsel %vm136, 65537, 0
  %138 = vrot.lane.b32.xlu0 %v137, 113
  %v139 = vpop.permute.xlu0 %138
  %v140 = vrot.slane %v139, 4
  %vm141 = vcmask 924672
  %v142 = vsel %vm141, %v140, %v139
  %vm143 = vcmp.ne.s16.totalorder %v142, 0
  %vm144 = vcmp.ne.s16.totalorder %v140, 0
  %v145 = vsel %vm143, 0, %v130
  %v146 = vsel %vm144, 0, %v131
  %149 = vrot.lane.b32.xlu0 %v145, 15
  %v150 = vpop.permute.xlu0 %149
  %151 = vrot.lane.b32.xlu0 %v146, 15
  %v152 = vpop.permute.xlu0 %151
  %v153 = vrot.slane %v150, 4
  %v154 = vrot.slane %v152, 4
  %v155 = vsel %vm109, %v153, %v154
  %vm156 = vcmask 121856
  %v157 = vsel %vm156, %v150, %v155
  %159 = vst [vmem:[#allocation3 + $0x20] sm:$0xff] %v157
  %v160 = vld [vmem:[#allocation2] sm:$0xff]
  %v161 = vld [vmem:[#allocation2 + $0x8] sm:$0xf]
  %162 = vrot.lane.b32.xlu0 %v91, 127
  %v163 = vpop.permute.xlu0 %162
  %v164 = vrot.slane %v163, 4
  %vm165 = vcmask 1039360
  %v166 = vsel %vm165, %v164, %v163
  %vm167 = vcmp.ne.s16.totalorder %v166, 0
  %vm168 = vcmp.ne.s16.totalorder %v164, 0
  %v169 = vsel %vm167, 0, %v160
  %v170 = vsel %vm168, 0, %v161
  %173 = vrot.lane.b32.xlu0 %v169, 1
  %v174 = vpop.permute.xlu0 %173
  %175 = vrot.lane.b32.xlu0 %v170, 1
  %v176 = vpop.permute.xlu0 %175
  %v177 = vrot.slane %v174, 4
  %v178 = vrot.slane %v176, 4
  %v179 = vsel %vm109, %v177, %v178
  %vm180 = vcmask 7168
  %v181 = vsel %vm180, %v174, %v179
  %183 = vst [vmem:[#allocation3 + $0x30] sm:$0xff] %v181
  %v184 = vld [vmem:[#allocation2 + $0x4] sm:$0xff]
  %185 = vst [vmem:[#allocation3 + $0x40] sm:$0xff] %v184
  %v186 = vld [vmem:[#allocation2 + $0x4] sm:$0xff]
  %v187 = vld [vmem:[#allocation2 + $0xc] sm:$0xf]
  %188 = vrot.lane.b32.xlu0 %v137, 1
  %v189 = vpop.permute.xlu0 %188
  %v190 = vrot.slane %v189, 4
  %v191 = vsel %vm180, %v190, %v189
  %vm192 = vcmp.ne.s16.totalorder %v191, 0
  %vm193 = vcmp.ne.s16.totalorder %v190, 0
  %v194 = vsel %vm192, 0, %v186
  %v195 = vsel %vm193, 0, %v187
  %198 = vrot.lane.b32.xlu0 %v194, 127
  %v199 = vpop.permute.xlu0 %198
  %200 = vrot.lane.b32.xlu0 %v195, 127
  %v201 = vpop.permute.xlu0 %200
  %v202 = vrot.slane %v199, 4
  %v203 = vrot.slane %v201, 4
  %v204 = vsel %vm109, %v202, %v203
  %v205 = vsel %vm165, %v199, %v204
  %207 = vst [vmem:[#allocation3 + $0x50] sm:$0xff] %v205
  %v208 = vld [vmem:[#allocation2 + $0x4] sm:$0xff]
  %v209 = vld [vmem:[#allocation2 + $0xc] sm:$0xf]
  %210 = vrot.lane.b32.xlu0 %v91, 15
  %v211 = vpop.permute.xlu0 %210
  %v212 = vrot.slane %v211, 4
  %v213 = vsel %vm156, %v212, %v211
  %vm214 = vcmp.ne.s16.totalorder %v213, 0
  %vm215 = vcmp.ne.s16.totalorder %v212, 0
  %v216 = vsel %vm214, 0, %v208
  %v217 = vsel %vm215, 0, %v209
  %220 = vrot.lane.b32.xlu0 %v216, 113
  %v221 = vpop.permute.xlu0 %220
  %222 = vrot.lane.b32.xlu0 %v217, 113
  %v223 = vpop.permute.xlu0 %222
  %v224 = vrot.slane %v221, 4
  %v225 = vrot.slane %v223, 4
  %v226 = vsel %vm109, %v224, %v225
  %v227 = vsel %vm141, %v221, %v226
  %229 = vst [vmem:[#allocation3 + $0x60] sm:$0xff] %v227
  %v230 = vld [vmem:[#allocation2 + $0x4] sm:$0xff]
  %v231 = vld [vmem:[#allocation2 + $0xc] sm:$0xf]
  %234 = vrot.lane.b32.xlu0 %v230, 112
  %v235 = vpop.permute.xlu0 %234
  %236 = vrot.lane.b32.xlu0 %v231, 112
  %v237 = vpop.permute.xlu0 %236
  %v238 = vrot.slane %v235, 4
  %v239 = vrot.slane %v237, 4
  %v240 = vsel %vm109, %v238, %v239
  %vm241 = vcmask 916480
  %v242 = vsel %vm241, %v235, %v240
  %244 = vst [vmem:[#allocation3 + $0x70] sm:$0xff] %v242
  %v245 = vld [vmem:[#allocation2 + $0x4] sm:$0xff]
  %v246 = vld [vmem:[#allocation2 + $0xc] sm:$0xf]
  %247 = vrot.lane.b32.xlu0 %v137, 17
  %v248 = vpop.permute.xlu0 %247
  %v249 = vrot.slane %v248, 4
  %v250 = vsel %vm111, %v249, %v248
  %vm251 = vcmp.ne.s16.totalorder %v250, 0
  %vm252 = vcmp.ne.s16.totalorder %v249, 0
  %v253 = vsel %vm251, 0, %v245
  %v254 = vsel %vm252, 0, %v246
  %257 = vrot.lane.b32.xlu0 %v253, 111
  %v258 = vpop.permute.xlu0 %257
  %259 = vrot.lane.b32.xlu0 %v254, 111
  %v260 = vpop.permute.xlu0 %259
  %v261 = vrot.slane %v258, 4
  %v262 = vrot.slane %v260, 4
  %v263 = vsel %vm109, %v261, %v262
  %v264 = vsel %vm95, %v258, %v263
  %266 = vst [vmem:[#allocation3 + $0x80] sm:$0xff] %v264
  %v267 = vld [vmem:[%s51] sm:$0xff]
  %v268 = vld [vmem:[%s51 + $0x8] sm:$0xf]
  %v269 = vsel %vm97, 0, %v267
  %v270 = vsel %vm98, 0, %v268
  %273 = vrot.lane.b32.xlu0 %v269, 17
  %v274 = vpop.permute.xlu0 %273
  %275 = vrot.lane.b32.xlu0 %v270, 17
  %v276 = vpop.permute.xlu0 %275
  %v277 = vrot.slane %v274, 4
  %v278 = vrot.slane %v276, 4
  %v279 = vsel %vm109, %v277, %v278
  %v280 = vsel %vm111, %v274, %v279
  %282 = vst [vmem:[#allocation3 + $0x8] sm:$0xff] %v280
  %v283 = vld [vmem:[%s51] sm:$0xff]
  %v284 = vld [vmem:[%s51 + $0x8] sm:$0xf]
  %287 = vrot.lane.b32.xlu0 %v283, 16
  %v288 = vpop.permute.xlu0 %287
  %289 = vrot.lane.b32.xlu0 %v284, 16
  %v290 = vpop.permute.xlu0 %289
  %v291 = vrot.slane %v288, 4
  %v292 = vrot.slane %v290, 4
  %v293 = vsel %vm109, %v291, %v292
  %v294 = vsel %vm126, %v288, %v293
  %296 = vst [vmem:[#allocation3 + $0x18] sm:$0xff] %v294
  %v297 = vld [vmem:[%s51] sm:$0xff]
  %v298 = vld [vmem:[%s51 + $0x8] sm:$0xf]
  %v299 = vsel %vm143, 0, %v297
  %v300 = vsel %vm144, 0, %v298
  %303 = vrot.lane.b32.xlu0 %v299, 15
  %v304 = vpop.permute.xlu0 %303
  %305 = vrot.lane.b32.xlu0 %v300, 15
  %v306 = vpop.permute.xlu0 %305
  %v307 = vrot.slane %v304, 4
  %v308 = vrot.slane %v306, 4
  %v309 = vsel %vm109, %v307, %v308
  %v310 = vsel %vm156, %v304, %v309
  %312 = vst [vmem:[#allocation3 + $0x28] sm:$0xff] %v310
  %v313 = vld [vmem:[%s51] sm:$0xff]
  %v314 = vld [vmem:[%s51 + $0x8] sm:$0xf]
  %v315 = vsel %vm167, 0, %v313
  %v316 = vsel %vm168, 0, %v314
  %319 = vrot.lane.b32.xlu0 %v315, 1
  %v320 = vpop.permute.xlu0 %319
  %321 = vrot.lane.b32.xlu0 %v316, 1
  %v322 = vpop.permute.xlu0 %321
  %v323 = vrot.slane %v320, 4
  %v324 = vrot.slane %v322, 4
  %v325 = vsel %vm109, %v323, %v324
  %v326 = vsel %vm180, %v320, %v325
  %328 = vst [vmem:[#allocation3 + $0x38] sm:$0xff] %v326
  %v329 = vld [vmem:[%s51 + $0x4] sm:$0xff]
  %330 = vst [vmem:[#allocation3 + $0x48] sm:$0xff] %v329
  %v331 = vld [vmem:[%s51 + $0x4] sm:$0xff]
  %v332 = vld [vmem:[%s51 + $0xc] sm:$0xf]
  %v333 = vsel %vm192, 0, %v331
  %v334 = vsel %vm193, 0, %v332
  %337 = vrot.lane.b32.xlu0 %v333, 127
  %v338 = vpop.permute.xlu0 %337
  %339 = vrot.lane.b32.xlu0 %v334, 127
  %v340 = vpop.permute.xlu0 %339
  %v341 = vrot.slane %v338, 4
  %v342 = vrot.slane %v340, 4
  %v343 = vsel %vm109, %v341, %v342
  %v344 = vsel %vm165, %v338, %v343
  %346 = vst [vmem:[#allocation3 + $0x58] sm:$0xff] %v344
  %v347 = vld [vmem:[%s51 + $0x4] sm:$0xff]
  %v348 = vld [vmem:[%s51 + $0xc] sm:$0xf]
  %v349 = vsel %vm214, 0, %v347
  %v350 = vsel %vm215, 0, %v348
  %353 = vrot.lane.b32.xlu0 %v349, 113
  %v354 = vpop.permute.xlu0 %353
  %355 = vrot.lane.b32.xlu0 %v350, 113
  %v356 = vpop.permute.xlu0 %355
  %v357 = vrot.slane %v354, 4
  %v358 = vrot.slane %v356, 4
  %v359 = vsel %vm109, %v357, %v358
  %v360 = vsel %vm141, %v354, %v359
  %362 = vst [vmem:[#allocation3 + $0x68] sm:$0xff] %v360
  %v363 = vld [vmem:[%s51 + $0x4] sm:$0xff]
  %v364 = vld [vmem:[%s51 + $0xc] sm:$0xf]
  %367 = vrot.lane.b32.xlu0 %v363, 112
  %v368 = vpop.permute.xlu0 %367
  %369 = vrot.lane.b32.xlu0 %v364, 112
  %v370 = vpop.permute.xlu0 %369
  %v371 = vrot.slane %v368, 4
  %v372 = vrot.slane %v370, 4
  %v373 = vsel %vm109, %v371, %v372
  %v374 = vsel %vm241, %v368, %v373
  %376 = vst [vmem:[#allocation3 + $0x78] sm:$0xff] %v374
  %v377 = vld [vmem:[%s51 + $0x4] sm:$0xff]
  %v378 = vld [vmem:[%s51 + $0xc] sm:$0xf]
  %v379 = vsel %vm251, 0, %v377
  %v380 = vsel %vm252, 0, %v378
  %383 = vrot.lane.b32.xlu0 %v379, 111
  %v384 = vpop.permute.xlu0 %383
  %385 = vrot.lane.b32.xlu0 %v380, 111
  %v386 = vpop.permute.xlu0 %385
  %v387 = vrot.slane %v384, 4
  %v388 = vrot.slane %v386, 4
  %v389 = vsel %vm109, %v387, %v388
  %v390 = vsel %vm95, %v384, %v389
  %392 = vst [vmem:[#allocation3 + $0x88] sm:$0xff] %v390
  %v393 = vld [vmem:[%s1] sm:$0xf]
  %v394 = vld [vmem:[#allocation3] sm:$0xff]
  %v395 = vld [vmem:[#allocation3 + $0x8] sm:$0xff]
  %v396 = vld [vmem:[#allocation3 + $0x10] sm:$0xff]
  %v397 = vld [vmem:[#allocation3 + $0x18] sm:$0xff]
  %v398 = vld [vmem:[#allocation3 + $0x20] sm:$0xff]
  %v399 = vld [vmem:[#allocation3 + $0x28] sm:$0xff]
  %v400 = vld [vmem:[#allocation3 + $0x30] sm:$0xff]
  %v401 = vld [vmem:[#allocation3 + $0x38] sm:$0xff]
  %v402 = vld [vmem:[#allocation3 + $0x40] sm:$0xff]
  %v403 = vld [vmem:[#allocation3 + $0x48] sm:$0xff]
  %v404 = vld [vmem:[#allocation3 + $0x50] sm:$0xff]
  %v405 = vld [vmem:[#allocation3 + $0x58] sm:$0xff]
  %v406 = vld [vmem:[#allocation3 + $0x60] sm:$0xff]
  %v407 = vld [vmem:[#allocation3 + $0x68] sm:$0xff]
  %v408 = vld [vmem:[#allocation3 + $0x70] sm:$0xff]
  %v409 = vld [vmem:[#allocation3 + $0x78] sm:$0xff]
  %v410 = vld [vmem:[#allocation3 + $0x80] sm:$0xff]
  %v411 = vld [vmem:[#allocation3 + $0x88] sm:$0xff]
  %v430 = vunpack.c.l.b16 %v394
  %v431 = vunpack.c.h.b16 %v394
  %v432 = vunpack.c.l.b16 %v395
  %v433 = vunpack.c.h.b16 %v395
  %v434 = vunpack.c.l.b16 %v396
  %v435 = vunpack.c.h.b16 %v396
  %v436 = vunpack.c.l.b16 %v397
  %v437 = vunpack.c.h.b16 %v397
  %v438 = vunpack.c.l.b16 %v398
  %v439 = vunpack.c.h.b16 %v398
  %v440 = vunpack.c.l.b16 %v399
  %v441 = vunpack.c.h.b16 %v399
  %v442 = vunpack.c.l.b16 %v400
  %v443 = vunpack.c.h.b16 %v400
  %v444 = vunpack.c.l.b16 %v401
  %v445 = vunpack.c.h.b16 %v401
  %v446 = vunpack.c.l.b16 %v402
  %v447 = vunpack.c.h.b16 %v402
  %v448 = vunpack.c.l.b16 %v403
  %v449 = vunpack.c.h.b16 %v403
  %v450 = vunpack.c.l.b16 %v404
  %v451 = vunpack.c.h.b16 %v404
  %v452 = vunpack.c.l.b16 %v405
  %v453 = vunpack.c.h.b16 %v405
  %v454 = vunpack.c.l.b16 %v406
  %v455 = vunpack.c.h.b16 %v406
  %v456 = vunpack.c.l.b16 %v407
  %v457 = vunpack.c.h.b16 %v407
  %v458 = vunpack.c.l.b16 %v408
  %v459 = vunpack.c.h.b16 %v408
  %v460 = vunpack.c.l.b16 %v409
  %v461 = vunpack.c.h.b16 %v409
  %v462 = vunpack.c.l.b16 %v410
  %v463 = vunpack.c.h.b16 %v410
  %v464 = vunpack.c.l.b16 %v411
  %v465 = vunpack.c.h.b16 %v411
  %v466 = vpack.c.b16 %v434, %v430
  %v467 = vpack.c.b16 %v435, %v431
  %v468 = vpack.c.b16 %v436, %v432
  %v469 = vpack.c.b16 %v437, %v433
  %v470 = vpack.c.b16 %v442, %v438
  %v471 = vpack.c.b16 %v443, %v439
  %v472 = vpack.c.b16 %v444, %v440
  %v473 = vpack.c.b16 %v445, %v441
  %v474 = vpack.c.b16 %v450, %v446
  %v475 = vpack.c.b16 %v451, %v447
  %v476 = vpack.c.b16 %v452, %v448
  %v477 = vpack.c.b16 %v453, %v449
  %v478 = vpack.c.b16 %v458, %v454
  %v479 = vpack.c.b16 %v459, %v455
  %v480 = vpack.c.b16 %v460, %v456
  %v481 = vpack.c.b16 %v461, %v457
  %v482 = vpack.c.b16 %v462, %v462
  %v483 = vpack.c.b16 %v463, %v463
  %v484 = vpack.c.b16 %v464, %v464
  %v485 = vpack.c.b16 %v465, %v465
  %vm502 = vcmask 588800
  %v504 = vsel %vm502, %v393, 0
  %vm506 = vcmask 1043456
  %v508 = vsel %vm506, %v482, 0
  %v511 = vsel %vm506, %v483, 0
  %v514 = vsel %vm506, %v484, 0
  %v517 = vsel %vm506, %v485, 0
  %519 = vmatprep.subr.bf16.mxu0 0
  %520 = vmatpush1.bf16.msra.mxu0 0
  %521 = vmatprep.subr.bf16.mxu0 0
  %522 = vmatpush1.bf16.msra.mxu0 0
  %523 = vmatprep.subr.bf16.mxu0 0
  %524 = vmatpush1.bf16.msra.mxu0 0
  %525 = vmatprep.subr.bf16.mxu0 %v511
  %526 = vmatpush1.bf16.msra.mxu0 %v508
  %527 = vmatprep.subr.bf16.mxu0 %v479
  %528 = vmatpush1.bf16.msra.mxu0 %v478
  %529 = vmatprep.subr.bf16.mxu0 %v475
  %530 = vmatpush1.bf16.msra.mxu0 %v474
  %531 = vmatprep.subr.bf16.mxu0 %v471
  %532 = vmatpush1.bf16.msra.mxu0 %v470
  %533 = vmatprep.subr.bf16.mxu0 %v467
  %534 = vmatpush1.bf16.msra.mxu0 %v466
  %535 = vmatprep.subr.bf16.mxu0 0
  %536 = vmatpush2.bf16.msra.mxu0 0
  %537 = vmatprep.subr.bf16.mxu0 0
  %538 = vmatpush2.bf16.msra.mxu0 0
  %539 = vmatprep.subr.bf16.mxu0 0
  %540 = vmatpush2.bf16.msra.mxu0 0
  %541 = vmatprep.subr.bf16.mxu0 0
  %542 = vmatpush2.bf16.msra.mxu0 0
  %543 = vmatprep.subr.bf16.mxu0 0
  %544 = vmatpush2.bf16.msra.mxu0 0
  %545 = vmatprep.subr.bf16.mxu0 0
  %546 = vmatpush2.bf16.msra.mxu0 0
  %547 = vmatprep.subr.bf16.mxu0 0
  %548 = vmatpush2.bf16.msra.mxu0 0
  %549 = vmatprep.subr.bf16.mxu0 0
  %550 = vmatpush2.bf16.msra.mxu0 0
  %551 = vmatprep.mubr.bf16.mxu0 0
  %552 = vmatmul.mubr.bf16.gmra.mxu0 %v504
  %v553 = vpop.f32.mrf.mxu0
  %v554 = vadd.f32 0.0, %v553
  %v555 = vpop.f32.mrf.mxu0
  %v556 = vadd.f32 0.0, %v555
  %v557 = vpop.f32.mrf.mxu0
  %v558 = vpop.f32.mrf.mxu0
  %559 = vdwg.mxu0
  %560 = vmatprep.subr.bf16.mxu0 0
  %561 = vmatpush1.bf16.msra.mxu0 0
  %562 = vmatprep.subr.bf16.mxu0 0
  %563 = vmatpush1.bf16.msra.mxu0 0
  %564 = vmatprep.subr.bf16.mxu0 0
  %565 = vmatpush1.bf16.msra.mxu0 0
  %566 = vmatprep.subr.bf16.mxu0 %v517
  %567 = vmatpush1.bf16.msra.mxu0 %v514
  %568 = vmatprep.subr.bf16.mxu0 %v481
  %569 = vmatpush1.bf16.msra.mxu0 %v480
  %570 = vmatprep.subr.bf16.mxu0 %v477
  %571 = vmatpush1.bf16.msra.mxu0 %v476
  %572 = vmatprep.subr.bf16.mxu0 %v473
  %573 = vmatpush1.bf16.msra.mxu0 %v472
  %574 = vmatprep.subr.bf16.mxu0 %v469
  %575 = vmatpush1.bf16.msra.mxu0 %v468
  %576 = vmatprep.subr.bf16.mxu0 0
  %577 = vmatpush2.bf16.msra.mxu0 0
  %578 = vmatprep.subr.bf16.mxu0 0
  %579 = vmatpush2.bf16.msra.mxu0 0
  %580 = vmatprep.subr.bf16.mxu0 0
  %581 = vmatpush2.bf16.msra.mxu0 0
  %582 = vmatprep.subr.bf16.mxu0 0
  %583 = vmatpush2.bf16.msra.mxu0 0
  %584 = vmatprep.subr.bf16.mxu0 0
  %585 = vmatpush2.bf16.msra.mxu0 0
  %586 = vmatprep.subr.bf16.mxu0 0
  %587 = vmatpush2.bf16.msra.mxu0 0
  %588 = vmatprep.subr.bf16.mxu0 0
  %589 = vmatpush2.bf16.msra.mxu0 0
  %590 = vmatprep.subr.bf16.mxu0 0
  %591 = vmatpush2.bf16.msra.mxu0 0
  %592 = vmatprep.mubr.bf16.mxu0 0
  %593 = vmatmul.mubr.bf16.gmra.mxu0 %v504
  %v594 = vpop.f32.mrf.mxu0
  %v595 = vadd.f32 0.0, %v594
  %v596 = vpop.f32.mrf.mxu0
  %v597 = vadd.f32 0.0, %v596
  %v598 = vpop.f32.mrf.mxu0
  %v599 = vpop.f32.mrf.mxu0
  %600 = vdwg.mxu0
  %v601 = vmul.f32 %v554, %v554
  %v602 = vmul.f32 %v556, %v556
  %v603 = vmul.f32 %v595, %v595
  %v604 = vmul.f32 %v597, %v597
  %v605 = vld [vmem:[%s2] sm:$0xff]
  %v606 = vld [vmem:[%s2 + $0x8] sm:$0xff]
  %607 = vmatprep.subr.mxu0 0.0
  %608 = vmatpush1.msra.mxu0 1.0
  %609 = vmatprep.subr.mxu0 0.0
  %610 = vmatpush1.msra.mxu0 1.0
  %611 = vmatprep.subr.mxu0 0.0
  %612 = vmatpush1.msra.mxu0 1.0
  %613 = vmatprep.subr.mxu0 0.0
  %614 = vmatpush1.msra.mxu0 1.0
  %615 = vmatprep.subr.mxu0 0.0
  %616 = vmatpush1.msra.mxu0 1.0
  %617 = vmatprep.subr.mxu0 0.0
  %618 = vmatpush1.msra.mxu0 1.0
  %619 = vmatprep.subr.mxu0 0.0
  %620 = vmatpush1.msra.mxu0 1.0
  %621 = vmatprep.subr.mxu0 0.0
  %622 = vmatpush1.msra.mxu0 1.0
  %623 = vmatprep.subr.mxu0 0.0
  %624 = vmatpush1.msra.mxu0 1.0
  %625 = vmatprep.subr.mxu0 0.0
  %626 = vmatpush1.msra.mxu0 1.0
  %627 = vmatprep.subr.mxu0 0.0
  %628 = vmatpush1.msra.mxu0 1.0
  %629 = vmatprep.subr.mxu0 0.0
  %630 = vmatpush1.msra.mxu0 1.0
  %631 = vmatprep.subr.mxu0 0.0
  %632 = vmatpush1.msra.mxu0 1.0
  %633 = vmatprep.subr.mxu0 0.0
  %634 = vmatpush1.msra.mxu0 1.0
  %635 = vmatprep.subr.mxu0 0.0
  %636 = vmatpush1.msra.mxu0 1.0
  %637 = vmatprep.subr.mxu0 0.0
  %638 = vmatpush1.msra.mxu0 1.0
  %639 = vmatprep.subr.mxu0 0.0
  %640 = vmatpush2.msra.mxu0 1.0
  %641 = vmatprep.subr.mxu0 0.0
  %642 = vmatpush2.msra.mxu0 1.0
  %643 = vmatprep.subr.mxu0 0.0
  %644 = vmatpush2.msra.mxu0 1.0
  %645 = vmatprep.subr.mxu0 0.0
  %646 = vmatpush2.msra.mxu0 1.0
  %647 = vmatprep.subr.mxu0 0.0
  %648 = vmatpush2.msra.mxu0 1.0
  %649 = vmatprep.subr.mxu0 0.0
  %650 = vmatpush2.msra.mxu0 1.0
  %651 = vmatprep.subr.mxu0 0.0
  %652 = vmatpush2.msra.mxu0 1.0
  %653 = vmatprep.subr.mxu0 0.0
  %654 = vmatpush2.msra.mxu0 1.0
  %655 = vmatprep.subr.mxu0 0.0
  %656 = vmatpush2.msra.mxu0 1.0
  %657 = vmatprep.subr.mxu0 0.0
  %658 = vmatpush2.msra.mxu0 1.0
  %659 = vmatprep.subr.mxu0 0.0
  %660 = vmatpush2.msra.mxu0 1.0
  %661 = vmatprep.subr.mxu0 0.0
  %662 = vmatpush2.msra.mxu0 1.0
  %663 = vmatprep.subr.mxu0 0.0
  %664 = vmatpush2.msra.mxu0 1.0
  %665 = vmatprep.subr.mxu0 0.0
  %666 = vmatpush2.msra.mxu0 1.0
  %667 = vmatprep.subr.mxu0 0.0
  %668 = vmatpush2.msra.mxu0 1.0
  %669 = vmatprep.subr.mxu0 0.0
  %670 = vmatpush2.msra.mxu0 1.0
  %671 = vmatprep.mubr.f32.mxu0 %v556
  %672 = vmatmul.mubr.f32.gmra.mxu0 %v554
  %v673 = vpop.f32.mrf.mxu0
  %v674 = vadd.f32 0.0, %v673
  %v675 = vpop.f32.mrf.mxu0
  %676 = vmatprep.mubr.f32.mxu0 %v602
  %677 = vmatmul.mubr.f32.gmra.mxu0 %v601
  %v678 = vpop.f32.mrf.mxu0
  %v679 = vadd.f32 0.0, %v678
  %v680 = vpop.f32.mrf.mxu0
  %681 = vdwg.mxu0
  %682 = vmatprep.subr.mxu0 0.0
  %683 = vmatpush1.msra.mxu0 1.0
  %684 = vmatprep.subr.mxu0 0.0
  %685 = vmatpush1.msra.mxu0 1.0
  %686 = vmatprep.subr.mxu0 0.0
  %687 = vmatpush1.msra.mxu0 1.0
  %688 = vmatprep.subr.mxu0 0.0
  %689 = vmatpush1.msra.mxu0 1.0
  %690 = vmatprep.subr.mxu0 0.0
  %691 = vmatpush1.msra.mxu0 1.0
  %692 = vmatprep.subr.mxu0 0.0
  %693 = vmatpush1.msra.mxu0 1.0
  %694 = vmatprep.subr.mxu0 0.0
  %695 = vmatpush1.msra.mxu0 1.0
  %696 = vmatprep.subr.mxu0 0.0
  %697 = vmatpush1.msra.mxu0 1.0
  %698 = vmatprep.subr.mxu0 0.0
  %699 = vmatpush1.msra.mxu0 1.0
  %700 = vmatprep.subr.mxu0 0.0
  %701 = vmatpush1.msra.mxu0 1.0
  %702 = vmatprep.subr.mxu0 0.0
  %703 = vmatpush1.msra.mxu0 1.0
  %704 = vmatprep.subr.mxu0 0.0
  %705 = vmatpush1.msra.mxu0 1.0
  %706 = vmatprep.subr.mxu0 0.0
  %707 = vmatpush1.msra.mxu0 1.0
  %708 = vmatprep.subr.mxu0 0.0
  %709 = vmatpush1.msra.mxu0 1.0
  %710 = vmatprep.subr.mxu0 0.0
  %711 = vmatpush1.msra.mxu0 1.0
  %712 = vmatprep.subr.mxu0 0.0
  %713 = vmatpush1.msra.mxu0 1.0
  %714 = vmatprep.subr.mxu0 0.0
  %715 = vmatpush2.msra.mxu0 1.0
  %716 = vmatprep.subr.mxu0 0.0
  %717 = vmatpush2.msra.mxu0 1.0
  %718 = vmatprep.subr.mxu0 0.0
  %719 = vmatpush2.msra.mxu0 1.0
  %720 = vmatprep.subr.mxu0 0.0
  %721 = vmatpush2.msra.mxu0 1.0
  %722 = vmatprep.subr.mxu0 0.0
  %723 = vmatpush2.msra.mxu0 1.0
  %724 = vmatprep.subr.mxu0 0.0
  %725 = vmatpush2.msra.mxu0 1.0
  %726 = vmatprep.subr.mxu0 0.0
  %727 = vmatpush2.msra.mxu0 1.0
  %728 = vmatprep.subr.mxu0 0.0
  %729 = vmatpush2.msra.mxu0 1.0
  %730 = vmatprep.subr.mxu0 0.0
  %731 = vmatpush2.msra.mxu0 1.0
  %732 = vmatprep.subr.mxu0 0.0
  %733 = vmatpush2.msra.mxu0 1.0
  %734 = vmatprep.subr.mxu0 0.0
  %735 = vmatpush2.msra.mxu0 1.0
  %736 = vmatprep.subr.mxu0 0.0
  %737 = vmatpush2.msra.mxu0 1.0
  %738 = vmatprep.subr.mxu0 0.0
  %739 = vmatpush2.msra.mxu0 1.0
  %740 = vmatprep.subr.mxu0 0.0
  %741 = vmatpush2.msra.mxu0 1.0
  %742 = vmatprep.subr.mxu0 0.0
  %743 = vmatpush2.msra.mxu0 1.0
  %744 = vmatprep.subr.mxu0 0.0
  %745 = vmatpush2.msra.mxu0 1.0
  %746 = vmatprep.mubr.f32.mxu0 %v597
  %747 = vmatmul.mubr.f32.gmra.mxu0 %v595
  %v748 = vpop.f32.mrf.mxu0
  %v749 = vadd.f32 %v674, %v748
  %v750 = vpop.f32.mrf.mxu0
  %751 = vmatprep.mubr.f32.mxu0 %v604
  %752 = vmatmul.mubr.f32.gmra.mxu0 %v603
  %v753 = vpop.f32.mrf.mxu0
  %v754 = vadd.f32 %v679, %v753
  %v755 = vpop.f32.mrf.mxu0
  %756 = vdwg.mxu0
  %v757 = vadd.f32 %v605, %v749
  %v758 = vadd.f32 %v606, %v754
  %vm759 = vcmask 7168
  %760 = vst.msk [vmem:[%s2] sm:$0xff] %vm759, %v757
  %761 = vst.msk [vmem:[%s2 + $0x8] sm:$0xff] %vm759, %v758
  // Predicated region
  $region14: #{residual_block_forward.3} parent=0 // pred_check
    _
  $region15: #{residual_block_forward.3} parent=0 // pred_check_branch
    %763 = sbr.rel (0) target = $region17
  $region16: #{residual_block_forward.3} parent=0 // pred_region
    _
  $region17: #{residual_block_forward.3} parent=0 // pred_fallthru
    _
  // Predicated region
  $region18: #{residual_block_forward.3} parent=0 // pred_check
    _
  $region19: #{residual_block_forward.3} parent=0 // pred_check_branch
    %765 = sbr.rel (0) target = $region21
  $region20: #{residual_block_forward.3} parent=0 // pred_region
    _
  $region21: #{residual_block_forward.3} parent=0 // pred_fallthru
    _

// kernel: residual_block_forward.4
$region0: #{residual_block_forward.4}
  #allocation0 [shape = 'u32[]', space=smem, size = 0x4, offset = 0x4, fixed_abs, tag = 'smem constant byte address 0x4 - core index']
  #allocation1 [shape = 'u32[144,128]{1,0:T(1,128)}', space=vmem, size = 0x12000, scoped, tag = 'internal scratch']
  #allocation2 [shape = 'bf16[2,8,512]{2,1,0:T(8,128)(2,1)}', space=vmem, size = 0x4000, scoped, tag = 'scratch operand']
  #allocation3 [shape = 'bf16[72,512]{1,0:T(8,128)(2,1)}', space=vmem, size = 0x12000, scoped, tag = 'scratch operand']
  %s0 = inlined_call_operand.vmem [shape: f32[2,4,256], index: 0, kind: input, shape index: {}]
  %s1 = inlined_call_operand.vmem [shape: f32[4,1], index: 1, kind: input, shape index: {}]
  %s2 = inlined_call_operand.vmem [shape: f32[4,1], index: 2, kind: input, shape index: {}]
  %s3 = inlined_call_operand.vmem [shape: bf16[8,72], index: 3, kind: input, shape index: {}]
  %s4 = inlined_call_operand.vmem [shape: bf16[8,72], index: 4, kind: input, shape index: {}]
  %s5 = inlined_call_operand.vmem [shape: bf16[2,4,256], index: 5, kind: output, shape index: {0}]
  %s6 = inlined_call_operand.vmem [shape: f32[16,1], index: 6, kind: output, shape index: {1}]
  %7 = xla_tuple %s5, %s6
  %s8 = sld [smem:[#allocation0]]
  $region42: #{residual_block_forward.4} parent=0
    _
  %s10 = ssub.s32 1, %s8
  %s11 = scalar_select 0, %s10, %s8
  // Predicated region
  $region2: #{residual_block_forward.4} parent=0 // pred_check
    _
  $region3: #{residual_block_forward.4} parent=0 // pred_check_branch
    %13 = sbr.rel (0) target = $region5
  $region4: #{residual_block_forward.4} parent=0 // pred_region
    _
  $region5: #{residual_block_forward.4} parent=0 // pred_fallthru
    _
  // Predicated region
  $region6: #{residual_block_forward.4} parent=0 // pred_check
    _
  $region7: #{residual_block_forward.4} parent=0 // pred_check_branch
    %15 = sbr.rel (0) target = $region9
  $region8: #{residual_block_forward.4} parent=0 // pred_region
    _
  $region9: #{residual_block_forward.4} parent=0 // pred_fallthru
    _
  // Predicated region
  $region10: #{residual_block_forward.4} parent=0 // pred_check
    _
  $region11: #{residual_block_forward.4} parent=0 // pred_check_branch
    %17 = sbr.rel (0) target = $region13
  $region12: #{residual_block_forward.4} parent=0 // pred_region
    _
  $region13: #{residual_block_forward.4} parent=0 // pred_fallthru
    _
  // Predicated region
  $region14: #{residual_block_forward.4} parent=0 // pred_check
    _
  $region15: #{residual_block_forward.4} parent=0 // pred_check_branch
    %19 = sbr.rel (0) target = $region17
  $region16: #{residual_block_forward.4} parent=0 // pred_region
    _
  $region17: #{residual_block_forward.4} parent=0 // pred_fallthru
    _
  // Predicated region
  $region18: #{residual_block_forward.4} parent=0 // pred_check
    _
  $region19: #{residual_block_forward.4} parent=0 // pred_check_branch
    %21 = sbr.rel (0) target = $region21
  $region20: #{residual_block_forward.4} parent=0 // pred_region
    _
  $region21: #{residual_block_forward.4} parent=0 // pred_fallthru
    _
  %p25 = scmp.eq.s32.totalorder 0, 0
  // Predicated region
  $region22: #{residual_block_forward.4} parent=0 // pred_check
    %p26 = pneg %p25
  $region23: #{residual_block_forward.4} parent=0 // pred_check_branch
    %28 = sbr.rel (%p26) target = $region25
  $region24: #{residual_block_forward.4} parent=0 // pred_region
    %vm29 = vcmask 7168
    %30 = vst.msk [vmem:[%s6] sm:$0xff] %vm29, 0.0
    %31 = vst.msk [vmem:[%s6 + $0x8] sm:$0xff] %vm29, 0.0
    %32 = vst [vmem:[#allocation2] sm:$0xff] 0
    %33 = vst [vmem:[#allocation2 + $0x8] sm:$0xff] 0
    %34 = vst [vmem:[#allocation2 + $0x10] sm:$0xff] 0
    %35 = vst [vmem:[#allocation2 + $0x18] sm:$0xff] 0
  $region25: #{residual_block_forward.4} parent=0 // pred_fallthru
    _
  %v36 = vld [vmem:[%s0] sm:$0xff]
  %v38 = vcombine.high %v36, %v36
  %v40 = vpack.c.bf16 %v36, %v36
  %v41 = vpack.c.bf16 %v38, %v38
  %v44 = vunpack.c.l.b16 %v40
  %v45 = vunpack.c.l.b16 %v41
  %v46 = vpack.c.b16 %v45, %v44
  %48 = vst [vmem:[#allocation2 + $0x4] sm:$0x33] %v46
  %s49 = scalar_lea.vmem %s0, 8
  %v50 = vld [vmem:[%s49] sm:$0xff]
  %v52 = vcombine.high %v50, %v50
  %v54 = vpack.c.bf16 %v50, %v50
  %v55 = vpack.c.bf16 %v52, %v52
  %v58 = vunpack.c.l.b16 %v54
  %v59 = vunpack.c.l.b16 %v55
  %v60 = vpack.c.b16 %v59, %v58
  %s62 = scalar_lea.vmem [#allocation2], 16
  %63 = vst [vmem:[%s62 + $0x4] sm:$0x33] %v60
  %v64 = vlaneseq
  %v65 = vand.u32 %v64, 127
  %v66 = vadd.s32 %v65, 128
  %vm67 = vcmp.lt.s32.totalorder %v65, 0
  %v68 = vsub.s32 0, %v65
  %v69 = vsel %vm67, %v68, %v65
  %v70 = vshrl.u32 %v69, 4
  %v71 = vand.u32 %v69, 15
  %v72 = vsub.s32 0, %v71
  %v73 = vsel %vm67, %v72, %v71
  %vm74 = vcmp.lt.s32.totalorder %v66, 0
  %v75 = vsub.s32 0, %v66
  %v76 = vsel %vm74, %v75, %v66
  %v77 = vshrl.u32 %v76, 4
  %v78 = vand.u32 %v76, 15
  %v79 = vsub.s32 0, %v78
  %v80 = vsel %vm74, %v79, %v78
  %vm81 = vcmp.ne.s32.totalorder %v73, 0
  %vm82 = vcmp.ne.s32.totalorder %v80, 0
  %vm83 = vcmp.lt.s32.totalorder %v73, 0
  %vm84 = vcmp.lt.s32.totalorder %v80, 0
  %vm85 = vmand %vm83, %vm81
  %vm86 = vmand %vm84, %vm82
  %v87 = vadd.s32 %v73, 16
  %v88 = vadd.s32 %v80, 16
  %v89 = vsel %vm85, %v87, %v73
  %v90 = vsel %vm86, %v88, %v80
  %vm91 = vcmp.eq.s32.totalorder %v89, 0
  %vm92 = vcmp.eq.s32.totalorder %v90, 0
  %vm93 = vcmp.eq.s32.totalorder %v89, 15
  %vm94 = vcmp.eq.s32.totalorder %v90, 15
  %v95 = vld [vmem:[#allocation2] sm:$0xff]
  %v96 = vld [vmem:[#allocation2 + $0x8] sm:$0xf]
  %v97 = vsel %vm91, 1, 0
  %v98 = vsel %vm92, 1, 0
  %vm99 = vcmp.eq.s32.totalorder %v97, 1
  %vm100 = vcmp.eq.s32.totalorder %v98, 1
  %vm101 = vmpackc.low %vm100, %vm99
  %v102 = vsel %vm101, 65537, 0
  %103 = vrot.lane.b32.xlu0 %v102, 111
  %v104 = vpop.permute.xlu0 %103
  %v105 = vrot.slane %v104, 4
  %vm106 = vcmask 908288
  %v107 = vsel %vm106, %v105, %v104
  %vm108 = vcmp.ne.s16.totalorder %v107, 0
  %vm109 = vcmp.ne.s16.totalorder %v105, 0
  %v110 = vsel %vm108, 0, %v95
  %v111 = vsel %vm109, 0, %v96
  %114 = vrot.lane.b32.xlu0 %v110, 17
  %v115 = vpop.permute.xlu0 %114
  %116 = vrot.lane.b32.xlu0 %v111, 17
  %v117 = vpop.permute.xlu0 %116
  %v118 = vrot.slane %v115, 4
  %v119 = vrot.slane %v117, 4
  %vm120 = vcmask 1043456
  %v121 = vsel %vm120, %v118, %v119
  %vm122 = vcmask 138240
  %v123 = vsel %vm122, %v115, %v121
  %125 = vst [vmem:[#allocation3] sm:$0xff] %v123
  %v126 = vld [vmem:[#allocation2] sm:$0xff]
  %v127 = vld [vmem:[#allocation2 + $0x8] sm:$0xf]
  %130 = vrot.lane.b32.xlu0 %v126, 16
  %v131 = vpop.permute.xlu0 %130
  %132 = vrot.lane.b32.xlu0 %v127, 16
  %v133 = vpop.permute.xlu0 %132
  %v134 = vrot.slane %v131, 4
  %v135 = vrot.slane %v133, 4
  %v136 = vsel %vm120, %v134, %v135
  %vm137 = vcmask 130048
  %v138 = vsel %vm137, %v131, %v136
  %140 = vst [vmem:[#allocation3 + $0x10] sm:$0xff] %v138
  %v141 = vld [vmem:[#allocation2] sm:$0xff]
  %v142 = vld [vmem:[#allocation2 + $0x8] sm:$0xf]
  %v143 = vsel %vm93, 1, 0
  %v144 = vsel %vm94, 1, 0
  %vm145 = vcmp.eq.s32.totalorder %v143, 1
  %vm146 = vcmp.eq.s32.totalorder %v144, 1
  %vm147 = vmpackc.low %vm146, %vm145
  %v148 = vsel %vm147, 65537, 0
  %149 = vrot.lane.b32.xlu0 %v148, 113
  %v150 = vpop.permute.xlu0 %149
  %v151 = vrot.slane %v150, 4
  %vm152 = vcmask 924672
  %v153 = vsel %vm152, %v151, %v150
  %vm154 = vcmp.ne.s16.totalorder %v153, 0
  %vm155 = vcmp.ne.s16.totalorder %v151, 0
  %v156 = vsel %vm154, 0, %v141
  %v157 = vsel %vm155, 0, %v142
  %160 = vrot.lane.b32.xlu0 %v156, 15
  %v161 = vpop.permute.xlu0 %160
  %162 = vrot.lane.b32.xlu0 %v157, 15
  %v163 = vpop.permute.xlu0 %162
  %v164 = vrot.slane %v161, 4
  %v165 = vrot.slane %v163, 4
  %v166 = vsel %vm120, %v164, %v165
  %vm167 = vcmask 121856
  %v168 = vsel %vm167, %v161, %v166
  %170 = vst [vmem:[#allocation3 + $0x20] sm:$0xff] %v168
  %v171 = vld [vmem:[#allocation2] sm:$0xff]
  %v172 = vld [vmem:[#allocation2 + $0x8] sm:$0xf]
  %173 = vrot.lane.b32.xlu0 %v102, 127
  %v174 = vpop.permute.xlu0 %173
  %v175 = vrot.slane %v174, 4
  %vm176 = vcmask 1039360
  %v177 = vsel %vm176, %v175, %v174
  %vm178 = vcmp.ne.s16.totalorder %v177, 0
  %vm179 = vcmp.ne.s16.totalorder %v175, 0
  %v180 = vsel %vm178, 0, %v171
  %v181 = vsel %vm179, 0, %v172
  %184 = vrot.lane.b32.xlu0 %v180, 1
  %v185 = vpop.permute.xlu0 %184
  %186 = vrot.lane.b32.xlu0 %v181, 1
  %v187 = vpop.permute.xlu0 %186
  %v188 = vrot.slane %v185, 4
  %v189 = vrot.slane %v187, 4
  %v190 = vsel %vm120, %v188, %v189
  %vm191 = vcmask 7168
  %v192 = vsel %vm191, %v185, %v190
  %194 = vst [vmem:[#allocation3 + $0x30] sm:$0xff] %v192
  %v195 = vld [vmem:[#allocation2 + $0x4] sm:$0xff]
  %196 = vst [vmem:[#allocation3 + $0x40] sm:$0xff] %v195
  %v197 = vld [vmem:[#allocation2 + $0x4] sm:$0xff]
  %v198 = vld [vmem:[#allocation2 + $0xc] sm:$0xf]
  %199 = vrot.lane.b32.xlu0 %v148, 1
  %v200 = vpop.permute.xlu0 %199
  %v201 = vrot.slane %v200, 4
  %v202 = vsel %vm191, %v201, %v200
  %vm203 = vcmp.ne.s16.totalorder %v202, 0
  %vm204 = vcmp.ne.s16.totalorder %v201, 0
  %v205 = vsel %vm203, 0, %v197
  %v206 = vsel %vm204, 0, %v198
  %209 = vrot.lane.b32.xlu0 %v205, 127
  %v210 = vpop.permute.xlu0 %209
  %211 = vrot.lane.b32.xlu0 %v206, 127
  %v212 = vpop.permute.xlu0 %211
  %v213 = vrot.slane %v210, 4
  %v214 = vrot.slane %v212, 4
  %v215 = vsel %vm120, %v213, %v214
  %v216 = vsel %vm176, %v210, %v215
  %218 = vst [vmem:[#allocation3 + $0x50] sm:$0xff] %v216
  %v219 = vld [vmem:[#allocation2 + $0x4] sm:$0xff]
  %v220 = vld [vmem:[#allocation2 + $0xc] sm:$0xf]
  %221 = vrot.lane.b32.xlu0 %v102, 15
  %v222 = vpop.permute.xlu0 %221
  %v223 = vrot.slane %v222, 4
  %v224 = vsel %vm167, %v223, %v222
  %vm225 = vcmp.ne.s16.totalorder %v224, 0
  %vm226 = vcmp.ne.s16.totalorder %v223, 0
  %v227 = vsel %vm225, 0, %v219
  %v228 = vsel %vm226, 0, %v220
  %231 = vrot.lane.b32.xlu0 %v227, 113
  %v232 = vpop.permute.xlu0 %231
  %233 = vrot.lane.b32.xlu0 %v228, 113
  %v234 = vpop.permute.xlu0 %233
  %v235 = vrot.slane %v232, 4
  %v236 = vrot.slane %v234, 4
  %v237 = vsel %vm120, %v235, %v236
  %v238 = vsel %vm152, %v232, %v237
  %240 = vst [vmem:[#allocation3 + $0x60] sm:$0xff] %v238
  %v241 = vld [vmem:[#allocation2 + $0x4] sm:$0xff]
  %v242 = vld [vmem:[#allocation2 + $0xc] sm:$0xf]
  %245 = vrot.lane.b32.xlu0 %v241, 112
  %v246 = vpop.permute.xlu0 %245
  %247 = vrot.lane.b32.xlu0 %v242, 112
  %v248 = vpop.permute.xlu0 %247
  %v249 = vrot.slane %v246, 4
  %v250 = vrot.slane %v248, 4
  %v251 = vsel %vm120, %v249, %v250
  %vm252 = vcmask 916480
  %v253 = vsel %vm252, %v246, %v251
  %255 = vst [vmem:[#allocation3 + $0x70] sm:$0xff] %v253
  %v256 = vld [vmem:[#allocation2 + $0x4] sm:$0xff]
  %v257 = vld [vmem:[#allocation2 + $0xc] sm:$0xf]
  %258 = vrot.lane.b32.xlu0 %v148, 17
  %v259 = vpop.permute.xlu0 %258
  %v260 = vrot.slane %v259, 4
  %v261 = vsel %vm122, %v260, %v259
  %vm262 = vcmp.ne.s16.totalorder %v261, 0
  %vm263 = vcmp.ne.s16.totalorder %v260, 0
  %v264 = vsel %vm262, 0, %v256
  %v265 = vsel %vm263, 0, %v257
  %268 = vrot.lane.b32.xlu0 %v264, 111
  %v269 = vpop.permute.xlu0 %268
  %270 = vrot.lane.b32.xlu0 %v265, 111
  %v271 = vpop.permute.xlu0 %270
  %v272 = vrot.slane %v269, 4
  %v273 = vrot.slane %v271, 4
  %v274 = vsel %vm120, %v272, %v273
  %v275 = vsel %vm106, %v269, %v274
  %277 = vst [vmem:[#allocation3 + $0x80] sm:$0xff] %v275
  %v278 = vld [vmem:[%s62] sm:$0xff]
  %v279 = vld [vmem:[%s62 + $0x8] sm:$0xf]
  %v280 = vsel %vm108, 0, %v278
  %v281 = vsel %vm109, 0, %v279
  %284 = vrot.lane.b32.xlu0 %v280, 17
  %v285 = vpop.permute.xlu0 %284
  %286 = vrot.lane.b32.xlu0 %v281, 17
  %v287 = vpop.permute.xlu0 %286
  %v288 = vrot.slane %v285, 4
  %v289 = vrot.slane %v287, 4
  %v290 = vsel %vm120, %v288, %v289
  %v291 = vsel %vm122, %v285, %v290
  %293 = vst [vmem:[#allocation3 + $0x8] sm:$0xff] %v291
  %v294 = vld [vmem:[%s62] sm:$0xff]
  %v295 = vld [vmem:[%s62 + $0x8] sm:$0xf]
  %298 = vrot.lane.b32.xlu0 %v294, 16
  %v299 = vpop.permute.xlu0 %298
  %300 = vrot.lane.b32.xlu0 %v295, 16
  %v301 = vpop.permute.xlu0 %300
  %v302 = vrot.slane %v299, 4
  %v303 = vrot.slane %v301, 4
  %v304 = vsel %vm120, %v302, %v303
  %v305 = vsel %vm137, %v299, %v304
  %307 = vst [vmem:[#allocation3 + $0x18] sm:$0xff] %v305
  %v308 = vld [vmem:[%s62] sm:$0xff]
  %v309 = vld [vmem:[%s62 + $0x8] sm:$0xf]
  %v310 = vsel %vm154, 0, %v308
  %v311 = vsel %vm155, 0, %v309
  %314 = vrot.lane.b32.xlu0 %v310, 15
  %v315 = vpop.permute.xlu0 %314
  %316 = vrot.lane.b32.xlu0 %v311, 15
  %v317 = vpop.permute.xlu0 %316
  %v318 = vrot.slane %v315, 4
  %v319 = vrot.slane %v317, 4
  %v320 = vsel %vm120, %v318, %v319
  %v321 = vsel %vm167, %v315, %v320
  %323 = vst [vmem:[#allocation3 + $0x28] sm:$0xff] %v321
  %v324 = vld [vmem:[%s62] sm:$0xff]
  %v325 = vld [vmem:[%s62 + $0x8] sm:$0xf]
  %v326 = vsel %vm178, 0, %v324
  %v327 = vsel %vm179, 0, %v325
  %330 = vrot.lane.b32.xlu0 %v326, 1
  %v331 = vpop.permute.xlu0 %330
  %332 = vrot.lane.b32.xlu0 %v327, 1
  %v333 = vpop.permute.xlu0 %332
  %v334 = vrot.slane %v331, 4
  %v335 = vrot.slane %v333, 4
  %v336 = vsel %vm120, %v334, %v335
  %v337 = vsel %vm191, %v331, %v336
  %339 = vst [vmem:[#allocation3 + $0x38] sm:$0xff] %v337
  %v340 = vld [vmem:[%s62 + $0x4] sm:$0xff]
  %341 = vst [vmem:[#allocation3 + $0x48] sm:$0xff] %v340
  %v342 = vld [vmem:[%s62 + $0x4] sm:$0xff]
  %v343 = vld [vmem:[%s62 + $0xc] sm:$0xf]
  %v344 = vsel %vm203, 0, %v342
  %v345 = vsel %vm204, 0, %v343
  %348 = vrot.lane.b32.xlu0 %v344, 127
  %v349 = vpop.permute.xlu0 %348
  %350 = vrot.lane.b32.xlu0 %v345, 127
  %v351 = vpop.permute.xlu0 %350
  %v352 = vrot.slane %v349, 4
  %v353 = vrot.slane %v351, 4
  %v354 = vsel %vm120, %v352, %v353
  %v355 = vsel %vm176, %v349, %v354
  %357 = vst [vmem:[#allocation3 + $0x58] sm:$0xff] %v355
  %v358 = vld [vmem:[%s62 + $0x4] sm:$0xff]
  %v359 = vld [vmem:[%s62 + $0xc] sm:$0xf]
  %v360 = vsel %vm225, 0, %v358
  %v361 = vsel %vm226, 0, %v359
  %364 = vrot.lane.b32.xlu0 %v360, 113
  %v365 = vpop.permute.xlu0 %364
  %366 = vrot.lane.b32.xlu0 %v361, 113
  %v367 = vpop.permute.xlu0 %366
  %v368 = vrot.slane %v365, 4
  %v369 = vrot.slane %v367, 4
  %v370 = vsel %vm120, %v368, %v369
  %v371 = vsel %vm152, %v365, %v370
  %373 = vst [vmem:[#allocation3 + $0x68] sm:$0xff] %v371
  %v374 = vld [vmem:[%s62 + $0x4] sm:$0xff]
  %v375 = vld [vmem:[%s62 + $0xc] sm:$0xf]
  %378 = vrot.lane.b32.xlu0 %v374, 112
  %v379 = vpop.permute.xlu0 %378
  %380 = vrot.lane.b32.xlu0 %v375, 112
  %v381 = vpop.permute.xlu0 %380
  %v382 = vrot.slane %v379, 4
  %v383 = vrot.slane %v381, 4
  %v384 = vsel %vm120, %v382, %v383
  %v385 = vsel %vm252, %v379, %v384
  %387 = vst [vmem:[#allocation3 + $0x78] sm:$0xff] %v385
  %v388 = vld [vmem:[%s62 + $0x4] sm:$0xff]
  %v389 = vld [vmem:[%s62 + $0xc] sm:$0xf]
  %v390 = vsel %vm262, 0, %v388
  %v391 = vsel %vm263, 0, %v389
  %394 = vrot.lane.b32.xlu0 %v390, 111
  %v395 = vpop.permute.xlu0 %394
  %396 = vrot.lane.b32.xlu0 %v391, 111
  %v397 = vpop.permute.xlu0 %396
  %v398 = vrot.slane %v395, 4
  %v399 = vrot.slane %v397, 4
  %v400 = vsel %vm120, %v398, %v399
  %v401 = vsel %vm106, %v395, %v400
  %403 = vst [vmem:[#allocation3 + $0x88] sm:$0xff] %v401
  %v404 = vld [vmem:[%s3] sm:$0xf]
  %v405 = vld [vmem:[#allocation3] sm:$0xff]
  %v406 = vld [vmem:[#allocation3 + $0x8] sm:$0xff]
  %v407 = vld [vmem:[#allocation3 + $0x10] sm:$0xff]
  %v408 = vld [vmem:[#allocation3 + $0x18] sm:$0xff]
  %v409 = vld [vmem:[#allocation3 + $0x20] sm:$0xff]
  %v410 = vld [vmem:[#allocation3 + $0x28] sm:$0xff]
  %v411 = vld [vmem:[#allocation3 + $0x30] sm:$0xff]
  %v412 = vld [vmem:[#allocation3 + $0x38] sm:$0xff]
  %v413 = vld [vmem:[#allocation3 + $0x40] sm:$0xff]
  %v414 = vld [vmem:[#allocation3 + $0x48] sm:$0xff]
  %v415 = vld [vmem:[#allocation3 + $0x50] sm:$0xff]
  %v416 = vld [vmem:[#allocation3 + $0x58] sm:$0xff]
  %v417 = vld [vmem:[#allocation3 + $0x60] sm:$0xff]
  %v418 = vld [vmem:[#allocation3 + $0x68] sm:$0xff]
  %v419 = vld [vmem:[#allocation3 + $0x70] sm:$0xff]
  %v420 = vld [vmem:[#allocation3 + $0x78] sm:$0xff]
  %v421 = vld [vmem:[#allocation3 + $0x80] sm:$0xff]
  %v422 = vld [vmem:[#allocation3 + $0x88] sm:$0xff]
  %v441 = vunpack.c.l.b16 %v405
  %v442 = vunpack.c.h.b16 %v405
  %v443 = vunpack.c.l.b16 %v406
  %v444 = vunpack.c.h.b16 %v406
  %v445 = vunpack.c.l.b16 %v407
  %v446 = vunpack.c.h.b16 %v407
  %v447 = vunpack.c.l.b16 %v408
  %v448 = vunpack.c.h.b16 %v408
  %v449 = vunpack.c.l.b16 %v409
  %v450 = vunpack.c.h.b16 %v409
  %v451 = vunpack.c.l.b16 %v410
  %v452 = vunpack.c.h.b16 %v410
  %v453 = vunpack.c.l.b16 %v411
  %v454 = vunpack.c.h.b16 %v411
  %v455 = vunpack.c.l.b16 %v412
  %v456 = vunpack.c.h.b16 %v412
  %v457 = vunpack.c.l.b16 %v413
  %v458 = vunpack.c.h.b16 %v413
  %v459 = vunpack.c.l.b16 %v414
  %v460 = vunpack.c.h.b16 %v414
  %v461 = vunpack.c.l.b16 %v415
  %v462 = vunpack.c.h.b16 %v415
  %v463 = vunpack.c.l.b16 %v416
  %v464 = vunpack.c.h.b16 %v416
  %v465 = vunpack.c.l.b16 %v417
  %v466 = vunpack.c.h.b16 %v417
  %v467 = vunpack.c.l.b16 %v418
  %v468 = vunpack.c.h.b16 %v418
  %v469 = vunpack.c.l.b16 %v419
  %v470 = vunpack.c.h.b16 %v419
  %v471 = vunpack.c.l.b16 %v420
  %v472 = vunpack.c.h.b16 %v420
  %v473 = vunpack.c.l.b16 %v421
  %v474 = vunpack.c.h.b16 %v421
  %v475 = vunpack.c.l.b16 %v422
  %v476 = vunpack.c.h.b16 %v422
  %v477 = vpack.c.b16 %v445, %v441
  %v478 = vpack.c.b16 %v446, %v442
  %v479 = vpack.c.b16 %v447, %v443
  %v480 = vpack.c.b16 %v448, %v444
  %v481 = vpack.c.b16 %v453, %v449
  %v482 = vpack.c.b16 %v454, %v450
  %v483 = vpack.c.b16 %v455, %v451
  %v484 = vpack.c.b16 %v456, %v452
  %v485 = vpack.c.b16 %v461, %v457
  %v486 = vpack.c.b16 %v462, %v458
  %v487 = vpack.c.b16 %v463, %v459
  %v488 = vpack.c.b16 %v464, %v460
  %v489 = vpack.c.b16 %v469, %v465
  %v490 = vpack.c.b16 %v470, %v466
  %v491 = vpack.c.b16 %v471, %v467
  %v492 = vpack.c.b16 %v472, %v468
  %v493 = vpack.c.b16 %v473, %v473
  %v494 = vpack.c.b16 %v474, %v474
  %v495 = vpack.c.b16 %v475, %v475
  %v496 = vpack.c.b16 %v476, %v476
  %vm513 = vcmask 588800
  %v515 = vsel %vm513, %v404, 0
  %vm517 = vcmask 1043456
  %v519 = vsel %vm517, %v493, 0
  %v522 = vsel %vm517, %v494, 0
  %v525 = vsel %vm517, %v495, 0
  %v528 = vsel %vm517, %v496, 0
  %530 = vmatprep.subr.bf16.mxu0 0
  %531 = vmatpush1.bf16.msra.mxu0 0
  %532 = vmatprep.subr.bf16.mxu0 0
  %533 = vmatpush1.bf16.msra.mxu0 0
  %534 = vmatprep.subr.bf16.mxu0 0
  %535 = vmatpush1.bf16.msra.mxu0 0
  %536 = vmatprep.subr.bf16.mxu0 %v522
  %537 = vmatpush1.bf16.msra.mxu0 %v519
  %538 = vmatprep.subr.bf16.mxu0 %v490
  %539 = vmatpush1.bf16.msra.mxu0 %v489
  %540 = vmatprep.subr.bf16.mxu0 %v486
  %541 = vmatpush1.bf16.msra.mxu0 %v485
  %542 = vmatprep.subr.bf16.mxu0 %v482
  %543 = vmatpush1.bf16.msra.mxu0 %v481
  %544 = vmatprep.subr.bf16.mxu0 %v478
  %545 = vmatpush1.bf16.msra.mxu0 %v477
  %546 = vmatprep.subr.bf16.mxu0 0
  %547 = vmatpush2.bf16.msra.mxu0 0
  %548 = vmatprep.subr.bf16.mxu0 0
  %549 = vmatpush2.bf16.msra.mxu0 0
  %550 = vmatprep.subr.bf16.mxu0 0
  %551 = vmatpush2.bf16.msra.mxu0 0
  %552 = vmatprep.subr.bf16.mxu0 0
  %553 = vmatpush2.bf16.msra.mxu0 0
  %554 = vmatprep.subr.bf16.mxu0 0
  %555 = vmatpush2.bf16.msra.mxu0 0
  %556 = vmatprep.subr.bf16.mxu0 0
  %557 = vmatpush2.bf16.msra.mxu0 0
  %558 = vmatprep.subr.bf16.mxu0 0
  %559 = vmatpush2.bf16.msra.mxu0 0
  %560 = vmatprep.subr.bf16.mxu0 0
  %561 = vmatpush2.bf16.msra.mxu0 0
  %562 = vmatprep.mubr.bf16.mxu0 0
  %563 = vmatmul.mubr.bf16.gmra.mxu0 %v515
  %v564 = vpop.f32.mrf.mxu0
  %v565 = vadd.f32 0.0, %v564
  %v566 = vpop.f32.mrf.mxu0
  %v567 = vadd.f32 0.0, %v566
  %v568 = vpop.f32.mrf.mxu0
  %v569 = vpop.f32.mrf.mxu0
  %570 = vdwg.mxu0
  %571 = vmatprep.subr.bf16.mxu0 0
  %572 = vmatpush1.bf16.msra.mxu0 0
  %573 = vmatprep.subr.bf16.mxu0 0
  %574 = vmatpush1.bf16.msra.mxu0 0
  %575 = vmatprep.subr.bf16.mxu0 0
  %576 = vmatpush1.bf16.msra.mxu0 0
  %577 = vmatprep.subr.bf16.mxu0 %v528
  %578 = vmatpush1.bf16.msra.mxu0 %v525
  %579 = vmatprep.subr.bf16.mxu0 %v492
  %580 = vmatpush1.bf16.msra.mxu0 %v491
  %581 = vmatprep.subr.bf16.mxu0 %v488
  %582 = vmatpush1.bf16.msra.mxu0 %v487
  %583 = vmatprep.subr.bf16.mxu0 %v484
  %584 = vmatpush1.bf16.msra.mxu0 %v483
  %585 = vmatprep.subr.bf16.mxu0 %v480
  %586 = vmatpush1.bf16.msra.mxu0 %v479
  %587 = vmatprep.subr.bf16.mxu0 0
  %588 = vmatpush2.bf16.msra.mxu0 0
  %589 = vmatprep.subr.bf16.mxu0 0
  %590 = vmatpush2.bf16.msra.mxu0 0
  %591 = vmatprep.subr.bf16.mxu0 0
  %592 = vmatpush2.bf16.msra.mxu0 0
  %593 = vmatprep.subr.bf16.mxu0 0
  %594 = vmatpush2.bf16.msra.mxu0 0
  %595 = vmatprep.subr.bf16.mxu0 0
  %596 = vmatpush2.bf16.msra.mxu0 0
  %597 = vmatprep.subr.bf16.mxu0 0
  %598 = vmatpush2.bf16.msra.mxu0 0
  %599 = vmatprep.subr.bf16.mxu0 0
  %600 = vmatpush2.bf16.msra.mxu0 0
  %601 = vmatprep.subr.bf16.mxu0 0
  %602 = vmatpush2.bf16.msra.mxu0 0
  %603 = vmatprep.mubr.bf16.mxu0 0
  %604 = vmatmul.mubr.bf16.gmra.mxu0 %v515
  %v605 = vpop.f32.mrf.mxu0
  %v606 = vadd.f32 0.0, %v605
  %v607 = vpop.f32.mrf.mxu0
  %v608 = vadd.f32 0.0, %v607
  %v609 = vpop.f32.mrf.mxu0
  %v610 = vpop.f32.mrf.mxu0
  %611 = vdwg.mxu0
  %v612 = vld [vmem:[%s1] sm:$0xf]
  %614 = vset.pattern.permute.xlu0 0
  %615 = vperm.xlu0 %614, %v612
  %v616 = vpop.permute.xlu0 %615
  %v618 = vmul.f32 %v565, %v616
  %v619 = vmul.f32 %v567, %v616
  %v620 = vmul.f32 %v606, %v616
  %v621 = vmul.f32 %v608, %v616
  %v622 = vld [vmem:[%s2] sm:$0xf]
  %624 = vset.pattern.permute.xlu0 0
  %625 = vperm.xlu0 %624, %v622
  %v626 = vpop.permute.xlu0 %625
  %v628 = vadd.f32 %v618, %v626
  %v629 = vadd.f32 %v619, %v626
  %v630 = vadd.f32 %v620, %v626
  %v631 = vadd.f32 %v621, %v626
  %v632 = vmax.f32 %v628, 0.0
  %v633 = vmax.f32 %v629, 0.0
  %v634 = vmax.f32 %v630, 0.0
  %v635 = vmax.f32 %v631, 0.0
  %v636 = vpack.c.bf16 %v632, %v632
  %v637 = vpack.c.bf16 %v633, %v633
  %v640 = vunpack.c.l.b16 %v636
  %v641 = vunpack.c.l.b16 %v637
  %v642 = vpack.c.b16 %v641, %v640
  %644 = vst [vmem:[#allocation2 + $0x4] sm:$0x33] %v642
  %v645 = vpack.c.bf16 %v634, %v634
  %v646 = vpack.c.bf16 %v635, %v635
  %v649 = vunpack.c.l.b16 %v645
  %v650 = vunpack.c.l.b16 %v646
  %v651 = vpack.c.b16 %v650, %v649
  %653 = vst [vmem:[%s62 + $0x4] sm:$0x33] %v651
  %v654 = vld [vmem:[#allocation2] sm:$0xff]
  %v655 = vld [vmem:[#allocation2 + $0x8] sm:$0xf]
  %v656 = vsel %vm108, 0, %v654
  %v657 = vsel %vm109, 0, %v655
  %660 = vrot.lane.b32.xlu0 %v656, 17
  %v661 = vpop.permute.xlu0 %660
  %662 = vrot.lane.b32.xlu0 %v657, 17
  %v663 = vpop.permute.xlu0 %662
  %v664 = vrot.slane %v661, 4
  %v665 = vrot.slane %v663, 4
  %v666 = vsel %vm120, %v664, %v665
  %v667 = vsel %vm122, %v661, %v666
  %669 = vst [vmem:[#allocation3] sm:$0xff] %v667
  %v670 = vld [vmem:[#allocation2] sm:$0xff]
  %v671 = vld [vmem:[#allocation2 + $0x8] sm:$0xf]
  %674 = vrot.lane.b32.xlu0 %v670, 16
  %v675 = vpop.permute.xlu0 %674
  %676 = vrot.lane.b32.xlu0 %v671, 16
  %v677 = vpop.permute.xlu0 %676
  %v678 = vrot.slane %v675, 4
  %v679 = vrot.slane %v677, 4
  %v680 = vsel %vm120, %v678, %v679
  %v681 = vsel %vm137, %v675, %v680
  %683 = vst [vmem:[#allocation3 + $0x10] sm:$0xff] %v681
  %v684 = vld [vmem:[#allocation2] sm:$0xff]
  %v685 = vld [vmem:[#allocation2 + $0x8] sm:$0xf]
  %v686 = vsel %vm154, 0, %v684
  %v687 = vsel %vm155, 0, %v685
  %690 = vrot.lane.b32.xlu0 %v686, 15
  %v691 = vpop.permute.xlu0 %690
  %692 = vrot.lane.b32.xlu0 %v687, 15
  %v693 = vpop.permute.xlu0 %692
  %v694 = vrot.slane %v691, 4
  %v695 = vrot.slane %v693, 4
  %v696 = vsel %vm120, %v694, %v695
  %v697 = vsel %vm167, %v691, %v696
  %699 = vst [vmem:[#allocation3 + $0x20] sm:$0xff] %v697
  %v700 = vld [vmem:[#allocation2] sm:$0xff]
  %v701 = vld [vmem:[#allocation2 + $0x8] sm:$0xf]
  %v702 = vsel %vm178, 0, %v700
  %v703 = vsel %vm179, 0, %v701
  %706 = vrot.lane.b32.xlu0 %v702, 1
  %v707 = vpop.permute.xlu0 %706
  %708 = vrot.lane.b32.xlu0 %v703, 1
  %v709 = vpop.permute.xlu0 %708
  %v710 = vrot.slane %v707, 4
  %v711 = vrot.slane %v709, 4
  %v712 = vsel %vm120, %v710, %v711
  %v713 = vsel %vm191, %v707, %v712
  %715 = vst [vmem:[#allocation3 + $0x30] sm:$0xff] %v713
  %v716 = vld [vmem:[#allocation2 + $0x4] sm:$0xff]
  %717 = vst [vmem:[#allocation3 + $0x40] sm:$0xff] %v716
  %v718 = vld [vmem:[#allocation2 + $0x4] sm:$0xff]
  %v719 = vld [vmem:[#allocation2 + $0xc] sm:$0xf]
  %v720 = vsel %vm203, 0, %v718
  %v721 = vsel %vm204, 0, %v719
  %724 = vrot.lane.b32.xlu0 %v720, 127
  %v725 = vpop.permute.xlu0 %724
  %726 = vrot.lane.b32.xlu0 %v721, 127
  %v727 = vpop.permute.xlu0 %726
  %v728 = vrot.slane %v725, 4
  %v729 = vrot.slane %v727, 4
  %v730 = vsel %vm120, %v728, %v729
  %v731 = vsel %vm176, %v725, %v730
  %733 = vst [vmem:[#allocation3 + $0x50] sm:$0xff] %v731
  %v734 = vld [vmem:[#allocation2 + $0x4] sm:$0xff]
  %v735 = vld [vmem:[#allocation2 + $0xc] sm:$0xf]
  %v736 = vsel %vm225, 0, %v734
  %v737 = vsel %vm226, 0, %v735
  %740 = vrot.lane.b32.xlu0 %v736, 113
  %v741 = vpop.permute.xlu0 %740
  %742 = vrot.lane.b32.xlu0 %v737, 113
  %v743 = vpop.permute.xlu0 %742
  %v744 = vrot.slane %v741, 4
  %v745 = vrot.slane %v743, 4
  %v746 = vsel %vm120, %v744, %v745
  %v747 = vsel %vm152, %v741, %v746
  %749 = vst [vmem:[#allocation3 + $0x60] sm:$0xff] %v747
  %v750 = vld [vmem:[#allocation2 + $0x4] sm:$0xff]
  %v751 = vld [vmem:[#allocation2 + $0xc] sm:$0xf]
  %754 = vrot.lane.b32.xlu0 %v750, 112
  %v755 = vpop.permute.xlu0 %754
  %756 = vrot.lane.b32.xlu0 %v751, 112
  %v757 = vpop.permute.xlu0 %756
  %v758 = vrot.slane %v755, 4
  %v759 = vrot.slane %v757, 4
  %v760 = vsel %vm120, %v758, %v759
  %v761 = vsel %vm252, %v755, %v760
  %763 = vst [vmem:[#allocation3 + $0x70] sm:$0xff] %v761
  %v764 = vld [vmem:[#allocation2 + $0x4] sm:$0xff]
  %v765 = vld [vmem:[#allocation2 + $0xc] sm:$0xf]
  %v766 = vsel %vm262, 0, %v764
  %v767 = vsel %vm263, 0, %v765
  %770 = vrot.lane.b32.xlu0 %v766, 111
  %v771 = vpop.permute.xlu0 %770
  %772 = vrot.lane.b32.xlu0 %v767, 111
  %v773 = vpop.permute.xlu0 %772
  %v774 = vrot.slane %v771, 4
  %v775 = vrot.slane %v773, 4
  %v776 = vsel %vm120, %v774, %v775
  %v777 = vsel %vm106, %v771, %v776
  %779 = vst [vmem:[#allocation3 + $0x80] sm:$0xff] %v777
  %v780 = vld [vmem:[%s62] sm:$0xff]
  %v781 = vld [vmem:[%s62 + $0x8] sm:$0xf]
  %v782 = vsel %vm108, 0, %v780
  %v783 = vsel %vm109, 0, %v781
  %786 = vrot.lane.b32.xlu0 %v782, 17
  %v787 = vpop.permute.xlu0 %786
  %788 = vrot.lane.b32.xlu0 %v783, 17
  %v789 = vpop.permute.xlu0 %788
  %v790 = vrot.slane %v787, 4
  %v791 = vrot.slane %v789, 4
  %v792 = vsel %vm120, %v790, %v791
  %v793 = vsel %vm122, %v787, %v792
  %795 = vst [vmem:[#allocation3 + $0x8] sm:$0xff] %v793
  %v796 = vld [vmem:[%s62] sm:$0xff]
  %v797 = vld [vmem:[%s62 + $0x8] sm:$0xf]
  %800 = vrot.lane.b32.xlu0 %v796, 16
  %v801 = vpop.permute.xlu0 %800
  %802 = vrot.lane.b32.xlu0 %v797, 16
  %v803 = vpop.permute.xlu0 %802
  %v804 = vrot.slane %v801, 4
  %v805 = vrot.slane %v803, 4
  %v806 = vsel %vm120, %v804, %v805
  %v807 = vsel %vm137, %v801, %v806
  %809 = vst [vmem:[#allocation3 + $0x18] sm:$0xff] %v807
  %v810 = vld [vmem:[%s62] sm:$0xff]
  %v811 = vld [vmem:[%s62 + $0x8] sm:$0xf]
  %v812 = vsel %vm154, 0, %v810
  %v813 = vsel %vm155, 0, %v811
  %816 = vrot.lane.b32.xlu0 %v812, 15
  %v817 = vpop.permute.xlu0 %816
  %818 = vrot.lane.b32.xlu0 %v813, 15
  %v819 = vpop.permute.xlu0 %818
  %v820 = vrot.slane %v817, 4
  %v821 = vrot.slane %v819, 4
  %v822 = vsel %vm120, %v820, %v821
  %v823 = vsel %vm167, %v817, %v822
  %825 = vst [vmem:[#allocation3 + $0x28] sm:$0xff] %v823
  %v826 = vld [vmem:[%s62] sm:$0xff]
  %v827 = vld [vmem:[%s62 + $0x8] sm:$0xf]
  %v828 = vsel %vm178, 0, %v826
  %v829 = vsel %vm179, 0, %v827
  %832 = vrot.lane.b32.xlu0 %v828, 1
  %v833 = vpop.permute.xlu0 %832
  %834 = vrot.lane.b32.xlu0 %v829, 1
  %v835 = vpop.permute.xlu0 %834
  %v836 = vrot.slane %v833, 4
  %v837 = vrot.slane %v835, 4
  %v838 = vsel %vm120, %v836, %v837
  %v839 = vsel %vm191, %v833, %v838
  %841 = vst [vmem:[#allocation3 + $0x38] sm:$0xff] %v839
  %v842 = vld [vmem:[%s62 + $0x4] sm:$0xff]
  %843 = vst [vmem:[#allocation3 + $0x48] sm:$0xff] %v842
  %v844 = vld [vmem:[%s62 + $0x4] sm:$0xff]
  %v845 = vld [vmem:[%s62 + $0xc] sm:$0xf]
  %v846 = vsel %vm203, 0, %v844
  %v847 = vsel %vm204, 0, %v845
  %850 = vrot.lane.b32.xlu0 %v846, 127
  %v851 = vpop.permute.xlu0 %850
  %852 = vrot.lane.b32.xlu0 %v847, 127
  %v853 = vpop.permute.xlu0 %852
  %v854 = vrot.slane %v851, 4
  %v855 = vrot.slane %v853, 4
  %v856 = vsel %vm120, %v854, %v855
  %v857 = vsel %vm176, %v851, %v856
  %859 = vst [vmem:[#allocation3 + $0x58] sm:$0xff] %v857
  %v860 = vld [vmem:[%s62 + $0x4] sm:$0xff]
  %v861 = vld [vmem:[%s62 + $0xc] sm:$0xf]
  %v862 = vsel %vm225, 0, %v860
  %v863 = vsel %vm226, 0, %v861
  %866 = vrot.lane.b32.xlu0 %v862, 113
  %v867 = vpop.permute.xlu0 %866
  %868 = vrot.lane.b32.xlu0 %v863, 113
  %v869 = vpop.permute.xlu0 %868
  %v870 = vrot.slane %v867, 4
  %v871 = vrot.slane %v869, 4
  %v872 = vsel %vm120, %v870, %v871
  %v873 = vsel %vm152, %v867, %v872
  %875 = vst [vmem:[#allocation3 + $0x68] sm:$0xff] %v873
  %v876 = vld [vmem:[%s62 + $0x4] sm:$0xff]
  %v877 = vld [vmem:[%s62 + $0xc] sm:$0xf]
  %880 = vrot.lane.b32.xlu0 %v876, 112
  %v881 = vpop.permute.xlu0 %880
  %882 = vrot.lane.b32.xlu0 %v877, 112
  %v883 = vpop.permute.xlu0 %882
  %v884 = vrot.slane %v881, 4
  %v885 = vrot.slane %v883, 4
  %v886 = vsel %vm120, %v884, %v885
  %v887 = vsel %vm252, %v881, %v886
  %889 = vst [vmem:[#allocation3 + $0x78] sm:$0xff] %v887
  %v890 = vld [vmem:[%s62 + $0x4] sm:$0xff]
  %v891 = vld [vmem:[%s62 + $0xc] sm:$0xf]
  %v892 = vsel %vm262, 0, %v890
  %v893 = vsel %vm263, 0, %v891
  %896 = vrot.lane.b32.xlu0 %v892, 111
  %v897 = vpop.permute.xlu0 %896
  %898 = vrot.lane.b32.xlu0 %v893, 111
  %v899 = vpop.permute.xlu0 %898
  %v900 = vrot.slane %v897, 4
  %v901 = vrot.slane %v899, 4
  %v902 = vsel %vm120, %v900, %v901
  %v903 = vsel %vm106, %v897, %v902
  %905 = vst [vmem:[#allocation3 + $0x88] sm:$0xff] %v903
  %v906 = vld [vmem:[%s4] sm:$0xf]
  %v907 = vld [vmem:[#allocation3] sm:$0xff]
  %v908 = vld [vmem:[#allocation3 + $0x8] sm:$0xff]
  %v909 = vld [vmem:[#allocation3 + $0x10] sm:$0xff]
  %v910 = vld [vmem:[#allocation3 + $0x18] sm:$0xff]
  %v911 = vld [vmem:[#allocation3 + $0x20] sm:$0xff]
  %v912 = vld [vmem:[#allocation3 + $0x28] sm:$0xff]
  %v913 = vld [vmem:[#allocation3 + $0x30] sm:$0xff]
  %v914 = vld [vmem:[#allocation3 + $0x38] sm:$0xff]
  %v915 = vld [vmem:[#allocation3 + $0x40] sm:$0xff]
  %v916 = vld [vmem:[#allocation3 + $0x48] sm:$0xff]
  %v917 = vld [vmem:[#allocation3 + $0x50] sm:$0xff]
  %v918 = vld [vmem:[#allocation3 + $0x58] sm:$0xff]
  %v919 = vld [vmem:[#allocation3 + $0x60] sm:$0xff]
  %v920 = vld [vmem:[#allocation3 + $0x68] sm:$0xff]
  %v921 = vld [vmem:[#allocation3 + $0x70] sm:$0xff]
  %v922 = vld [vmem:[#allocation3 + $0x78] sm:$0xff]
  %v923 = vld [vmem:[#allocation3 + $0x80] sm:$0xff]
  %v924 = vld [vmem:[#allocation3 + $0x88] sm:$0xff]
  %v943 = vunpack.c.l.b16 %v907
  %v944 = vunpack.c.h.b16 %v907
  %v945 = vunpack.c.l.b16 %v908
  %v946 = vunpack.c.h.b16 %v908
  %v947 = vunpack.c.l.b16 %v909
  %v948 = vunpack.c.h.b16 %v909
  %v949 = vunpack.c.l.b16 %v910
  %v950 = vunpack.c.h.b16 %v910
  %v951 = vunpack.c.l.b16 %v911
  %v952 = vunpack.c.h.b16 %v911
  %v953 = vunpack.c.l.b16 %v912
  %v954 = vunpack.c.h.b16 %v912
  %v955 = vunpack.c.l.b16 %v913
  %v956 = vunpack.c.h.b16 %v913
  %v957 = vunpack.c.l.b16 %v914
  %v958 = vunpack.c.h.b16 %v914
  %v959 = vunpack.c.l.b16 %v915
  %v960 = vunpack.c.h.b16 %v915
  %v961 = vunpack.c.l.b16 %v916
  %v962 = vunpack.c.h.b16 %v916
  %v963 = vunpack.c.l.b16 %v917
  %v964 = vunpack.c.h.b16 %v917
  %v965 = vunpack.c.l.b16 %v918
  %v966 = vunpack.c.h.b16 %v918
  %v967 = vunpack.c.l.b16 %v919
  %v968 = vunpack.c.h.b16 %v919
  %v969 = vunpack.c.l.b16 %v920
  %v970 = vunpack.c.h.b16 %v920
  %v971 = vunpack.c.l.b16 %v921
  %v972 = vunpack.c.h.b16 %v921
  %v973 = vunpack.c.l.b16 %v922
  %v974 = vunpack.c.h.b16 %v922
  %v975 = vunpack.c.l.b16 %v923
  %v976 = vunpack.c.h.b16 %v923
  %v977 = vunpack.c.l.b16 %v924
  %v978 = vunpack.c.h.b16 %v924
  %v979 = vpack.c.b16 %v947, %v943
  %v980 = vpack.c.b16 %v948, %v944
  %v981 = vpack.c.b16 %v949, %v945
  %v982 = vpack.c.b16 %v950, %v946
  %v983 = vpack.c.b16 %v955, %v951
  %v984 = vpack.c.b16 %v956, %v952
  %v985 = vpack.c.b16 %v957, %v953
  %v986 = vpack.c.b16 %v958, %v954
  %v987 = vpack.c.b16 %v963, %v959
  %v988 = vpack.c.b16 %v964, %v960
  %v989 = vpack.c.b16 %v965, %v961
  %v990 = vpack.c.b16 %v966, %v962
  %v991 = vpack.c.b16 %v971, %v967
  %v992 = vpack.c.b16 %v972, %v968
  %v993 = vpack.c.b16 %v973, %v969
  %v994 = vpack.c.b16 %v974, %v970
  %v995 = vpack.c.b16 %v975, %v975
  %v996 = vpack.c.b16 %v976, %v976
  %v997 = vpack.c.b16 %v977, %v977
  %v998 = vpack.c.b16 %v978, %v978
  %v1016 = vsel %vm513, %v906, 0
  %v1019 = vsel %vm517, %v995, 0
  %v1022 = vsel %vm517, %v996, 0
  %v1025 = vsel %vm517, %v997, 0
  %v1028 = vsel %vm517, %v998, 0
  %1030 = vmatprep.subr.bf16.mxu0 0
  %1031 = vmatpush1.bf16.msra.mxu0 0
  %1032 = vmatprep.subr.bf16.mxu0 0
  %1033 = vmatpush1.bf16.msra.mxu0 0
  %1034 = vmatprep.subr.bf16.mxu0 0
  %1035 = vmatpush1.bf16.msra.mxu0 0
  %1036 = vmatprep.subr.bf16.mxu0 %v1022
  %1037 = vmatpush1.bf16.msra.mxu0 %v1019
  %1038 = vmatprep.subr.bf16.mxu0 %v992
  %1039 = vmatpush1.bf16.msra.mxu0 %v991
  %1040 = vmatprep.subr.bf16.mxu0 %v988
  %1041 = vmatpush1.bf16.msra.mxu0 %v987
  %1042 = vmatprep.subr.bf16.mxu0 %v984
  %1043 = vmatpush1.bf16.msra.mxu0 %v983
  %1044 = vmatprep.subr.bf16.mxu0 %v980
  %1045 = vmatpush1.bf16.msra.mxu0 %v979
  %1046 = vmatprep.subr.bf16.mxu0 0
  %1047 = vmatpush2.bf16.msra.mxu0 0
  %1048 = vmatprep.subr.bf16.mxu0 0
  %1049 = vmatpush2.bf16.msra.mxu0 0
  %1050 = vmatprep.subr.bf16.mxu0 0
  %1051 = vmatpush2.bf16.msra.mxu0 0
  %1052 = vmatprep.subr.bf16.mxu0 0
  %1053 = vmatpush2.bf16.msra.mxu0 0
  %1054 = vmatprep.subr.bf16.mxu0 0
  %1055 = vmatpush2.bf16.msra.mxu0 0
  %1056 = vmatprep.subr.bf16.mxu0 0
  %1057 = vmatpush2.bf16.msra.mxu0 0
  %1058 = vmatprep.subr.bf16.mxu0 0
  %1059 = vmatpush2.bf16.msra.mxu0 0
  %1060 = vmatprep.subr.bf16.mxu0 0
  %1061 = vmatpush2.bf16.msra.mxu0 0
  %1062 = vmatprep.mubr.bf16.mxu0 0
  %1063 = vmatmul.mubr.bf16.gmra.mxu0 %v1016
  %v1064 = vpop.f32.mrf.mxu0
  %v1065 = vadd.f32 0.0, %v1064
  %v1066 = vpop.f32.mrf.mxu0
  %v1067 = vadd.f32 0.0, %v1066
  %v1068 = vpop.f32.mrf.mxu0
  %v1069 = vpop.f32.mrf.mxu0
  %1070 = vdwg.mxu0
  %1071 = vmatprep.subr.bf16.mxu0 0
  %1072 = vmatpush1.bf16.msra.mxu0 0
  %1073 = vmatprep.subr.bf16.mxu0 0
  %1074 = vmatpush1.bf16.msra.mxu0 0
  %1075 = vmatprep.subr.bf16.mxu0 0
  %1076 = vmatpush1.bf16.msra.mxu0 0
  %1077 = vmatprep.subr.bf16.mxu0 %v1028
  %1078 = vmatpush1.bf16.msra.mxu0 %v1025
  %1079 = vmatprep.subr.bf16.mxu0 %v994
  %1080 = vmatpush1.bf16.msra.mxu0 %v993
  %1081 = vmatprep.subr.bf16.mxu0 %v990
  %1082 = vmatpush1.bf16.msra.mxu0 %v989
  %1083 = vmatprep.subr.bf16.mxu0 %v986
  %1084 = vmatpush1.bf16.msra.mxu0 %v985
  %1085 = vmatprep.subr.bf16.mxu0 %v982
  %1086 = vmatpush1.bf16.msra.mxu0 %v981
  %1087 = vmatprep.subr.bf16.mxu0 0
  %1088 = vmatpush2.bf16.msra.mxu0 0
  %1089 = vmatprep.subr.bf16.mxu0 0
  %1090 = vmatpush2.bf16.msra.mxu0 0
  %1091 = vmatprep.subr.bf16.mxu0 0
  %1092 = vmatpush2.bf16.msra.mxu0 0
  %1093 = vmatprep.subr.bf16.mxu0 0
  %1094 = vmatpush2.bf16.msra.mxu0 0
  %1095 = vmatprep.subr.bf16.mxu0 0
  %1096 = vmatpush2.bf16.msra.mxu0 0
  %1097 = vmatprep.subr.bf16.mxu0 0
  %1098 = vmatpush2.bf16.msra.mxu0 0
  %1099 = vmatprep.subr.bf16.mxu0 0
  %1100 = vmatpush2.bf16.msra.mxu0 0
  %1101 = vmatprep.subr.bf16.mxu0 0
  %1102 = vmatpush2.bf16.msra.mxu0 0
  %1103 = vmatprep.mubr.bf16.mxu0 0
  %1104 = vmatmul.mubr.bf16.gmra.mxu0 %v1016
  %v1105 = vpop.f32.mrf.mxu0
  %v1106 = vadd.f32 0.0, %v1105
  %v1107 = vpop.f32.mrf.mxu0
  %v1108 = vadd.f32 0.0, %v1107
  %v1109 = vpop.f32.mrf.mxu0
  %v1110 = vpop.f32.mrf.mxu0
  %1111 = vdwg.mxu0
  %v1112 = vpack.c.bf16 %v1065, %v1065
  %v1113 = vpack.c.bf16 %v1067, %v1067
  %v1116 = vcombine.low %v1112, %v1113
  %v1118 = vunpack.c.l.s4 1983009808
  %v1119 = vunpack.c.0.s8 %v1118
  %v1120 = vlaneseq
  %v1121 = vshrl.u32 %v1120, 7
  %v1122 = vsub.s32 %v1119, %v1121
  %v1123 = vrot.slane %v1116, %v1122
  %1125 = vst [vmem:[%s5] sm:$0xf] %v1123
  %v1126 = vpack.c.bf16 %v1106, %v1106
  %v1127 = vpack.c.bf16 %v1108, %v1108
  %v1130 = vcombine.low %v1126, %v1127
  %v1132 = vunpack.c.l.s4 1983009808
  %v1133 = vunpack.c.0.s8 %v1132
  %v1134 = vlaneseq
  %v1135 = vshrl.u32 %v1134, 7
  %v1136 = vsub.s32 %v1133, %v1135
  %v1137 = vrot.slane %v1130, %v1136
  %s1139 = scalar_lea.vmem %s5, 4
  %1140 = vst [vmem:[%s1139] sm:$0xf] %v1137
  %v1141 = vmul.f32 %v1065, %v1065
  %v1142 = vmul.f32 %v1067, %v1067
  %v1143 = vmul.f32 %v1106, %v1106
  %v1144 = vmul.f32 %v1108, %v1108
  %v1145 = vld [vmem:[%s6] sm:$0xff]
  %v1146 = vld [vmem:[%s6 + $0x8] sm:$0xff]
  %1147 = vmatprep.subr.mxu0 0.0
  %1148 = vmatpush1.msra.mxu0 1.0
  %1149 = vmatprep.subr.mxu0 0.0
  %1150 = vmatpush1.msra.mxu0 1.0
  %1151 = vmatprep.subr.mxu0 0.0
  %1152 = vmatpush1.msra.mxu0 1.0
  %1153 = vmatprep.subr.mxu0 0.0
  %1154 = vmatpush1.msra.mxu0 1.0
  %1155 = vmatprep.subr.mxu0 0.0
  %1156 = vmatpush1.msra.mxu0 1.0
  %1157 = vmatprep.subr.mxu0 0.0
  %1158 = vmatpush1.msra.mxu0 1.0
  %1159 = vmatprep.subr.mxu0 0.0
  %1160 = vmatpush1.msra.mxu0 1.0
  %1161 = vmatprep.subr.mxu0 0.0
  %1162 = vmatpush1.msra.mxu0 1.0
  %1163 = vmatprep.subr.mxu0 0.0
  %1164 = vmatpush1.msra.mxu0 1.0
  %1165 = vmatprep.subr.mxu0 0.0
  %1166 = vmatpush1.msra.mxu0 1.0
  %1167 = vmatprep.subr.mxu0 0.0
  %1168 = vmatpush1.msra.mxu0 1.0
  %1169 = vmatprep.subr.mxu0 0.0
  %1170 = vmatpush1.msra.mxu0 1.0
  %1171 = vmatprep.subr.mxu0 0.0
  %1172 = vmatpush1.msra.mxu0 1.0
  %1173 = vmatprep.subr.mxu0 0.0
  %1174 = vmatpush1.msra.mxu0 1.0
  %1175 = vmatprep.subr.mxu0 0.0
  %1176 = vmatpush1.msra.mxu0 1.0
  %1177 = vmatprep.subr.mxu0 0.0
  %1178 = vmatpush1.msra.mxu0 1.0
  %1179 = vmatprep.subr.mxu0 0.0
  %1180 = vmatpush2.msra.mxu0 1.0
  %1181 = vmatprep.subr.mxu0 0.0
  %1182 = vmatpush2.msra.mxu0 1.0
  %1183 = vmatprep.subr.mxu0 0.0
  %1184 = vmatpush2.msra.mxu0 1.0
  %1185 = vmatprep.subr.mxu0 0.0
  %1186 = vmatpush2.msra.mxu0 1.0
  %1187 = vmatprep.subr.mxu0 0.0
  %1188 = vmatpush2.msra.mxu0 1.0
  %1189 = vmatprep.subr.mxu0 0.0
  %1190 = vmatpush2.msra.mxu0 1.0
  %1191 = vmatprep.subr.mxu0 0.0
  %1192 = vmatpush2.msra.mxu0 1.0
  %1193 = vmatprep.subr.mxu0 0.0
  %1194 = vmatpush2.msra.mxu0 1.0
  %1195 = vmatprep.subr.mxu0 0.0
  %1196 = vmatpush2.msra.mxu0 1.0
  %1197 = vmatprep.subr.mxu0 0.0
  %1198 = vmatpush2.msra.mxu0 1.0
  %1199 = vmatprep.subr.mxu0 0.0
  %1200 = vmatpush2.msra.mxu0 1.0
  %1201 = vmatprep.subr.mxu0 0.0
  %1202 = vmatpush2.msra.mxu0 1.0
  %1203 = vmatprep.subr.mxu0 0.0
  %1204 = vmatpush2.msra.mxu0 1.0
  %1205 = vmatprep.subr.mxu0 0.0
  %1206 = vmatpush2.msra.mxu0 1.0
  %1207 = vmatprep.subr.mxu0 0.0
  %1208 = vmatpush2.msra.mxu0 1.0
  %1209 = vmatprep.subr.mxu0 0.0
  %1210 = vmatpush2.msra.mxu0 1.0
  %1211 = vmatprep.mubr.f32.mxu0 %v1067
  %1212 = vmatmul.mubr.f32.gmra.mxu0 %v1065
  %v1213 = vpop.f32.mrf.mxu0
  %v1214 = vadd.f32 0.0, %v1213
  %v1215 = vpop.f32.mrf.mxu0
  %1216 = vmatprep.mubr.f32.mxu0 %v1142
  %1217 = vmatmul.mubr.f32.gmra.mxu0 %v1141
  %v1218 = vpop.f32.mrf.mxu0
  %v1219 = vadd.f32 0.0, %v1218
  %v1220 = vpop.f32.mrf.mxu0
  %1221 = vdwg.mxu0
  %1222 = vmatprep.subr.mxu0 0.0
  %1223 = vmatpush1.msra.mxu0 1.0
  %1224 = vmatprep.subr.mxu0 0.0
  %1225 = vmatpush1.msra.mxu0 1.0
  %1226 = vmatprep.subr.mxu0 0.0
  %1227 = vmatpush1.msra.mxu0 1.0
  %1228 = vmatprep.subr.mxu0 0.0
  %1229 = vmatpush1.msra.mxu0 1.0
  %1230 = vmatprep.subr.mxu0 0.0
  %1231 = vmatpush1.msra.mxu0 1.0
  %1232 = vmatprep.subr.mxu0 0.0
  %1233 = vmatpush1.msra.mxu0 1.0
  %1234 = vmatprep.subr.mxu0 0.0
  %1235 = vmatpush1.msra.mxu0 1.0
  %1236 = vmatprep.subr.mxu0 0.0
  %1237 = vmatpush1.msra.mxu0 1.0
  %1238 = vmatprep.subr.mxu0 0.0
  %1239 = vmatpush1.msra.mxu0 1.0
  %1240 = vmatprep.subr.mxu0 0.0
  %1241 = vmatpush1.msra.mxu0 1.0
  %1242 = vmatprep.subr.mxu0 0.0
  %1243 = vmatpush1.msra.mxu0 1.0
  %1244 = vmatprep.subr.mxu0 0.0
  %1245 = vmatpush1.msra.mxu0 1.0
  %1246 = vmatprep.subr.mxu0 0.0
  %1247 = vmatpush1.msra.mxu0 1.0
  %1248 = vmatprep.subr.mxu0 0.0
  %1249 = vmatpush1.msra.mxu0 1.0
  %1250 = vmatprep.subr.mxu0 0.0
  %1251 = vmatpush1.msra.mxu0 1.0
  %1252 = vmatprep.subr.mxu0 0.0
  %1253 = vmatpush1.msra.mxu0 1.0
  %1254 = vmatprep.subr.mxu0 0.0
  %1255 = vmatpush2.msra.mxu0 1.0
  %1256 = vmatprep.subr.mxu0 0.0
  %1257 = vmatpush2.msra.mxu0 1.0
  %1258 = vmatprep.subr.mxu0 0.0
  %1259 = vmatpush2.msra.mxu0 1.0
  %1260 = vmatprep.subr.mxu0 0.0
  %1261 = vmatpush2.msra.mxu0 1.0
  %1262 = vmatprep.subr.mxu0 0.0
  %1263 = vmatpush2.msra.mxu0 1.0
  %1264 = vmatprep.subr.mxu0 0.0
  %1265 = vmatpush2.msra.mxu0 1.0
  %1266 = vmatprep.subr.mxu0 0.0
  %1267 = vmatpush2.msra.mxu0 1.0
  %1268 = vmatprep.subr.mxu0 0.0
  %1269 = vmatpush2.msra.mxu0 1.0
  %1270 = vmatprep.subr.mxu0 0.0
  %1271 = vmatpush2.msra.mxu0 1.0
  %1272 = vmatprep.subr.mxu0 0.0
  %1273 = vmatpush2.msra.mxu0 1.0
  %1274 = vmatprep.subr.mxu0 0.0
  %1275 = vmatpush2.msra.mxu0 1.0
  %1276 = vmatprep.subr.mxu0 0.0
  %1277 = vmatpush2.msra.mxu0 1.0
  %1278 = vmatprep.subr.mxu0 0.0
  %1279 = vmatpush2.msra.mxu0 1.0
  %1280 = vmatprep.subr.mxu0 0.0
  %1281 = vmatpush2.msra.mxu0 1.0
  %1282 = vmatprep.subr.mxu0 0.0
  %1283 = vmatpush2.msra.mxu0 1.0
  %1284 = vmatprep.subr.mxu0 0.0
  %1285 = vmatpush2.msra.mxu0 1.0
  %1286 = vmatprep.mubr.f32.mxu0 %v1108
  %1287 = vmatmul.mubr.f32.gmra.mxu0 %v1106
  %v1288 = vpop.f32.mrf.mxu0
  %v1289 = vadd.f32 %v1214, %v1288
  %v1290 = vpop.f32.mrf.mxu0
  %1291 = vmatprep.mubr.f32.mxu0 %v1144
  %1292 = vmatmul.mubr.f32.gmra.mxu0 %v1143
  %v1293 = vpop.f32.mrf.mxu0
  %v1294 = vadd.f32 %v1219, %v1293
  %v1295 = vpop.f32.mrf.mxu0
  %1296 = vdwg.mxu0
  %v1297 = vadd.f32 %v1145, %v1289
  %v1298 = vadd.f32 %v1146, %v1294
  %vm1299 = vcmask 7168
  %1300 = vst.msk [vmem:[%s6] sm:$0xff] %vm1299, %v1297
  %1301 = vst.msk [vmem:[%s6 + $0x8] sm:$0xff] %vm1299, %v1298
  // Predicated region
  $region26: #{residual_block_forward.4} parent=0 // pred_check
    _
  $region27: #{residual_block_forward.4} parent=0 // pred_check_branch
    %1303 = sbr.rel (0) target = $region29
  $region28: #{residual_block_forward.4} parent=0 // pred_region
    _
  $region29: #{residual_block_forward.4} parent=0 // pred_fallthru
    _
  // Predicated region
  $region30: #{residual_block_forward.4} parent=0 // pred_check
    _
  $region31: #{residual_block_forward.4} parent=0 // pred_check_branch
    %1305 = sbr.rel (0) target = $region33
  $region32: #{residual_block_forward.4} parent=0 // pred_region
    _
  $region33: #{residual_block_forward.4} parent=0 // pred_fallthru
    _
  // Predicated region
  $region34: #{residual_block_forward.4} parent=0 // pred_check
    _
  $region35: #{residual_block_forward.4} parent=0 // pred_check_branch
    %1307 = sbr.rel (0) target = $region37
  $region36: #{residual_block_forward.4} parent=0 // pred_region
    _
  $region37: #{residual_block_forward.4} parent=0 // pred_fallthru
    _
  // Predicated region
  $region38: #{residual_block_forward.4} parent=0 // pred_check
    _
  $region39: #{residual_block_forward.4} parent=0 // pred_check_branch
    %1309 = sbr.rel (0) target = $region41
  $region40: #{residual_block_forward.4} parent=0 // pred_region
    _
  $region41: #{residual_block_forward.4} parent=0 // pred_fallthru
    _

</llo_original>
